<compile_context>
chip_gen: v7x
topology: tpu7x:2x2x1
jax: 0.10.0
libtpu: 0.0.40
codegen_flags: <defaults>
</compile_context>

<pallas_src>
import math

import jax
import jax.numpy as jnp
from jax import lax
from jax.experimental import pallas as pl
from jax.experimental.pallas import tpu as pltpu


def _sigmoid(x):
    # exactly 0.5*(1+tanh(x/2)): one tanh EUP push per sigmoid slab.
    return 0.5 * jnp.tanh(0.5 * x) + 0.5


def _pblstm_kernel(xf_ref, xr_ref,
                   wih_f_ref, wih_r_ref, whh_cat_ref, b_f_ref, b_r_ref,
                   yf_ref, yr_ref, hn_ref, cn_ref,
                   gxf_s, gxr_s, ysf_s, ysr_s, h_s, c_s):
    """One time-chunk of the fused bidirectional LSTM recurrence.

    xf_ref : (B, C, 2F)  forward-ordered chunk   (time block i)
    xr_ref : (B, C, 2F)  reverse-side chunk      (time block nc-1-i)
    wih_*  : (2F, 4H)    pre-transposed, gate-permuted input weights (bf16/f32)
    whh_cat: (H, 8H)     [whh_f | whh_r] pre-transposed recurrent weights
    b_*    : (1, 4H)     bias_ih + bias_hh (f32), gate-permuted
    yf_ref : (B, C, H)   forward outputs for time block i
    yr_ref : (B, C, H)   reverse outputs for time block nc-1-i
    hn_ref, cn_ref: (2, B, H) final states.  NOTE: these are resident blocks
        (constant index map) written ONLY under pl.when(last grid step); do
        not change the out_specs / write placement without revisiting this.
    gx*_s  : (C, B, 4H)  time-major hoisted input projections (VMEM scratch)
    ys*_s  : (C, B, H)   time-major per-step outputs (VMEM scratch)
    h_s,c_s: (2B, H)     state carried across chunks (rows [:B]=fwd, [B:]=rev)
    """
    B, C, in_f = xf_ref.shape
    H = h_s.shape[1]
    G = 4 * H
    mm_dtype = whh_cat_ref.dtype          # bf16 on the fast path, else f32

    # ---- init carried state on the first chunk ----
    @pl.when(pl.program_id(0) == 0)
    def _():
        h_s[...] = jnp.zeros_like(h_s)
        c_s[...] = jnp.zeros_like(c_s)

    # ---- hoisted input projection: one MXU matmul per direction per chunk
    #      (bf16 operands, f32 accumulation), bias folded in once; then laid
    #      out time-major so the recurrence uses leading-axis loads only. ----
    xf = xf_ref[...].astype(mm_dtype).reshape(B * C, in_f)
    xr = xr_ref[...].astype(mm_dtype).reshape(B * C, in_f)
    gxf = (jnp.dot(xf, wih_f_ref[...], preferred_element_type=jnp.float32)
           + b_f_ref[...]).reshape(B, C, G)
    gxr = (jnp.dot(xr, wih_r_ref[...], preferred_element_type=jnp.float32)
           + b_r_ref[...]).reshape(B, C, G)
    for b in range(B):                    # static, small: strided VMEM stores
        gxf_s[:, b, :] = gxf[b]
        gxr_s[:, b, :] = gxr[b]

    whh_cat = whh_cat_ref[...]            # (H, 8H)

    h0 = h_s[...]                         # (2B, H) f32
    c0 = c_s[...]

    def step(t, carry):
        h2, cf, cr = carry
        tr = C - 1 - t                    # reverse-direction local time
        # ONE fused recurrent MXU push for both directions (2x redundant
        # FLOPs are free; the step is latency-bound, not FLOP-bound).
        r = jnp.dot(h2.astype(mm_dtype), whh_cat,
                    preferred_element_type=jnp.float32)        # (2B, 8H)
        gf = gxf_s[t] + r[:B, :G]                               # (B, 4H)
        gr = gxr_s[tr] + r[B:, G:]                               # (B, 4H)
        # gate order [i, f, o, g]: one sigmoid slab + one tanh per direction
        sf = _sigmoid(gf[:, :3 * H])
        sr = _sigmoid(gr[:, :3 * H])
        cf = sf[:, H:2 * H] * cf + sf[:, :H] * jnp.tanh(gf[:, 3 * H:])
        cr = sr[:, H:2 * H] * cr + sr[:, :H] * jnp.tanh(gr[:, 3 * H:])
        hf = sf[:, 2 * H:] * jnp.tanh(cf)
        hr = sr[:, 2 * H:] * jnp.tanh(cr)
        ysf_s[t] = hf                     # leading-axis dynamic stores (cheap)
        ysr_s[tr] = hr
        # tiny (2B, H) re-stack: presents the fused MXU operand next step.
        return jnp.concatenate([hf, hr], axis=0), cf, cr

    unroll = 8 if C % 8 == 0 else 1
    h2, cf, cr = lax.fori_loop(0, C, step, (h0, c0[:B], c0[B:]), unroll=unroll)

    h_s[...] = h2
    c_s[:B] = cf
    c_s[B:] = cr

    # ---- convert time-major scratch to batch-first output blocks
    #      (static strided reads; no transposes, stays in VMEM) ----
    for b in range(B):
        yf_ref[b] = ysf_s[:, b, :]
        yr_ref[b] = ysr_s[:, b, :]

    # ---- finalize h_n / c_n on the last chunk only (resident blocks) ----
    @pl.when(pl.program_id(0) == pl.num_programs(0) - 1)
    def _():
        hn_ref[0] = h2[:B]
        hn_ref[1] = h2[B:]
        cn_ref[0] = cf
        cn_ref[1] = cr


# ----------------------------------------------------------------------------
# Parameters
# ----------------------------------------------------------------------------
def init_pblstm_raw_params(key, input_feature_size, hidden_size):
    """PyTorch nn.LSTM(bidirectional=True)-shaped raw parameters."""
    in_size = 2 * input_feature_size
    H = hidden_size
    bound = 1.0 / math.sqrt(H)
    ks = jax.random.split(key, 8)

    def u(k, shape):
        return jax.random.uniform(k, shape, jnp.float32, -bound, bound)

    return {
        "w_ih_f": u(ks[0], (4 * H, in_size)), "w_hh_f": u(ks[1], (4 * H, H)),
        "b_ih_f": u(ks[2], (4 * H,)),         "b_hh_f": u(ks[3], (4 * H,)),
        "w_ih_r": u(ks[4], (4 * H, in_size)), "w_hh_r": u(ks[5], (4 * H, H)),
        "b_ih_r": u(ks[6], (4 * H,)),         "b_hh_r": u(ks[7], (4 * H,)),
    }


def _permute_gates(w):
    """Reorder PyTorch gate blocks [i, f, g, o] -> [i, f, o, g] along axis 0."""
    H = w.shape[0] // 4
    return jnp.concatenate([w[:2 * H], w[3 * H:], w[2 * H:3 * H]], axis=0)


def prepare_kernel_params(raw, matmul_dtype=jnp.bfloat16):
    """Kernel-ready params: transposed, gate-permuted [i,f,o,g], bias-summed,
    MXU operands cast to `matmul_dtype` (biases / accumulation stay f32)."""
    wih_f = _permute_gates(raw["w_ih_f"]).T.astype(matmul_dtype)     # (2F, 4H)
    wih_r = _permute_gates(raw["w_ih_r"]).T.astype(matmul_dtype)
    whh_cat = jnp.concatenate(
        [_permute_gates(raw["w_hh_f"]).T, _permute_gates(raw["w_hh_r"]).T],
        axis=1).astype(matmul_dtype)                                  # (H, 8H)
    b_f = _permute_gates(raw["b_ih_f"] + raw["b_hh_f"])[None, :].astype(jnp.float32)
    b_r = _permute_gates(raw["b_ih_r"] + raw["b_hh_r"])[None, :].astype(jnp.float32)
    return {"wih_f": wih_f, "wih_r": wih_r, "whh_cat": whh_cat,
            "b_f": b_f, "b_r": b_r}


# ----------------------------------------------------------------------------
# VMEM-budget-aware chunking (generation-aware: v5e/v6e 128 MiB, v7x 64 MiB)
# ----------------------------------------------------------------------------
def _vmem_capacity_bytes():
    try:
        cap = getattr(pltpu.get_tpu_info(), "vmem_capacity_bytes", None)
        if cap:
            return int(cap)
    except Exception:
        pass
    return 64 * 1024 * 1024               # conservative default (v7x per-TC)


def _kernel_vmem_bytes(B, C, in_f, H, x_itemsize, w_itemsize):
    """Rough per-chunk VMEM footprint (double-buffered BlockSpecs + scratch)."""
    G, f32 = 4 * H, 4
    n = 0
    n += 2 * 2 * B * C * in_f * x_itemsize            # xf / xr blocks
    n += 2 * 2 * B * C * H * f32                      # yf / yr blocks
    n += 2 * ((2 * in_f * G + H * 2 * G) * w_itemsize + 2 * G * f32)  # weights+bias
    n += 2 * 2 * 2 * B * H * f32                      # hn / cn blocks
    n += 2 * C * B * G * f32 + 2 * C * B * H * f32    # gx / y scratch
    n += 2 * 2 * B * H * f32                          # h / c carry scratch
    n += 2 * B * C * G * f32                          # projection temporaries
    return n


def _pick_time_chunk(T2, B, in_f, H, x_itemsize, w_itemsize, vmem_budget,
                     target_rows=512):
    """Largest multiple-of-8 chunk dividing T2 that (a) keeps B*C near the MXU
    fill target and (b) fits the per-generation VMEM budget."""
    if T2 % 8 != 0:
        return T2                         # whole sequence as one full-dim block
    max_c = min(T2, max(8, ((target_rows + B - 1) // B + 7) // 8 * 8))
    best, c = 8, 8
    while c <= max_c:
        if (T2 % c == 0 and
                _kernel_vmem_bytes(B, c, in_f, H, x_itemsize, w_itemsize)
                <= vmem_budget):
            best = c
        c += 8
    return best


# ----------------------------------------------------------------------------
# Wrapper
# ----------------------------------------------------------------------------
def pblstm_forward(x, kparams, time_chunk=None):
    """x: (B, T, F). Returns (output (B, T/2, 2H), (h_n, c_n) each (2, B, H)).

    Pass x already in bfloat16 (e.g. produced by an upstream bf16 layer) to
    halve the x DMA bytes; the kernel casts blocks to the matmul dtype either
    way and keeps all state / gate math in f32.
    """
    B, T, F = x.shape
    assert T % 2 == 0
    T2 = T // 2
    in_f = 2 * F
    H = kparams["whh_cat"].shape[0]
    mm_dtype = kparams["whh_cat"].dtype

    # pyramid reshape (row-major view, identical to torch .view); no transpose.
    x2 = x.reshape(B, T2, in_f)

    cap = _vmem_capacity_bytes()
    budget = int(cap * 0.7)               # headroom for Mosaic-internal scratch
    x_isz = x2.dtype.itemsize
    w_isz = jnp.dtype(mm_dtype).itemsize
    C = (_pick_time_chunk(T2, B, in_f, H, x_isz, w_isz, budget)
         if time_chunk is None else time_chunk)
    assert T2 % C == 0 and (C % 8 == 0 or C == T2), (T2, C)
    nc = T2 // C
    vmem_limit = int(min(cap, max(2 * _kernel_vmem_bytes(B, C, in_f, H,
                                                         x_isz, w_isz),
                                  32 * 1024 * 1024)))

    def full_spec(shape):
        return pl.BlockSpec(shape, lambda i: (0,) * len(shape))

    # NOTE: x is deliberately read twice (forward-ordered chunk i and
    # reverse-side chunk nc-1-i) -- cheaper than a 4H-wide precomputed-gx
    # round trip whenever 4H > 2F.  Revisit only if profiling shows the
    # kernel HBM-bound with large 2F and small H.
    in_specs = [
        pl.BlockSpec((B, C, in_f), lambda i: (0, i, 0)),
        pl.BlockSpec((B, C, in_f), lambda i: (0, nc - 1 - i, 0)),
        # TODO(synk): single-buffer these constant-index weight blocks
        # (pipeline_mode=pl.Buffered(1)) to halve resident weight VMEM at
        # production 2F/4H on v7x.
        full_spec((in_f, 4 * H)), full_spec((in_f, 4 * H)),
        full_spec((H, 8 * H)),
        full_spec((1, 4 * H)), full_spec((1, 4 * H)),
    ]
    out_specs = (
        pl.BlockSpec((B, C, H), lambda i: (0, i, 0)),              # y_fwd
        pl.BlockSpec((B, C, H), lambda i: (0, nc - 1 - i, 0)),     # y_rev
        pl.BlockSpec((2, B, H), lambda i: (0, 0, 0)),              # h_n (resident)
        pl.BlockSpec((2, B, H), lambda i: (0, 0, 0)),              # c_n (resident)
    )
    out_shape = (
        jax.ShapeDtypeStruct((B, T2, H), jnp.float32),
        jax.ShapeDtypeStruct((B, T2, H), jnp.float32),
        jax.ShapeDtypeStruct((2, B, H), jnp.float32),
        jax.ShapeDtypeStruct((2, B, H), jnp.float32),
    )
    scratch_shapes = [
        pltpu.VMEM((C, B, 4 * H), jnp.float32),    # gx fwd (time-major)
        pltpu.VMEM((C, B, 4 * H), jnp.float32),    # gx rev (time-major)
        pltpu.VMEM((C, B, H), jnp.float32),        # y fwd (time-major)
        pltpu.VMEM((C, B, H), jnp.float32),        # y rev (time-major)
        pltpu.VMEM((2 * B, H), jnp.float32),       # h carry
        pltpu.VMEM((2 * B, H), jnp.float32),       # c carry
    ]

    # TODO(synk): on v7x, add a leading "parallel" batch-shard grid axis
    # (grid=(2, nc), dimension_semantics=("parallel", "arbitrary")) to use
    # both TensorCores once per-step work is confirmed slot-bound rather than
    # dependency-latency-bound.
    # TODO(synk): on v5e, hold whh_cat in the MXU across the chunk with
    # explicit pltpu.matmul_push_rhs / matmul_acc_lhs / matmul_pop driving.
    yf, yr, h_n, c_n = pl.pallas_call(
        _pblstm_kernel,
        out_shape=out_shape,
        grid_spec=pltpu.PrefetchScalarGridSpec(
            num_scalar_prefetch=0,
            grid=(nc,),
            in_specs=in_specs,
            out_specs=out_specs,
            scratch_shapes=scratch_shapes),
        compiler_params=pltpu.CompilerParams(
            dimension_semantics=("arbitrary",),    # state carried across chunks
            vmem_limit_bytes=vmem_limit),
    )(x2, x2,
      kparams["wih_f"], kparams["wih_r"], kparams["whh_cat"],
      kparams["b_f"], kparams["b_r"])

    # fwd|rev hidden concat; batch_first already, no transposes needed.
    # TODO(synk): fold this concat into the downstream consumer (the next
    # pBLSTM layer) to save one extra HBM round trip of the output.
    output = jnp.concatenate([yf, yr], axis=-1)
    return output, (h_n, c_n)


# ----------------------------------------------------------------------------
# Pure-JAX reference (PyTorch gate order, f32 everywhere)
# ----------------------------------------------------------------------------
def _reference_forward(x, raw):
    B, T, F = x.shape
    T2 = T // 2
    H = raw["w_hh_f"].shape[1]
    xt = jnp.transpose(x.reshape(B, T2, 2 * F).astype(jnp.float32), (1, 0, 2))

    def run_dir(seq, w_ih, w_hh, b_ih, b_hh):
        def step(carry, x_t):
            h, c = carry
            g = x_t @ w_ih.T + h @ w_hh.T + b_ih + b_hh
            i_g = jax.nn.sigmoid(g[:, 0 * H:1 * H])
            f_g = jax.nn.sigmoid(g[:, 1 * H:2 * H])
            g_g = jnp.tanh(g[:, 2 * H:3 * H])
            o_g = jax.nn.sigmoid(g[:, 3 * H:4 * H])
            c = f_g * c + i_g * g_g
            h = o_g * jnp.tanh(c)
            return (h, c), h
        init = (jnp.zeros((B, H), jnp.float32), jnp.zeros((B, H), jnp.float32))
        (h_f, c_f), ys = lax.scan(step, init, seq)
        return ys, h_f, c_f

    yf, hf, cf = run_dir(xt, raw["w_ih_f"], raw["w_hh_f"],
                         raw["b_ih_f"], raw["b_hh_f"])
    yr_rev, hr, cr = run_dir(xt[::-1], raw["w_ih_r"], raw["w_hh_r"],
                             raw["b_ih_r"], raw["b_hh_r"])
    yr = yr_rev[::-1]
    out = jnp.transpose(jnp.concatenate([yf, yr], axis=-1), (1, 0, 2))
    return out, (jnp.stack([hf, hr], 0), jnp.stack([cf, cr], 0))


if __name__ == "__main__":
    key = jax.random.PRNGKey(0)
    k_x, k_p = jax.random.split(key)

    # Small shapes consistent with the module: B=2, F=16, H=32.
    B, F, H = 2, 16, 32
    raw = init_pblstm_raw_params(k_p, input_feature_size=F, hidden_size=H)
    kparams_f32 = prepare_kernel_params(raw, matmul_dtype=jnp.float32)
    kparams_bf16 = prepare_kernel_params(raw, matmul_dtype=jnp.bfloat16)

    # single-chunk path (T2=8) and 2-chunk pipelined path (T2=16, C=8).
    for T, chunk in ((16, None), (32, 8)):
        x = jax.random.normal(jax.random.fold_in(k_x, T), (B, T, F),
                              dtype=jnp.float32)
        ref_out, (ref_h, ref_c) = _reference_forward(x, raw)

        # f32 MXU path: tight fidelity to the PyTorch module.
        out, (h_n, c_n) = pblstm_forward(x, kparams_f32, time_chunk=chunk)
        jax.block_until_ready((out, h_n, c_n))
        assert out.shape == (B, T // 2, 2 * H)
        assert h_n.shape == (2, B, H) and c_n.shape == (2, B, H)
        assert jnp.allclose(out, ref_out, rtol=1e-4, atol=1e-4)
        assert jnp.allclose(h_n, ref_h, rtol=1e-4, atol=1e-4)
        assert jnp.allclose(c_n, ref_c, rtol=1e-4, atol=1e-4)

        # bf16 MXU-operand fast path (state / gate math stays f32);
        # tolerance sized for bf16 operand rounding over T/2 timesteps.
        x_bf16 = x.astype(jnp.bfloat16)
        ref_out_b, (ref_h_b, ref_c_b) = _reference_forward(
            x_bf16.astype(jnp.float32), raw)
        out_b, (h_n_b, c_n_b) = pblstm_forward(x_bf16, kparams_bf16,
                                               time_chunk=chunk)
        jax.block_until_ready((out_b, h_n_b, c_n_b))
        assert jnp.allclose(out_b, ref_out_b, rtol=5e-2, atol=5e-2)
        assert jnp.allclose(h_n_b, ref_h_b, rtol=5e-2, atol=5e-2)
        assert jnp.allclose(c_n_b, ref_c_b, rtol=5e-2, atol=5e-2)

    print("KERNEL_OK")
</pallas_src>

<mosaic_0001>
module attributes {stable_mosaic.version = 11 : i64} {
  func.func @_pblstm_kernel(%arg0: i32, %arg1: memref<2x8x32xf32, #tpu.memory_space<vmem>>, %arg2: memref<2x8x32xf32, #tpu.memory_space<vmem>>, %arg3: memref<32x128xf32, #tpu.memory_space<vmem>>, %arg4: memref<32x128xf32, #tpu.memory_space<vmem>>, %arg5: memref<32x256xf32, #tpu.memory_space<vmem>>, %arg6: memref<1x128xf32, #tpu.memory_space<vmem>>, %arg7: memref<1x128xf32, #tpu.memory_space<vmem>>, %arg8: memref<2x8x32xf32, #tpu.memory_space<vmem>>, %arg9: memref<2x8x32xf32, #tpu.memory_space<vmem>>, %arg10: memref<2x2x32xf32, #tpu.memory_space<vmem>>, %arg11: memref<2x2x32xf32, #tpu.memory_space<vmem>>, %arg12: memref<8x2x128xf32, #tpu.memory_space<vmem>>, %arg13: memref<8x2x128xf32, #tpu.memory_space<vmem>>, %arg14: memref<8x2x32xf32, #tpu.memory_space<vmem>>, %arg15: memref<8x2x32xf32, #tpu.memory_space<vmem>>, %arg16: memref<4x32xf32, #tpu.memory_space<vmem>>, %arg17: memref<4x32xf32, #tpu.memory_space<vmem>>) attributes {dimension_semantics = [#tpu.dimension_semantics<arbitrary>], iteration_bounds = array<i64: 1>, scalar_prefetch = 0 : i64, scratch_operands = 6 : i64, tpu.core_type = #tpu.core_type<tc>, window_params = [{transform_indices = @transform_0, window_bounds = array<i64: 2, 8, 32>}, {transform_indices = @transform_1, window_bounds = array<i64: 2, 8, 32>}, {pipeline_mode = #tpu.pipeline_mode<synchronous>, transform_indices = @transform_2, window_bounds = array<i64: 32, 128>}, {pipeline_mode = #tpu.pipeline_mode<synchronous>, transform_indices = @transform_3, window_bounds = array<i64: 32, 128>}, {pipeline_mode = #tpu.pipeline_mode<synchronous>, transform_indices = @transform_4, window_bounds = array<i64: 32, 256>}, {pipeline_mode = #tpu.pipeline_mode<synchronous>, transform_indices = @transform_5, window_bounds = array<i64: 1, 128>}, {pipeline_mode = #tpu.pipeline_mode<synchronous>, transform_indices = @transform_6, window_bounds = array<i64: 1, 128>}, {transform_indices = @transform_7, window_bounds = array<i64: 2, 8, 32>}, {transform_indices = @transform_8, window_bounds = array<i64: 2, 8, 32>}, {pipeline_mode = #tpu.pipeline_mode<synchronous>, transform_indices = @transform_9, window_bounds = array<i64: 2, 2, 32>}, {pipeline_mode = #tpu.pipeline_mode<synchronous>, transform_indices = @transform_10, window_bounds = array<i64: 2, 2, 32>}]} {
    %c0_i32 = arith.constant 0 : i32
    %0 = arith.cmpi eq, %arg0, %c0_i32 : i32
    %1 = arith.extui %0 : i1 to i32
    %c0_i32_0 = arith.constant 0 : i32
    %2 = arith.cmpi ne, %1, %c0_i32_0 : i32
    scf.if %2 {
      %cst_192 = arith.constant 0.000000e+00 : f32
      %526 = vector.broadcast %cst_192 : f32 to vector<4x32xf32>
      %c0_193 = arith.constant 0 : index
      %c0_194 = arith.constant 0 : index
      %527 = vector.load %arg16[%c0_193, %c0_194] : memref<4x32xf32, #tpu.memory_space<vmem>>, vector<4x32xf32>
      tpu.vector_store %arg16[%c0_193, %c0_194], %526 {strides = array<i32>} : memref<4x32xf32, #tpu.memory_space<vmem>>, vector<4x32xf32>,
      %cst_195 = arith.constant 0.000000e+00 : f32
      %528 = vector.broadcast %cst_195 : f32 to vector<4x32xf32>
      %c0_196 = arith.constant 0 : index
      %c0_197 = arith.constant 0 : index
      %529 = vector.load %arg17[%c0_196, %c0_197] : memref<4x32xf32, #tpu.memory_space<vmem>>, vector<4x32xf32>
      tpu.vector_store %arg17[%c0_196, %c0_197], %528 {strides = array<i32>} : memref<4x32xf32, #tpu.memory_space<vmem>>, vector<4x32xf32>,
    } else {
    }
    %c0 = arith.constant 0 : index
    %c0_1 = arith.constant 0 : index
    %c0_2 = arith.constant 0 : index
    %3 = vector.load %arg1[%c0, %c0_1, %c0_2] : memref<2x8x32xf32, #tpu.memory_space<vmem>>, vector<2x8x32xf32>
    %4 = vector.shape_cast %3 : vector<2x8x32xf32> to vector<16x32xf32>
    %c0_3 = arith.constant 0 : index
    %c0_4 = arith.constant 0 : index
    %c0_5 = arith.constant 0 : index
    %5 = vector.load %arg2[%c0_3, %c0_4, %c0_5] : memref<2x8x32xf32, #tpu.memory_space<vmem>>, vector<2x8x32xf32>
    %6 = vector.shape_cast %5 : vector<2x8x32xf32> to vector<16x32xf32>
    %c0_6 = arith.constant 0 : index
    %c0_7 = arith.constant 0 : index
    %7 = vector.load %arg3[%c0_6, %c0_7] : memref<32x128xf32, #tpu.memory_space<vmem>>, vector<32x128xf32>
    %cst = arith.constant dense<0.000000e+00> : vector<16x128xf32>
    %8 = tpu.matmul %4, %7, %cst {dimension_numbers = #tpu.dot_dimension_numbers<[1], [0], [0], [1], [0, 0, 1, 1], [], []>} : vector<16x32xf32>, vector<32x128xf32>, vector<16x128xf32> -> vector<16x128xf32>
    %c0_8 = arith.constant 0 : index
    %c0_9 = arith.constant 0 : index
    %9 = vector.load %arg6[%c0_8, %c0_9] : memref<1x128xf32, #tpu.memory_space<vmem>>, vector<1x128xf32>
    %10 = vector.broadcast %9 : vector<1x128xf32> to vector<16x128xf32>
    %11 = arith.addf %8, %10 : vector<16x128xf32>
    %12 = vector.shape_cast %11 : vector<16x128xf32> to vector<2x8x128xf32>
    %c0_10 = arith.constant 0 : index
    %c0_11 = arith.constant 0 : index
    %13 = vector.load %arg4[%c0_10, %c0_11] : memref<32x128xf32, #tpu.memory_space<vmem>>, vector<32x128xf32>
    %cst_12 = arith.constant dense<0.000000e+00> : vector<16x128xf32>
    %14 = tpu.matmul %6, %13, %cst_12 {dimension_numbers = #tpu.dot_dimension_numbers<[1], [0], [0], [1], [0, 0, 1, 1], [], []>} : vector<16x32xf32>, vector<32x128xf32>, vector<16x128xf32> -> vector<16x128xf32>
    %c0_13 = arith.constant 0 : index
    %c0_14 = arith.constant 0 : index
    %15 = vector.load %arg7[%c0_13, %c0_14] : memref<1x128xf32, #tpu.memory_space<vmem>>, vector<1x128xf32>
    %16 = vector.broadcast %15 : vector<1x128xf32> to vector<16x128xf32>
    %17 = arith.addf %14, %16 : vector<16x128xf32>
    %18 = vector.shape_cast %17 : vector<16x128xf32> to vector<2x8x128xf32>
    %19 = vector.extract_strided_slice %12 {offsets = [0, 0, 0], sizes = [1, 8, 128], strides = [1, 1, 1]} : vector<2x8x128xf32> to vector<1x8x128xf32>
    %20 = vector.shape_cast %19 : vector<1x8x128xf32> to vector<8x128xf32>
    %c0_15 = arith.constant 0 : index
    %c0_16 = arith.constant 0 : index
    %c0_17 = arith.constant 0 : index
    %21 = vector.load %arg12[%c0_15, %c0_16, %c0_17] : memref<8x2x128xf32, #tpu.memory_space<vmem>>, vector<8x1x128xf32>
    %22 = vector.shape_cast %21 : vector<8x1x128xf32> to vector<8x128xf32>
    %23 = vector.shape_cast %20 : vector<8x128xf32> to vector<8x1x128xf32>
    tpu.vector_store %arg12[%c0_15, %c0_16, %c0_17], %23 {strides = array<i32>} : memref<8x2x128xf32, #tpu.memory_space<vmem>>, vector<8x1x128xf32>,
    %24 = vector.extract_strided_slice %18 {offsets = [0, 0, 0], sizes = [1, 8, 128], strides = [1, 1, 1]} : vector<2x8x128xf32> to vector<1x8x128xf32>
    %25 = vector.shape_cast %24 : vector<1x8x128xf32> to vector<8x128xf32>
    %c0_18 = arith.constant 0 : index
    %c0_19 = arith.constant 0 : index
    %c0_20 = arith.constant 0 : index
    %26 = vector.load %arg13[%c0_18, %c0_19, %c0_20] : memref<8x2x128xf32, #tpu.memory_space<vmem>>, vector<8x1x128xf32>
    %27 = vector.shape_cast %26 : vector<8x1x128xf32> to vector<8x128xf32>
    %28 = vector.shape_cast %25 : vector<8x128xf32> to vector<8x1x128xf32>
    tpu.vector_store %arg13[%c0_18, %c0_19, %c0_20], %28 {strides = array<i32>} : memref<8x2x128xf32, #tpu.memory_space<vmem>>, vector<8x1x128xf32>,
    %29 = vector.extract_strided_slice %12 {offsets = [1, 0, 0], sizes = [1, 8, 128], strides = [1, 1, 1]} : vector<2x8x128xf32> to vector<1x8x128xf32>
    %30 = vector.shape_cast %29 : vector<1x8x128xf32> to vector<8x128xf32>
    %c0_21 = arith.constant 0 : index
    %c1 = arith.constant 1 : index
    %c0_22 = arith.constant 0 : index
    %31 = vector.load %arg12[%c0_21, %c1, %c0_22] : memref<8x2x128xf32, #tpu.memory_space<vmem>>, vector<8x1x128xf32>
    %32 = vector.shape_cast %31 : vector<8x1x128xf32> to vector<8x128xf32>
    %33 = vector.shape_cast %30 : vector<8x128xf32> to vector<8x1x128xf32>
    tpu.vector_store %arg12[%c0_21, %c1, %c0_22], %33 {strides = array<i32>} : memref<8x2x128xf32, #tpu.memory_space<vmem>>, vector<8x1x128xf32>,
    %34 = vector.extract_strided_slice %18 {offsets = [1, 0, 0], sizes = [1, 8, 128], strides = [1, 1, 1]} : vector<2x8x128xf32> to vector<1x8x128xf32>
    %35 = vector.shape_cast %34 : vector<1x8x128xf32> to vector<8x128xf32>
    %c0_23 = arith.constant 0 : index
    %c1_24 = arith.constant 1 : index
    %c0_25 = arith.constant 0 : index
    %36 = vector.load %arg13[%c0_23, %c1_24, %c0_25] : memref<8x2x128xf32, #tpu.memory_space<vmem>>, vector<8x1x128xf32>
    %37 = vector.shape_cast %36 : vector<8x1x128xf32> to vector<8x128xf32>
    %38 = vector.shape_cast %35 : vector<8x128xf32> to vector<8x1x128xf32>
    tpu.vector_store %arg13[%c0_23, %c1_24, %c0_25], %38 {strides = array<i32>} : memref<8x2x128xf32, #tpu.memory_space<vmem>>, vector<8x1x128xf32>,
    %c0_26 = arith.constant 0 : index
    %c0_27 = arith.constant 0 : index
    %39 = vector.load %arg5[%c0_26, %c0_27] : memref<32x256xf32, #tpu.memory_space<vmem>>, vector<32x256xf32>
    %c0_28 = arith.constant 0 : index
    %c0_29 = arith.constant 0 : index
    %40 = vector.load %arg16[%c0_28, %c0_29] : memref<4x32xf32, #tpu.memory_space<vmem>>, vector<4x32xf32>
    %c0_30 = arith.constant 0 : index
    %c0_31 = arith.constant 0 : index
    %41 = vector.load %arg17[%c0_30, %c0_31] : memref<4x32xf32, #tpu.memory_space<vmem>>, vector<4x32xf32>
    %42 = vector.extract_strided_slice %41 {offsets = [0, 0], sizes = [2, 32], strides = [1, 1]} : vector<4x32xf32> to vector<2x32xf32>
    %43 = vector.extract_strided_slice %41 {offsets = [2, 0], sizes = [2, 32], strides = [1, 1]} : vector<4x32xf32> to vector<2x32xf32>
    %c0_i32_32 = arith.constant 0 : i32
    %c7_i32 = arith.constant 7 : i32
    %44 = arith.subi %c7_i32, %c0_i32_32 : i32
    %cst_33 = arith.constant dense<0.000000e+00> : vector<4x256xf32>
    %45 = tpu.matmul %40, %39, %cst_33 {dimension_numbers = #tpu.dot_dimension_numbers<[1], [0], [0], [1], [0, 0, 1, 1], [], []>} : vector<4x32xf32>, vector<32x256xf32>, vector<4x256xf32> -> vector<4x256xf32>
    %46 = arith.index_cast %c0_i32_32 : i32 to index
    %c0_34 = arith.constant 0 : index
    %c0_35 = arith.constant 0 : index
    %47 = vector.load %arg12[%46, %c0_34, %c0_35] : memref<8x2x128xf32, #tpu.memory_space<vmem>>, vector<1x2x128xf32>
    %48 = vector.shape_cast %47 : vector<1x2x128xf32> to vector<2x128xf32>
    %49 = vector.extract_strided_slice %45 {offsets = [0, 0], sizes = [2, 128], strides = [1, 1]} : vector<4x256xf32> to vector<2x128xf32>
    %50 = arith.addf %48, %49 : vector<2x128xf32>
    %51 = arith.index_cast %44 : i32 to index
    %c0_36 = arith.constant 0 : index
    %c0_37 = arith.constant 0 : index
    %52 = vector.load %arg13[%51, %c0_36, %c0_37] : memref<8x2x128xf32, #tpu.memory_space<vmem>>, vector<1x2x128xf32>
    %53 = vector.shape_cast %52 : vector<1x2x128xf32> to vector<2x128xf32>
    %54 = vector.extract_strided_slice %45 {offsets = [2, 128], sizes = [2, 128], strides = [1, 1]} : vector<4x256xf32> to vector<2x128xf32>
    %55 = arith.addf %53, %54 : vector<2x128xf32>
    %56 = vector.extract_strided_slice %50 {offsets = [0, 0], sizes = [2, 96], strides = [1, 1]} : vector<2x128xf32> to vector<2x96xf32>
    %cst_38 = arith.constant 5.000000e-01 : f32
    %57 = vector.broadcast %cst_38 : f32 to vector<2x96xf32>
    %58 = arith.mulf %57, %56 : vector<2x96xf32>
    %59 = math.tanh %58 : vector<2x96xf32>
    %cst_39 = arith.constant 5.000000e-01 : f32
    %60 = vector.broadcast %cst_39 : f32 to vector<2x96xf32>
    %61 = arith.mulf %60, %59 : vector<2x96xf32>
    %cst_40 = arith.constant 5.000000e-01 : f32
    %62 = vector.broadcast %cst_40 : f32 to vector<2x96xf32>
    %63 = arith.addf %61, %62 : vector<2x96xf32>
    %64 = vector.extract_strided_slice %55 {offsets = [0, 0], sizes = [2, 96], strides = [1, 1]} : vector<2x128xf32> to vector<2x96xf32>
    %cst_41 = arith.constant 5.000000e-01 : f32
    %65 = vector.broadcast %cst_41 : f32 to vector<2x96xf32>
    %66 = arith.mulf %65, %64 : vector<2x96xf32>
    %67 = math.tanh %66 : vector<2x96xf32>
    %cst_42 = arith.constant 5.000000e-01 : f32
    %68 = vector.broadcast %cst_42 : f32 to vector<2x96xf32>
    %69 = arith.mulf %68, %67 : vector<2x96xf32>
    %cst_43 = arith.constant 5.000000e-01 : f32
    %70 = vector.broadcast %cst_43 : f32 to vector<2x96xf32>
    %71 = arith.addf %69, %70 : vector<2x96xf32>
    %72 = vector.extract_strided_slice %63 {offsets = [0, 32], sizes = [2, 32], strides = [1, 1]} : vector<2x96xf32> to vector<2x32xf32>
    %73 = arith.mulf %72, %42 : vector<2x32xf32>
    %74 = vector.extract_strided_slice %63 {offsets = [0, 0], sizes = [2, 32], strides = [1, 1]} : vector<2x96xf32> to vector<2x32xf32>
    %75 = vector.extract_strided_slice %50 {offsets = [0, 96], sizes = [2, 32], strides = [1, 1]} : vector<2x128xf32> to vector<2x32xf32>
    %76 = math.tanh %75 : vector<2x32xf32>
    %77 = arith.mulf %74, %76 : vector<2x32xf32>
    %78 = arith.addf %73, %77 : vector<2x32xf32>
    %79 = vector.extract_strided_slice %71 {offsets = [0, 32], sizes = [2, 32], strides = [1, 1]} : vector<2x96xf32> to vector<2x32xf32>
    %80 = arith.mulf %79, %43 : vector<2x32xf32>
    %81 = vector.extract_strided_slice %71 {offsets = [0, 0], sizes = [2, 32], strides = [1, 1]} : vector<2x96xf32> to vector<2x32xf32>
    %82 = vector.extract_strided_slice %55 {offsets = [0, 96], sizes = [2, 32], strides = [1, 1]} : vector<2x128xf32> to vector<2x32xf32>
    %83 = math.tanh %82 : vector<2x32xf32>
    %84 = arith.mulf %81, %83 : vector<2x32xf32>
    %85 = arith.addf %80, %84 : vector<2x32xf32>
    %86 = vector.extract_strided_slice %63 {offsets = [0, 64], sizes = [2, 32], strides = [1, 1]} : vector<2x96xf32> to vector<2x32xf32>
    %87 = math.tanh %78 : vector<2x32xf32>
    %88 = arith.mulf %86, %87 : vector<2x32xf32>
    %89 = vector.extract_strided_slice %71 {offsets = [0, 64], sizes = [2, 32], strides = [1, 1]} : vector<2x96xf32> to vector<2x32xf32>
    %90 = math.tanh %85 : vector<2x32xf32>
    %91 = arith.mulf %89, %90 : vector<2x32xf32>
    %92 = arith.index_cast %c0_i32_32 : i32 to index
    %c0_44 = arith.constant 0 : index
    %c0_45 = arith.constant 0 : index
    %93 = vector.load %arg14[%92, %c0_44, %c0_45] : memref<8x2x32xf32, #tpu.memory_space<vmem>>, vector<1x2x32xf32>
    %94 = vector.shape_cast %93 : vector<1x2x32xf32> to vector<2x32xf32>
    %95 = vector.shape_cast %88 : vector<2x32xf32> to vector<1x2x32xf32>
    tpu.vector_store %arg14[%92, %c0_44, %c0_45], %95 {strides = array<i32>} : memref<8x2x32xf32, #tpu.memory_space<vmem>>, vector<1x2x32xf32>,
    %96 = arith.index_cast %44 : i32 to index
    %c0_46 = arith.constant 0 : index
    %c0_47 = arith.constant 0 : index
    %97 = vector.load %arg15[%96, %c0_46, %c0_47] : memref<8x2x32xf32, #tpu.memory_space<vmem>>, vector<1x2x32xf32>
    %98 = vector.shape_cast %97 : vector<1x2x32xf32> to vector<2x32xf32>
    %99 = vector.shape_cast %91 : vector<2x32xf32> to vector<1x2x32xf32>
    tpu.vector_store %arg15[%96, %c0_46, %c0_47], %99 {strides = array<i32>} : memref<8x2x32xf32, #tpu.memory_space<vmem>>, vector<1x2x32xf32>,
    %100 = tpu.concatenate %88, %91 in 0 : vector<2x32xf32>, vector<2x32xf32> -> vector<4x32xf32>
    %c1_i32 = arith.constant 1 : i32
    %c7_i32_48 = arith.constant 7 : i32
    %101 = arith.subi %c7_i32_48, %c1_i32 : i32
    %cst_49 = arith.constant dense<0.000000e+00> : vector<4x256xf32>
    %102 = tpu.matmul %100, %39, %cst_49 {dimension_numbers = #tpu.dot_dimension_numbers<[1], [0], [0], [1], [0, 0, 1, 1], [], []>} : vector<4x32xf32>, vector<32x256xf32>, vector<4x256xf32> -> vector<4x256xf32>
    %103 = arith.index_cast %c1_i32 : i32 to index
    %c0_50 = arith.constant 0 : index
    %c0_51 = arith.constant 0 : index
    %104 = vector.load %arg12[%103, %c0_50, %c0_51] : memref<8x2x128xf32, #tpu.memory_space<vmem>>, vector<1x2x128xf32>
    %105 = vector.shape_cast %104 : vector<1x2x128xf32> to vector<2x128xf32>
    %106 = vector.extract_strided_slice %102 {offsets = [0, 0], sizes = [2, 128], strides = [1, 1]} : vector<4x256xf32> to vector<2x128xf32>
    %107 = arith.addf %105, %106 : vector<2x128xf32>
    %108 = arith.index_cast %101 : i32 to index
    %c0_52 = arith.constant 0 : index
    %c0_53 = arith.constant 0 : index
    %109 = vector.load %arg13[%108, %c0_52, %c0_53] : memref<8x2x128xf32, #tpu.memory_space<vmem>>, vector<1x2x128xf32>
    %110 = vector.shape_cast %109 : vector<1x2x128xf32> to vector<2x128xf32>
    %111 = vector.extract_strided_slice %102 {offsets = [2, 128], sizes = [2, 128], strides = [1, 1]} : vector<4x256xf32> to vector<2x128xf32>
    %112 = arith.addf %110, %111 : vector<2x128xf32>
    %113 = vector.extract_strided_slice %107 {offsets = [0, 0], sizes = [2, 96], strides = [1, 1]} : vector<2x128xf32> to vector<2x96xf32>
    %cst_54 = arith.constant 5.000000e-01 : f32
    %114 = vector.broadcast %cst_54 : f32 to vector<2x96xf32>
    %115 = arith.mulf %114, %113 : vector<2x96xf32>
    %116 = math.tanh %115 : vector<2x96xf32>
    %cst_55 = arith.constant 5.000000e-01 : f32
    %117 = vector.broadcast %cst_55 : f32 to vector<2x96xf32>
    %118 = arith.mulf %117, %116 : vector<2x96xf32>
    %cst_56 = arith.constant 5.000000e-01 : f32
    %119 = vector.broadcast %cst_56 : f32 to vector<2x96xf32>
    %120 = arith.addf %118, %119 : vector<2x96xf32>
    %121 = vector.extract_strided_slice %112 {offsets = [0, 0], sizes = [2, 96], strides = [1, 1]} : vector<2x128xf32> to vector<2x96xf32>
    %cst_57 = arith.constant 5.000000e-01 : f32
    %122 = vector.broadcast %cst_57 : f32 to vector<2x96xf32>
    %123 = arith.mulf %122, %121 : vector<2x96xf32>
    %124 = math.tanh %123 : vector<2x96xf32>
    %cst_58 = arith.constant 5.000000e-01 : f32
    %125 = vector.broadcast %cst_58 : f32 to vector<2x96xf32>
    %126 = arith.mulf %125, %124 : vector<2x96xf32>
    %cst_59 = arith.constant 5.000000e-01 : f32
    %127 = vector.broadcast %cst_59 : f32 to vector<2x96xf32>
    %128 = arith.addf %126, %127 : vector<2x96xf32>
    %129 = vector.extract_strided_slice %120 {offsets = [0, 32], sizes = [2, 32], strides = [1, 1]} : vector<2x96xf32> to vector<2x32xf32>
    %130 = arith.mulf %129, %78 : vector<2x32xf32>
    %131 = vector.extract_strided_slice %120 {offsets = [0, 0], sizes = [2, 32], strides = [1, 1]} : vector<2x96xf32> to vector<2x32xf32>
    %132 = vector.extract_strided_slice %107 {offsets = [0, 96], sizes = [2, 32], strides = [1, 1]} : vector<2x128xf32> to vector<2x32xf32>
    %133 = math.tanh %132 : vector<2x32xf32>
    %134 = arith.mulf %131, %133 : vector<2x32xf32>
    %135 = arith.addf %130, %134 : vector<2x32xf32>
    %136 = vector.extract_strided_slice %128 {offsets = [0, 32], sizes = [2, 32], strides = [1, 1]} : vector<2x96xf32> to vector<2x32xf32>
    %137 = arith.mulf %136, %85 : vector<2x32xf32>
    %138 = vector.extract_strided_slice %128 {offsets = [0, 0], sizes = [2, 32], strides = [1, 1]} : vector<2x96xf32> to vector<2x32xf32>
    %139 = vector.extract_strided_slice %112 {offsets = [0, 96], sizes = [2, 32], strides = [1, 1]} : vector<2x128xf32> to vector<2x32xf32>
    %140 = math.tanh %139 : vector<2x32xf32>
    %141 = arith.mulf %138, %140 : vector<2x32xf32>
    %142 = arith.addf %137, %141 : vector<2x32xf32>
    %143 = vector.extract_strided_slice %120 {offsets = [0, 64], sizes = [2, 32], strides = [1, 1]} : vector<2x96xf32> to vector<2x32xf32>
    %144 = math.tanh %135 : vector<2x32xf32>
    %145 = arith.mulf %143, %144 : vector<2x32xf32>
    %146 = vector.extract_strided_slice %128 {offsets = [0, 64], sizes = [2, 32], strides = [1, 1]} : vector<2x96xf32> to vector<2x32xf32>
    %147 = math.tanh %142 : vector<2x32xf32>
    %148 = arith.mulf %146, %147 : vector<2x32xf32>
    %149 = arith.index_cast %c1_i32 : i32 to index
    %c0_60 = arith.constant 0 : index
    %c0_61 = arith.constant 0 : index
    %150 = vector.load %arg14[%149, %c0_60, %c0_61] : memref<8x2x32xf32, #tpu.memory_space<vmem>>, vector<1x2x32xf32>
    %151 = vector.shape_cast %150 : vector<1x2x32xf32> to vector<2x32xf32>
    %152 = vector.shape_cast %145 : vector<2x32xf32> to vector<1x2x32xf32>
    tpu.vector_store %arg14[%149, %c0_60, %c0_61], %152 {strides = array<i32>} : memref<8x2x32xf32, #tpu.memory_space<vmem>>, vector<1x2x32xf32>,
    %153 = arith.index_cast %101 : i32 to index
    %c0_62 = arith.constant 0 : index
    %c0_63 = arith.constant 0 : index
    %154 = vector.load %arg15[%153, %c0_62, %c0_63] : memref<8x2x32xf32, #tpu.memory_space<vmem>>, vector<1x2x32xf32>
    %155 = vector.shape_cast %154 : vector<1x2x32xf32> to vector<2x32xf32>
    %156 = vector.shape_cast %148 : vector<2x32xf32> to vector<1x2x32xf32>
    tpu.vector_store %arg15[%153, %c0_62, %c0_63], %156 {strides = array<i32>} : memref<8x2x32xf32, #tpu.memory_space<vmem>>, vector<1x2x32xf32>,
    %157 = tpu.concatenate %145, %148 in 0 : vector<2x32xf32>, vector<2x32xf32> -> vector<4x32xf32>
    %c2_i32 = arith.constant 2 : i32
    %c7_i32_64 = arith.constant 7 : i32
    %158 = arith.subi %c7_i32_64, %c2_i32 : i32
    %cst_65 = arith.constant dense<0.000000e+00> : vector<4x256xf32>
    %159 = tpu.matmul %157, %39, %cst_65 {dimension_numbers = #tpu.dot_dimension_numbers<[1], [0], [0], [1], [0, 0, 1, 1], [], []>} : vector<4x32xf32>, vector<32x256xf32>, vector<4x256xf32> -> vector<4x256xf32>
    %160 = arith.index_cast %c2_i32 : i32 to index
    %c0_66 = arith.constant 0 : index
    %c0_67 = arith.constant 0 : index
    %161 = vector.load %arg12[%160, %c0_66, %c0_67] : memref<8x2x128xf32, #tpu.memory_space<vmem>>, vector<1x2x128xf32>
    %162 = vector.shape_cast %161 : vector<1x2x128xf32> to vector<2x128xf32>
    %163 = vector.extract_strided_slice %159 {offsets = [0, 0], sizes = [2, 128], strides = [1, 1]} : vector<4x256xf32> to vector<2x128xf32>
    %164 = arith.addf %162, %163 : vector<2x128xf32>
    %165 = arith.index_cast %158 : i32 to index
    %c0_68 = arith.constant 0 : index
    %c0_69 = arith.constant 0 : index
    %166 = vector.load %arg13[%165, %c0_68, %c0_69] : memref<8x2x128xf32, #tpu.memory_space<vmem>>, vector<1x2x128xf32>
    %167 = vector.shape_cast %166 : vector<1x2x128xf32> to vector<2x128xf32>
    %168 = vector.extract_strided_slice %159 {offsets = [2, 128], sizes = [2, 128], strides = [1, 1]} : vector<4x256xf32> to vector<2x128xf32>
    %169 = arith.addf %167, %168 : vector<2x128xf32>
    %170 = vector.extract_strided_slice %164 {offsets = [0, 0], sizes = [2, 96], strides = [1, 1]} : vector<2x128xf32> to vector<2x96xf32>
    %cst_70 = arith.constant 5.000000e-01 : f32
    %171 = vector.broadcast %cst_70 : f32 to vector<2x96xf32>
    %172 = arith.mulf %171, %170 : vector<2x96xf32>
    %173 = math.tanh %172 : vector<2x96xf32>
    %cst_71 = arith.constant 5.000000e-01 : f32
    %174 = vector.broadcast %cst_71 : f32 to vector<2x96xf32>
    %175 = arith.mulf %174, %173 : vector<2x96xf32>
    %cst_72 = arith.constant 5.000000e-01 : f32
    %176 = vector.broadcast %cst_72 : f32 to vector<2x96xf32>
    %177 = arith.addf %175, %176 : vector<2x96xf32>
    %178 = vector.extract_strided_slice %169 {offsets = [0, 0], sizes = [2, 96], strides = [1, 1]} : vector<2x128xf32> to vector<2x96xf32>
    %cst_73 = arith.constant 5.000000e-01 : f32
    %179 = vector.broadcast %cst_73 : f32 to vector<2x96xf32>
    %180 = arith.mulf %179, %178 : vector<2x96xf32>
    %181 = math.tanh %180 : vector<2x96xf32>
    %cst_74 = arith.constant 5.000000e-01 : f32
    %182 = vector.broadcast %cst_74 : f32 to vector<2x96xf32>
    %183 = arith.mulf %182, %181 : vector<2x96xf32>
    %cst_75 = arith.constant 5.000000e-01 : f32
    %184 = vector.broadcast %cst_75 : f32 to vector<2x96xf32>
    %185 = arith.addf %183, %184 : vector<2x96xf32>
    %186 = vector.extract_strided_slice %177 {offsets = [0, 32], sizes = [2, 32], strides = [1, 1]} : vector<2x96xf32> to vector<2x32xf32>
    %187 = arith.mulf %186, %135 : vector<2x32xf32>
    %188 = vector.extract_strided_slice %177 {offsets = [0, 0], sizes = [2, 32], strides = [1, 1]} : vector<2x96xf32> to vector<2x32xf32>
    %189 = vector.extract_strided_slice %164 {offsets = [0, 96], sizes = [2, 32], strides = [1, 1]} : vector<2x128xf32> to vector<2x32xf32>
    %190 = math.tanh %189 : vector<2x32xf32>
    %191 = arith.mulf %188, %190 : vector<2x32xf32>
    %192 = arith.addf %187, %191 : vector<2x32xf32>
    %193 = vector.extract_strided_slice %185 {offsets = [0, 32], sizes = [2, 32], strides = [1, 1]} : vector<2x96xf32> to vector<2x32xf32>
    %194 = arith.mulf %193, %142 : vector<2x32xf32>
    %195 = vector.extract_strided_slice %185 {offsets = [0, 0], sizes = [2, 32], strides = [1, 1]} : vector<2x96xf32> to vector<2x32xf32>
    %196 = vector.extract_strided_slice %169 {offsets = [0, 96], sizes = [2, 32], strides = [1, 1]} : vector<2x128xf32> to vector<2x32xf32>
    %197 = math.tanh %196 : vector<2x32xf32>
    %198 = arith.mulf %195, %197 : vector<2x32xf32>
    %199 = arith.addf %194, %198 : vector<2x32xf32>
    %200 = vector.extract_strided_slice %177 {offsets = [0, 64], sizes = [2, 32], strides = [1, 1]} : vector<2x96xf32> to vector<2x32xf32>
    %201 = math.tanh %192 : vector<2x32xf32>
    %202 = arith.mulf %200, %201 : vector<2x32xf32>
    %203 = vector.extract_strided_slice %185 {offsets = [0, 64], sizes = [2, 32], strides = [1, 1]} : vector<2x96xf32> to vector<2x32xf32>
    %204 = math.tanh %199 : vector<2x32xf32>
    %205 = arith.mulf %203, %204 : vector<2x32xf32>
    %206 = arith.index_cast %c2_i32 : i32 to index
    %c0_76 = arith.constant 0 : index
    %c0_77 = arith.constant 0 : index
    %207 = vector.load %arg14[%206, %c0_76, %c0_77] : memref<8x2x32xf32, #tpu.memory_space<vmem>>, vector<1x2x32xf32>
    %208 = vector.shape_cast %207 : vector<1x2x32xf32> to vector<2x32xf32>
    %209 = vector.shape_cast %202 : vector<2x32xf32> to vector<1x2x32xf32>
    tpu.vector_store %arg14[%206, %c0_76, %c0_77], %209 {strides = array<i32>} : memref<8x2x32xf32, #tpu.memory_space<vmem>>, vector<1x2x32xf32>,
    %210 = arith.index_cast %158 : i32 to index
    %c0_78 = arith.constant 0 : index
    %c0_79 = arith.constant 0 : index
    %211 = vector.load %arg15[%210, %c0_78, %c0_79] : memref<8x2x32xf32, #tpu.memory_space<vmem>>, vector<1x2x32xf32>
    %212 = vector.shape_cast %211 : vector<1x2x32xf32> to vector<2x32xf32>
    %213 = vector.shape_cast %205 : vector<2x32xf32> to vector<1x2x32xf32>
    tpu.vector_store %arg15[%210, %c0_78, %c0_79], %213 {strides = array<i32>} : memref<8x2x32xf32, #tpu.memory_space<vmem>>, vector<1x2x32xf32>,
    %214 = tpu.concatenate %202, %205 in 0 : vector<2x32xf32>, vector<2x32xf32> -> vector<4x32xf32>
    %c3_i32 = arith.constant 3 : i32
    %c7_i32_80 = arith.constant 7 : i32
    %215 = arith.subi %c7_i32_80, %c3_i32 : i32
    %cst_81 = arith.constant dense<0.000000e+00> : vector<4x256xf32>
    %216 = tpu.matmul %214, %39, %cst_81 {dimension_numbers = #tpu.dot_dimension_numbers<[1], [0], [0], [1], [0, 0, 1, 1], [], []>} : vector<4x32xf32>, vector<32x256xf32>, vector<4x256xf32> -> vector<4x256xf32>
    %217 = arith.index_cast %c3_i32 : i32 to index
    %c0_82 = arith.constant 0 : index
    %c0_83 = arith.constant 0 : index
    %218 = vector.load %arg12[%217, %c0_82, %c0_83] : memref<8x2x128xf32, #tpu.memory_space<vmem>>, vector<1x2x128xf32>
    %219 = vector.shape_cast %218 : vector<1x2x128xf32> to vector<2x128xf32>
    %220 = vector.extract_strided_slice %216 {offsets = [0, 0], sizes = [2, 128], strides = [1, 1]} : vector<4x256xf32> to vector<2x128xf32>
    %221 = arith.addf %219, %220 : vector<2x128xf32>
    %222 = arith.index_cast %215 : i32 to index
    %c0_84 = arith.constant 0 : index
    %c0_85 = arith.constant 0 : index
    %223 = vector.load %arg13[%222, %c0_84, %c0_85] : memref<8x2x128xf32, #tpu.memory_space<vmem>>, vector<1x2x128xf32>
    %224 = vector.shape_cast %223 : vector<1x2x128xf32> to vector<2x128xf32>
    %225 = vector.extract_strided_slice %216 {offsets = [2, 128], sizes = [2, 128], strides = [1, 1]} : vector<4x256xf32> to vector<2x128xf32>
    %226 = arith.addf %224, %225 : vector<2x128xf32>
    %227 = vector.extract_strided_slice %221 {offsets = [0, 0], sizes = [2, 96], strides = [1, 1]} : vector<2x128xf32> to vector<2x96xf32>
    %cst_86 = arith.constant 5.000000e-01 : f32
    %228 = vector.broadcast %cst_86 : f32 to vector<2x96xf32>
    %229 = arith.mulf %228, %227 : vector<2x96xf32>
    %230 = math.tanh %229 : vector<2x96xf32>
    %cst_87 = arith.constant 5.000000e-01 : f32
    %231 = vector.broadcast %cst_87 : f32 to vector<2x96xf32>
    %232 = arith.mulf %231, %230 : vector<2x96xf32>
    %cst_88 = arith.constant 5.000000e-01 : f32
    %233 = vector.broadcast %cst_88 : f32 to vector<2x96xf32>
    %234 = arith.addf %232, %233 : vector<2x96xf32>
    %235 = vector.extract_strided_slice %226 {offsets = [0, 0], sizes = [2, 96], strides = [1, 1]} : vector<2x128xf32> to vector<2x96xf32>
    %cst_89 = arith.constant 5.000000e-01 : f32
    %236 = vector.broadcast %cst_89 : f32 to vector<2x96xf32>
    %237 = arith.mulf %236, %235 : vector<2x96xf32>
    %238 = math.tanh %237 : vector<2x96xf32>
    %cst_90 = arith.constant 5.000000e-01 : f32
    %239 = vector.broadcast %cst_90 : f32 to vector<2x96xf32>
    %240 = arith.mulf %239, %238 : vector<2x96xf32>
    %cst_91 = arith.constant 5.000000e-01 : f32
    %241 = vector.broadcast %cst_91 : f32 to vector<2x96xf32>
    %242 = arith.addf %240, %241 : vector<2x96xf32>
    %243 = vector.extract_strided_slice %234 {offsets = [0, 32], sizes = [2, 32], strides = [1, 1]} : vector<2x96xf32> to vector<2x32xf32>
    %244 = arith.mulf %243, %192 : vector<2x32xf32>
    %245 = vector.extract_strided_slice %234 {offsets = [0, 0], sizes = [2, 32], strides = [1, 1]} : vector<2x96xf32> to vector<2x32xf32>
    %246 = vector.extract_strided_slice %221 {offsets = [0, 96], sizes = [2, 32], strides = [1, 1]} : vector<2x128xf32> to vector<2x32xf32>
    %247 = math.tanh %246 : vector<2x32xf32>
    %248 = arith.mulf %245, %247 : vector<2x32xf32>
    %249 = arith.addf %244, %248 : vector<2x32xf32>
    %250 = vector.extract_strided_slice %242 {offsets = [0, 32], sizes = [2, 32], strides = [1, 1]} : vector<2x96xf32> to vector<2x32xf32>
    %251 = arith.mulf %250, %199 : vector<2x32xf32>
    %252 = vector.extract_strided_slice %242 {offsets = [0, 0], sizes = [2, 32], strides = [1, 1]} : vector<2x96xf32> to vector<2x32xf32>
    %253 = vector.extract_strided_slice %226 {offsets = [0, 96], sizes = [2, 32], strides = [1, 1]} : vector<2x128xf32> to vector<2x32xf32>
    %254 = math.tanh %253 : vector<2x32xf32>
    %255 = arith.mulf %252, %254 : vector<2x32xf32>
    %256 = arith.addf %251, %255 : vector<2x32xf32>
    %257 = vector.extract_strided_slice %234 {offsets = [0, 64], sizes = [2, 32], strides = [1, 1]} : vector<2x96xf32> to vector<2x32xf32>
    %258 = math.tanh %249 : vector<2x32xf32>
    %259 = arith.mulf %257, %258 : vector<2x32xf32>
    %260 = vector.extract_strided_slice %242 {offsets = [0, 64], sizes = [2, 32], strides = [1, 1]} : vector<2x96xf32> to vector<2x32xf32>
    %261 = math.tanh %256 : vector<2x32xf32>
    %262 = arith.mulf %260, %261 : vector<2x32xf32>
    %263 = arith.index_cast %c3_i32 : i32 to index
    %c0_92 = arith.constant 0 : index
    %c0_93 = arith.constant 0 : index
    %264 = vector.load %arg14[%263, %c0_92, %c0_93] : memref<8x2x32xf32, #tpu.memory_space<vmem>>, vector<1x2x32xf32>
    %265 = vector.shape_cast %264 : vector<1x2x32xf32> to vector<2x32xf32>
    %266 = vector.shape_cast %259 : vector<2x32xf32> to vector<1x2x32xf32>
    tpu.vector_store %arg14[%263, %c0_92, %c0_93], %266 {strides = array<i32>} : memref<8x2x32xf32, #tpu.memory_space<vmem>>, vector<1x2x32xf32>,
    %267 = arith.index_cast %215 : i32 to index
    %c0_94 = arith.constant 0 : index
    %c0_95 = arith.constant 0 : index
    %268 = vector.load %arg15[%267, %c0_94, %c0_95] : memref<8x2x32xf32, #tpu.memory_space<vmem>>, vector<1x2x32xf32>
    %269 = vector.shape_cast %268 : vector<1x2x32xf32> to vector<2x32xf32>
    %270 = vector.shape_cast %262 : vector<2x32xf32> to vector<1x2x32xf32>
    tpu.vector_store %arg15[%267, %c0_94, %c0_95], %270 {strides = array<i32>} : memref<8x2x32xf32, #tpu.memory_space<vmem>>, vector<1x2x32xf32>,
    %271 = tpu.concatenate %259, %262 in 0 : vector<2x32xf32>, vector<2x32xf32> -> vector<4x32xf32>
    %c4_i32 = arith.constant 4 : i32
    %c7_i32_96 = arith.constant 7 : i32
    %272 = arith.subi %c7_i32_96, %c4_i32 : i32
    %cst_97 = arith.constant dense<0.000000e+00> : vector<4x256xf32>
    %273 = tpu.matmul %271, %39, %cst_97 {dimension_numbers = #tpu.dot_dimension_numbers<[1], [0], [0], [1], [0, 0, 1, 1], [], []>} : vector<4x32xf32>, vector<32x256xf32>, vector<4x256xf32> -> vector<4x256xf32>
    %274 = arith.index_cast %c4_i32 : i32 to index
    %c0_98 = arith.constant 0 : index
    %c0_99 = arith.constant 0 : index
    %275 = vector.load %arg12[%274, %c0_98, %c0_99] : memref<8x2x128xf32, #tpu.memory_space<vmem>>, vector<1x2x128xf32>
    %276 = vector.shape_cast %275 : vector<1x2x128xf32> to vector<2x128xf32>
    %277 = vector.extract_strided_slice %273 {offsets = [0, 0], sizes = [2, 128], strides = [1, 1]} : vector<4x256xf32> to vector<2x128xf32>
    %278 = arith.addf %276, %277 : vector<2x128xf32>
    %279 = arith.index_cast %272 : i32 to index
    %c0_100 = arith.constant 0 : index
    %c0_101 = arith.constant 0 : index
    %280 = vector.load %arg13[%279, %c0_100, %c0_101] : memref<8x2x128xf32, #tpu.memory_space<vmem>>, vector<1x2x128xf32>
    %281 = vector.shape_cast %280 : vector<1x2x128xf32> to vector<2x128xf32>
    %282 = vector.extract_strided_slice %273 {offsets = [2, 128], sizes = [2, 128], strides = [1, 1]} : vector<4x256xf32> to vector<2x128xf32>
    %283 = arith.addf %281, %282 : vector<2x128xf32>
    %284 = vector.extract_strided_slice %278 {offsets = [0, 0], sizes = [2, 96], strides = [1, 1]} : vector<2x128xf32> to vector<2x96xf32>
    %cst_102 = arith.constant 5.000000e-01 : f32
    %285 = vector.broadcast %cst_102 : f32 to vector<2x96xf32>
    %286 = arith.mulf %285, %284 : vector<2x96xf32>
    %287 = math.tanh %286 : vector<2x96xf32>
    %cst_103 = arith.constant 5.000000e-01 : f32
    %288 = vector.broadcast %cst_103 : f32 to vector<2x96xf32>
    %289 = arith.mulf %288, %287 : vector<2x96xf32>
    %cst_104 = arith.constant 5.000000e-01 : f32
    %290 = vector.broadcast %cst_104 : f32 to vector<2x96xf32>
    %291 = arith.addf %289, %290 : vector<2x96xf32>
    %292 = vector.extract_strided_slice %283 {offsets = [0, 0], sizes = [2, 96], strides = [1, 1]} : vector<2x128xf32> to vector<2x96xf32>
    %cst_105 = arith.constant 5.000000e-01 : f32
    %293 = vector.broadcast %cst_105 : f32 to vector<2x96xf32>
    %294 = arith.mulf %293, %292 : vector<2x96xf32>
    %295 = math.tanh %294 : vector<2x96xf32>
    %cst_106 = arith.constant 5.000000e-01 : f32
    %296 = vector.broadcast %cst_106 : f32 to vector<2x96xf32>
    %297 = arith.mulf %296, %295 : vector<2x96xf32>
    %cst_107 = arith.constant 5.000000e-01 : f32
    %298 = vector.broadcast %cst_107 : f32 to vector<2x96xf32>
    %299 = arith.addf %297, %298 : vector<2x96xf32>
    %300 = vector.extract_strided_slice %291 {offsets = [0, 32], sizes = [2, 32], strides = [1, 1]} : vector<2x96xf32> to vector<2x32xf32>
    %301 = arith.mulf %300, %249 : vector<2x32xf32>
    %302 = vector.extract_strided_slice %291 {offsets = [0, 0], sizes = [2, 32], strides = [1, 1]} : vector<2x96xf32> to vector<2x32xf32>
    %303 = vector.extract_strided_slice %278 {offsets = [0, 96], sizes = [2, 32], strides = [1, 1]} : vector<2x128xf32> to vector<2x32xf32>
    %304 = math.tanh %303 : vector<2x32xf32>
    %305 = arith.mulf %302, %304 : vector<2x32xf32>
    %306 = arith.addf %301, %305 : vector<2x32xf32>
    %307 = vector.extract_strided_slice %299 {offsets = [0, 32], sizes = [2, 32], strides = [1, 1]} : vector<2x96xf32> to vector<2x32xf32>
    %308 = arith.mulf %307, %256 : vector<2x32xf32>
    %309 = vector.extract_strided_slice %299 {offsets = [0, 0], sizes = [2, 32], strides = [1, 1]} : vector<2x96xf32> to vector<2x32xf32>
    %310 = vector.extract_strided_slice %283 {offsets = [0, 96], sizes = [2, 32], strides = [1, 1]} : vector<2x128xf32> to vector<2x32xf32>
    %311 = math.tanh %310 : vector<2x32xf32>
    %312 = arith.mulf %309, %311 : vector<2x32xf32>
    %313 = arith.addf %308, %312 : vector<2x32xf32>
    %314 = vector.extract_strided_slice %291 {offsets = [0, 64], sizes = [2, 32], strides = [1, 1]} : vector<2x96xf32> to vector<2x32xf32>
    %315 = math.tanh %306 : vector<2x32xf32>
    %316 = arith.mulf %314, %315 : vector<2x32xf32>
    %317 = vector.extract_strided_slice %299 {offsets = [0, 64], sizes = [2, 32], strides = [1, 1]} : vector<2x96xf32> to vector<2x32xf32>
    %318 = math.tanh %313 : vector<2x32xf32>
    %319 = arith.mulf %317, %318 : vector<2x32xf32>
    %320 = arith.index_cast %c4_i32 : i32 to index
    %c0_108 = arith.constant 0 : index
    %c0_109 = arith.constant 0 : index
    %321 = vector.load %arg14[%320, %c0_108, %c0_109] : memref<8x2x32xf32, #tpu.memory_space<vmem>>, vector<1x2x32xf32>
    %322 = vector.shape_cast %321 : vector<1x2x32xf32> to vector<2x32xf32>
    %323 = vector.shape_cast %316 : vector<2x32xf32> to vector<1x2x32xf32>
    tpu.vector_store %arg14[%320, %c0_108, %c0_109], %323 {strides = array<i32>} : memref<8x2x32xf32, #tpu.memory_space<vmem>>, vector<1x2x32xf32>,
    %324 = arith.index_cast %272 : i32 to index
    %c0_110 = arith.constant 0 : index
    %c0_111 = arith.constant 0 : index
    %325 = vector.load %arg15[%324, %c0_110, %c0_111] : memref<8x2x32xf32, #tpu.memory_space<vmem>>, vector<1x2x32xf32>
    %326 = vector.shape_cast %325 : vector<1x2x32xf32> to vector<2x32xf32>
    %327 = vector.shape_cast %319 : vector<2x32xf32> to vector<1x2x32xf32>
    tpu.vector_store %arg15[%324, %c0_110, %c0_111], %327 {strides = array<i32>} : memref<8x2x32xf32, #tpu.memory_space<vmem>>, vector<1x2x32xf32>,
    %328 = tpu.concatenate %316, %319 in 0 : vector<2x32xf32>, vector<2x32xf32> -> vector<4x32xf32>
    %c5_i32 = arith.constant 5 : i32
    %c7_i32_112 = arith.constant 7 : i32
    %329 = arith.subi %c7_i32_112, %c5_i32 : i32
    %cst_113 = arith.constant dense<0.000000e+00> : vector<4x256xf32>
    %330 = tpu.matmul %328, %39, %cst_113 {dimension_numbers = #tpu.dot_dimension_numbers<[1], [0], [0], [1], [0, 0, 1, 1], [], []>} : vector<4x32xf32>, vector<32x256xf32>, vector<4x256xf32> -> vector<4x256xf32>
    %331 = arith.index_cast %c5_i32 : i32 to index
    %c0_114 = arith.constant 0 : index
    %c0_115 = arith.constant 0 : index
    %332 = vector.load %arg12[%331, %c0_114, %c0_115] : memref<8x2x128xf32, #tpu.memory_space<vmem>>, vector<1x2x128xf32>
    %333 = vector.shape_cast %332 : vector<1x2x128xf32> to vector<2x128xf32>
    %334 = vector.extract_strided_slice %330 {offsets = [0, 0], sizes = [2, 128], strides = [1, 1]} : vector<4x256xf32> to vector<2x128xf32>
    %335 = arith.addf %333, %334 : vector<2x128xf32>
    %336 = arith.index_cast %329 : i32 to index
    %c0_116 = arith.constant 0 : index
    %c0_117 = arith.constant 0 : index
    %337 = vector.load %arg13[%336, %c0_116, %c0_117] : memref<8x2x128xf32, #tpu.memory_space<vmem>>, vector<1x2x128xf32>
    %338 = vector.shape_cast %337 : vector<1x2x128xf32> to vector<2x128xf32>
    %339 = vector.extract_strided_slice %330 {offsets = [2, 128], sizes = [2, 128], strides = [1, 1]} : vector<4x256xf32> to vector<2x128xf32>
    %340 = arith.addf %338, %339 : vector<2x128xf32>
    %341 = vector.extract_strided_slice %335 {offsets = [0, 0], sizes = [2, 96], strides = [1, 1]} : vector<2x128xf32> to vector<2x96xf32>
    %cst_118 = arith.constant 5.000000e-01 : f32
    %342 = vector.broadcast %cst_118 : f32 to vector<2x96xf32>
    %343 = arith.mulf %342, %341 : vector<2x96xf32>
    %344 = math.tanh %343 : vector<2x96xf32>
    %cst_119 = arith.constant 5.000000e-01 : f32
    %345 = vector.broadcast %cst_119 : f32 to vector<2x96xf32>
    %346 = arith.mulf %345, %344 : vector<2x96xf32>
    %cst_120 = arith.constant 5.000000e-01 : f32
    %347 = vector.broadcast %cst_120 : f32 to vector<2x96xf32>
    %348 = arith.addf %346, %347 : vector<2x96xf32>
    %349 = vector.extract_strided_slice %340 {offsets = [0, 0], sizes = [2, 96], strides = [1, 1]} : vector<2x128xf32> to vector<2x96xf32>
    %cst_121 = arith.constant 5.000000e-01 : f32
    %350 = vector.broadcast %cst_121 : f32 to vector<2x96xf32>
    %351 = arith.mulf %350, %349 : vector<2x96xf32>
    %352 = math.tanh %351 : vector<2x96xf32>
    %cst_122 = arith.constant 5.000000e-01 : f32
    %353 = vector.broadcast %cst_122 : f32 to vector<2x96xf32>
    %354 = arith.mulf %353, %352 : vector<2x96xf32>
    %cst_123 = arith.constant 5.000000e-01 : f32
    %355 = vector.broadcast %cst_123 : f32 to vector<2x96xf32>
    %356 = arith.addf %354, %355 : vector<2x96xf32>
    %357 = vector.extract_strided_slice %348 {offsets = [0, 32], sizes = [2, 32], strides = [1, 1]} : vector<2x96xf32> to vector<2x32xf32>
    %358 = arith.mulf %357, %306 : vector<2x32xf32>
    %359 = vector.extract_strided_slice %348 {offsets = [0, 0], sizes = [2, 32], strides = [1, 1]} : vector<2x96xf32> to vector<2x32xf32>
    %360 = vector.extract_strided_slice %335 {offsets = [0, 96], sizes = [2, 32], strides = [1, 1]} : vector<2x128xf32> to vector<2x32xf32>
    %361 = math.tanh %360 : vector<2x32xf32>
    %362 = arith.mulf %359, %361 : vector<2x32xf32>
    %363 = arith.addf %358, %362 : vector<2x32xf32>
    %364 = vector.extract_strided_slice %356 {offsets = [0, 32], sizes = [2, 32], strides = [1, 1]} : vector<2x96xf32> to vector<2x32xf32>
    %365 = arith.mulf %364, %313 : vector<2x32xf32>
    %366 = vector.extract_strided_slice %356 {offsets = [0, 0], sizes = [2, 32], strides = [1, 1]} : vector<2x96xf32> to vector<2x32xf32>
    %367 = vector.extract_strided_slice %340 {offsets = [0, 96], sizes = [2, 32], strides = [1, 1]} : vector<2x128xf32> to vector<2x32xf32>
    %368 = math.tanh %367 : vector<2x32xf32>
    %369 = arith.mulf %366, %368 : vector<2x32xf32>
    %370 = arith.addf %365, %369 : vector<2x32xf32>
    %371 = vector.extract_strided_slice %348 {offsets = [0, 64], sizes = [2, 32], strides = [1, 1]} : vector<2x96xf32> to vector<2x32xf32>
    %372 = math.tanh %363 : vector<2x32xf32>
    %373 = arith.mulf %371, %372 : vector<2x32xf32>
    %374 = vector.extract_strided_slice %356 {offsets = [0, 64], sizes = [2, 32], strides = [1, 1]} : vector<2x96xf32> to vector<2x32xf32>
    %375 = math.tanh %370 : vector<2x32xf32>
    %376 = arith.mulf %374, %375 : vector<2x32xf32>
    %377 = arith.index_cast %c5_i32 : i32 to index
    %c0_124 = arith.constant 0 : index
    %c0_125 = arith.constant 0 : index
    %378 = vector.load %arg14[%377, %c0_124, %c0_125] : memref<8x2x32xf32, #tpu.memory_space<vmem>>, vector<1x2x32xf32>
    %379 = vector.shape_cast %378 : vector<1x2x32xf32> to vector<2x32xf32>
    %380 = vector.shape_cast %373 : vector<2x32xf32> to vector<1x2x32xf32>
    tpu.vector_store %arg14[%377, %c0_124, %c0_125], %380 {strides = array<i32>} : memref<8x2x32xf32, #tpu.memory_space<vmem>>, vector<1x2x32xf32>,
    %381 = arith.index_cast %329 : i32 to index
    %c0_126 = arith.constant 0 : index
    %c0_127 = arith.constant 0 : index
    %382 = vector.load %arg15[%381, %c0_126, %c0_127] : memref<8x2x32xf32, #tpu.memory_space<vmem>>, vector<1x2x32xf32>
    %383 = vector.shape_cast %382 : vector<1x2x32xf32> to vector<2x32xf32>
    %384 = vector.shape_cast %376 : vector<2x32xf32> to vector<1x2x32xf32>
    tpu.vector_store %arg15[%381, %c0_126, %c0_127], %384 {strides = array<i32>} : memref<8x2x32xf32, #tpu.memory_space<vmem>>, vector<1x2x32xf32>,
    %385 = tpu.concatenate %373, %376 in 0 : vector<2x32xf32>, vector<2x32xf32> -> vector<4x32xf32>
    %c6_i32 = arith.constant 6 : i32
    %c7_i32_128 = arith.constant 7 : i32
    %386 = arith.subi %c7_i32_128, %c6_i32 : i32
    %cst_129 = arith.constant dense<0.000000e+00> : vector<4x256xf32>
    %387 = tpu.matmul %385, %39, %cst_129 {dimension_numbers = #tpu.dot_dimension_numbers<[1], [0], [0], [1], [0, 0, 1, 1], [], []>} : vector<4x32xf32>, vector<32x256xf32>, vector<4x256xf32> -> vector<4x256xf32>
    %388 = arith.index_cast %c6_i32 : i32 to index
    %c0_130 = arith.constant 0 : index
    %c0_131 = arith.constant 0 : index
    %389 = vector.load %arg12[%388, %c0_130, %c0_131] : memref<8x2x128xf32, #tpu.memory_space<vmem>>, vector<1x2x128xf32>
    %390 = vector.shape_cast %389 : vector<1x2x128xf32> to vector<2x128xf32>
    %391 = vector.extract_strided_slice %387 {offsets = [0, 0], sizes = [2, 128], strides = [1, 1]} : vector<4x256xf32> to vector<2x128xf32>
    %392 = arith.addf %390, %391 : vector<2x128xf32>
    %393 = arith.index_cast %386 : i32 to index
    %c0_132 = arith.constant 0 : index
    %c0_133 = arith.constant 0 : index
    %394 = vector.load %arg13[%393, %c0_132, %c0_133] : memref<8x2x128xf32, #tpu.memory_space<vmem>>, vector<1x2x128xf32>
    %395 = vector.shape_cast %394 : vector<1x2x128xf32> to vector<2x128xf32>
    %396 = vector.extract_strided_slice %387 {offsets = [2, 128], sizes = [2, 128], strides = [1, 1]} : vector<4x256xf32> to vector<2x128xf32>
    %397 = arith.addf %395, %396 : vector<2x128xf32>
    %398 = vector.extract_strided_slice %392 {offsets = [0, 0], sizes = [2, 96], strides = [1, 1]} : vector<2x128xf32> to vector<2x96xf32>
    %cst_134 = arith.constant 5.000000e-01 : f32
    %399 = vector.broadcast %cst_134 : f32 to vector<2x96xf32>
    %400 = arith.mulf %399, %398 : vector<2x96xf32>
    %401 = math.tanh %400 : vector<2x96xf32>
    %cst_135 = arith.constant 5.000000e-01 : f32
    %402 = vector.broadcast %cst_135 : f32 to vector<2x96xf32>
    %403 = arith.mulf %402, %401 : vector<2x96xf32>
    %cst_136 = arith.constant 5.000000e-01 : f32
    %404 = vector.broadcast %cst_136 : f32 to vector<2x96xf32>
    %405 = arith.addf %403, %404 : vector<2x96xf32>
    %406 = vector.extract_strided_slice %397 {offsets = [0, 0], sizes = [2, 96], strides = [1, 1]} : vector<2x128xf32> to vector<2x96xf32>
    %cst_137 = arith.constant 5.000000e-01 : f32
    %407 = vector.broadcast %cst_137 : f32 to vector<2x96xf32>
    %408 = arith.mulf %407, %406 : vector<2x96xf32>
    %409 = math.tanh %408 : vector<2x96xf32>
    %cst_138 = arith.constant 5.000000e-01 : f32
    %410 = vector.broadcast %cst_138 : f32 to vector<2x96xf32>
    %411 = arith.mulf %410, %409 : vector<2x96xf32>
    %cst_139 = arith.constant 5.000000e-01 : f32
    %412 = vector.broadcast %cst_139 : f32 to vector<2x96xf32>
    %413 = arith.addf %411, %412 : vector<2x96xf32>
    %414 = vector.extract_strided_slice %405 {offsets = [0, 32], sizes = [2, 32], strides = [1, 1]} : vector<2x96xf32> to vector<2x32xf32>
    %415 = arith.mulf %414, %363 : vector<2x32xf32>
    %416 = vector.extract_strided_slice %405 {offsets = [0, 0], sizes = [2, 32], strides = [1, 1]} : vector<2x96xf32> to vector<2x32xf32>
    %417 = vector.extract_strided_slice %392 {offsets = [0, 96], sizes = [2, 32], strides = [1, 1]} : vector<2x128xf32> to vector<2x32xf32>
    %418 = math.tanh %417 : vector<2x32xf32>
    %419 = arith.mulf %416, %418 : vector<2x32xf32>
    %420 = arith.addf %415, %419 : vector<2x32xf32>
    %421 = vector.extract_strided_slice %413 {offsets = [0, 32], sizes = [2, 32], strides = [1, 1]} : vector<2x96xf32> to vector<2x32xf32>
    %422 = arith.mulf %421, %370 : vector<2x32xf32>
    %423 = vector.extract_strided_slice %413 {offsets = [0, 0], sizes = [2, 32], strides = [1, 1]} : vector<2x96xf32> to vector<2x32xf32>
    %424 = vector.extract_strided_slice %397 {offsets = [0, 96], sizes = [2, 32], strides = [1, 1]} : vector<2x128xf32> to vector<2x32xf32>
    %425 = math.tanh %424 : vector<2x32xf32>
    %426 = arith.mulf %423, %425 : vector<2x32xf32>
    %427 = arith.addf %422, %426 : vector<2x32xf32>
    %428 = vector.extract_strided_slice %405 {offsets = [0, 64], sizes = [2, 32], strides = [1, 1]} : vector<2x96xf32> to vector<2x32xf32>
    %429 = math.tanh %420 : vector<2x32xf32>
    %430 = arith.mulf %428, %429 : vector<2x32xf32>
    %431 = vector.extract_strided_slice %413 {offsets = [0, 64], sizes = [2, 32], strides = [1, 1]} : vector<2x96xf32> to vector<2x32xf32>
    %432 = math.tanh %427 : vector<2x32xf32>
    %433 = arith.mulf %431, %432 : vector<2x32xf32>
    %434 = arith.index_cast %c6_i32 : i32 to index
    %c0_140 = arith.constant 0 : index
    %c0_141 = arith.constant 0 : index
    %435 = vector.load %arg14[%434, %c0_140, %c0_141] : memref<8x2x32xf32, #tpu.memory_space<vmem>>, vector<1x2x32xf32>
    %436 = vector.shape_cast %435 : vector<1x2x32xf32> to vector<2x32xf32>
    %437 = vector.shape_cast %430 : vector<2x32xf32> to vector<1x2x32xf32>
    tpu.vector_store %arg14[%434, %c0_140, %c0_141], %437 {strides = array<i32>} : memref<8x2x32xf32, #tpu.memory_space<vmem>>, vector<1x2x32xf32>,
    %438 = arith.index_cast %386 : i32 to index
    %c0_142 = arith.constant 0 : index
    %c0_143 = arith.constant 0 : index
    %439 = vector.load %arg15[%438, %c0_142, %c0_143] : memref<8x2x32xf32, #tpu.memory_space<vmem>>, vector<1x2x32xf32>
    %440 = vector.shape_cast %439 : vector<1x2x32xf32> to vector<2x32xf32>
    %441 = vector.shape_cast %433 : vector<2x32xf32> to vector<1x2x32xf32>
    tpu.vector_store %arg15[%438, %c0_142, %c0_143], %441 {strides = array<i32>} : memref<8x2x32xf32, #tpu.memory_space<vmem>>, vector<1x2x32xf32>,
    %442 = tpu.concatenate %430, %433 in 0 : vector<2x32xf32>, vector<2x32xf32> -> vector<4x32xf32>
    %c7_i32_144 = arith.constant 7 : i32
    %c7_i32_145 = arith.constant 7 : i32
    %443 = arith.subi %c7_i32_145, %c7_i32_144 : i32
    %cst_146 = arith.constant dense<0.000000e+00> : vector<4x256xf32>
    %444 = tpu.matmul %442, %39, %cst_146 {dimension_numbers = #tpu.dot_dimension_numbers<[1], [0], [0], [1], [0, 0, 1, 1], [], []>} : vector<4x32xf32>, vector<32x256xf32>, vector<4x256xf32> -> vector<4x256xf32>
    %445 = arith.index_cast %c7_i32_144 : i32 to index
    %c0_147 = arith.constant 0 : index
    %c0_148 = arith.constant 0 : index
    %446 = vector.load %arg12[%445, %c0_147, %c0_148] : memref<8x2x128xf32, #tpu.memory_space<vmem>>, vector<1x2x128xf32>
    %447 = vector.shape_cast %446 : vector<1x2x128xf32> to vector<2x128xf32>
    %448 = vector.extract_strided_slice %444 {offsets = [0, 0], sizes = [2, 128], strides = [1, 1]} : vector<4x256xf32> to vector<2x128xf32>
    %449 = arith.addf %447, %448 : vector<2x128xf32>
    %450 = arith.index_cast %443 : i32 to index
    %c0_149 = arith.constant 0 : index
    %c0_150 = arith.constant 0 : index
    %451 = vector.load %arg13[%450, %c0_149, %c0_150] : memref<8x2x128xf32, #tpu.memory_space<vmem>>, vector<1x2x128xf32>
    %452 = vector.shape_cast %451 : vector<1x2x128xf32> to vector<2x128xf32>
    %453 = vector.extract_strided_slice %444 {offsets = [2, 128], sizes = [2, 128], strides = [1, 1]} : vector<4x256xf32> to vector<2x128xf32>
    %454 = arith.addf %452, %453 : vector<2x128xf32>
    %455 = vector.extract_strided_slice %449 {offsets = [0, 0], sizes = [2, 96], strides = [1, 1]} : vector<2x128xf32> to vector<2x96xf32>
    %cst_151 = arith.constant 5.000000e-01 : f32
    %456 = vector.broadcast %cst_151 : f32 to vector<2x96xf32>
    %457 = arith.mulf %456, %455 : vector<2x96xf32>
    %458 = math.tanh %457 : vector<2x96xf32>
    %cst_152 = arith.constant 5.000000e-01 : f32
    %459 = vector.broadcast %cst_152 : f32 to vector<2x96xf32>
    %460 = arith.mulf %459, %458 : vector<2x96xf32>
    %cst_153 = arith.constant 5.000000e-01 : f32
    %461 = vector.broadcast %cst_153 : f32 to vector<2x96xf32>
    %462 = arith.addf %460, %461 : vector<2x96xf32>
    %463 = vector.extract_strided_slice %454 {offsets = [0, 0], sizes = [2, 96], strides = [1, 1]} : vector<2x128xf32> to vector<2x96xf32>
    %cst_154 = arith.constant 5.000000e-01 : f32
    %464 = vector.broadcast %cst_154 : f32 to vector<2x96xf32>
    %465 = arith.mulf %464, %463 : vector<2x96xf32>
    %466 = math.tanh %465 : vector<2x96xf32>
    %cst_155 = arith.constant 5.000000e-01 : f32
    %467 = vector.broadcast %cst_155 : f32 to vector<2x96xf32>
    %468 = arith.mulf %467, %466 : vector<2x96xf32>
    %cst_156 = arith.constant 5.000000e-01 : f32
    %469 = vector.broadcast %cst_156 : f32 to vector<2x96xf32>
    %470 = arith.addf %468, %469 : vector<2x96xf32>
    %471 = vector.extract_strided_slice %462 {offsets = [0, 32], sizes = [2, 32], strides = [1, 1]} : vector<2x96xf32> to vector<2x32xf32>
    %472 = arith.mulf %471, %420 : vector<2x32xf32>
    %473 = vector.extract_strided_slice %462 {offsets = [0, 0], sizes = [2, 32], strides = [1, 1]} : vector<2x96xf32> to vector<2x32xf32>
    %474 = vector.extract_strided_slice %449 {offsets = [0, 96], sizes = [2, 32], strides = [1, 1]} : vector<2x128xf32> to vector<2x32xf32>
    %475 = math.tanh %474 : vector<2x32xf32>
    %476 = arith.mulf %473, %475 : vector<2x32xf32>
    %477 = arith.addf %472, %476 : vector<2x32xf32>
    %478 = vector.extract_strided_slice %470 {offsets = [0, 32], sizes = [2, 32], strides = [1, 1]} : vector<2x96xf32> to vector<2x32xf32>
    %479 = arith.mulf %478, %427 : vector<2x32xf32>
    %480 = vector.extract_strided_slice %470 {offsets = [0, 0], sizes = [2, 32], strides = [1, 1]} : vector<2x96xf32> to vector<2x32xf32>
    %481 = vector.extract_strided_slice %454 {offsets = [0, 96], sizes = [2, 32], strides = [1, 1]} : vector<2x128xf32> to vector<2x32xf32>
    %482 = math.tanh %481 : vector<2x32xf32>
    %483 = arith.mulf %480, %482 : vector<2x32xf32>
    %484 = arith.addf %479, %483 : vector<2x32xf32>
    %485 = vector.extract_strided_slice %462 {offsets = [0, 64], sizes = [2, 32], strides = [1, 1]} : vector<2x96xf32> to vector<2x32xf32>
    %486 = math.tanh %477 : vector<2x32xf32>
    %487 = arith.mulf %485, %486 : vector<2x32xf32>
    %488 = vector.extract_strided_slice %470 {offsets = [0, 64], sizes = [2, 32], strides = [1, 1]} : vector<2x96xf32> to vector<2x32xf32>
    %489 = math.tanh %484 : vector<2x32xf32>
    %490 = arith.mulf %488, %489 : vector<2x32xf32>
    %491 = arith.index_cast %c7_i32_144 : i32 to index
    %c0_157 = arith.constant 0 : index
    %c0_158 = arith.constant 0 : index
    %492 = vector.load %arg14[%491, %c0_157, %c0_158] : memref<8x2x32xf32, #tpu.memory_space<vmem>>, vector<1x2x32xf32>
    %493 = vector.shape_cast %492 : vector<1x2x32xf32> to vector<2x32xf32>
    %494 = vector.shape_cast %487 : vector<2x32xf32> to vector<1x2x32xf32>
    tpu.vector_store %arg14[%491, %c0_157, %c0_158], %494 {strides = array<i32>} : memref<8x2x32xf32, #tpu.memory_space<vmem>>, vector<1x2x32xf32>,
    %495 = arith.index_cast %443 : i32 to index
    %c0_159 = arith.constant 0 : index
    %c0_160 = arith.constant 0 : index
    %496 = vector.load %arg15[%495, %c0_159, %c0_160] : memref<8x2x32xf32, #tpu.memory_space<vmem>>, vector<1x2x32xf32>
    %497 = vector.shape_cast %496 : vector<1x2x32xf32> to vector<2x32xf32>
    %498 = vector.shape_cast %490 : vector<2x32xf32> to vector<1x2x32xf32>
    tpu.vector_store %arg15[%495, %c0_159, %c0_160], %498 {strides = array<i32>} : memref<8x2x32xf32, #tpu.memory_space<vmem>>, vector<1x2x32xf32>,
    %499 = tpu.concatenate %487, %490 in 0 : vector<2x32xf32>, vector<2x32xf32> -> vector<4x32xf32>
    %c8_i32 = arith.constant 8 : i32
    %c0_161 = arith.constant 0 : index
    %c0_162 = arith.constant 0 : index
    %500 = vector.load %arg16[%c0_161, %c0_162] : memref<4x32xf32, #tpu.memory_space<vmem>>, vector<4x32xf32>
    tpu.vector_store %arg16[%c0_161, %c0_162], %499 {strides = array<i32>} : memref<4x32xf32, #tpu.memory_space<vmem>>, vector<4x32xf32>,
    %c0_163 = arith.constant 0 : index
    %c0_164 = arith.constant 0 : index
    %501 = vector.load %arg17[%c0_163, %c0_164] : memref<4x32xf32, #tpu.memory_space<vmem>>, vector<2x32xf32>
    tpu.vector_store %arg17[%c0_163, %c0_164], %477 {strides = array<i32>} : memref<4x32xf32, #tpu.memory_space<vmem>>, vector<2x32xf32>,
    %c2 = arith.constant 2 : index
    %c0_165 = arith.constant 0 : index
    %502 = vector.load %arg17[%c2, %c0_165] : memref<4x32xf32, #tpu.memory_space<vmem>>, vector<2x32xf32>
    tpu.vector_store %arg17[%c2, %c0_165], %484 {strides = array<i32>} : memref<4x32xf32, #tpu.memory_space<vmem>>, vector<2x32xf32>,
    %c0_166 = arith.constant 0 : index
    %c0_167 = arith.constant 0 : index
    %c0_168 = arith.constant 0 : index
    %503 = vector.load %arg14[%c0_166, %c0_167, %c0_168] : memref<8x2x32xf32, #tpu.memory_space<vmem>>, vector<8x1x32xf32>
    %504 = vector.shape_cast %503 : vector<8x1x32xf32> to vector<8x32xf32>
    %c0_169 = arith.constant 0 : index
    %c0_170 = arith.constant 0 : index
    %c0_171 = arith.constant 0 : index
    %505 = vector.load %arg8[%c0_169, %c0_170, %c0_171] : memref<2x8x32xf32, #tpu.memory_space<vmem>>, vector<1x8x32xf32>
    %506 = vector.shape_cast %505 : vector<1x8x32xf32> to vector<8x32xf32>
    %507 = vector.shape_cast %504 : vector<8x32xf32> to vector<1x8x32xf32>
    tpu.vector_store %arg8[%c0_169, %c0_170, %c0_171], %507 {strides = array<i32>} : memref<2x8x32xf32, #tpu.memory_space<vmem>>, vector<1x8x32xf32>,
    %c0_172 = arith.constant 0 : index
    %c0_173 = arith.constant 0 : index
    %c0_174 = arith.constant 0 : index
    %508 = vector.load %arg15[%c0_172, %c0_173, %c0_174] : memref<8x2x32xf32, #tpu.memory_space<vmem>>, vector<8x1x32xf32>
    %509 = vector.shape_cast %508 : vector<8x1x32xf32> to vector<8x32xf32>
    %c0_175 = arith.constant 0 : index
    %c0_176 = arith.constant 0 : index
    %c0_177 = arith.constant 0 : index
    %510 = vector.load %arg9[%c0_175, %c0_176, %c0_177] : memref<2x8x32xf32, #tpu.memory_space<vmem>>, vector<1x8x32xf32>
    %511 = vector.shape_cast %510 : vector<1x8x32xf32> to vector<8x32xf32>
    %512 = vector.shape_cast %509 : vector<8x32xf32> to vector<1x8x32xf32>
    tpu.vector_store %arg9[%c0_175, %c0_176, %c0_177], %512 {strides = array<i32>} : memref<2x8x32xf32, #tpu.memory_space<vmem>>, vector<1x8x32xf32>,
    %c0_178 = arith.constant 0 : index
    %c1_179 = arith.constant 1 : index
    %c0_180 = arith.constant 0 : index
    %513 = vector.load %arg14[%c0_178, %c1_179, %c0_180] : memref<8x2x32xf32, #tpu.memory_space<vmem>>, vector<8x1x32xf32>
    %514 = vector.shape_cast %513 : vector<8x1x32xf32> to vector<8x32xf32>
    %c1_181 = arith.constant 1 : index
    %c0_182 = arith.constant 0 : index
    %c0_183 = arith.constant 0 : index
    %515 = vector.load %arg8[%c1_181, %c0_182, %c0_183] : memref<2x8x32xf32, #tpu.memory_space<vmem>>, vector<1x8x32xf32>
    %516 = vector.shape_cast %515 : vector<1x8x32xf32> to vector<8x32xf32>
    %517 = vector.shape_cast %514 : vector<8x32xf32> to vector<1x8x32xf32>
    tpu.vector_store %arg8[%c1_181, %c0_182, %c0_183], %517 {strides = array<i32>} : memref<2x8x32xf32, #tpu.memory_space<vmem>>, vector<1x8x32xf32>,
    %c0_184 = arith.constant 0 : index
    %c1_185 = arith.constant 1 : index
    %c0_186 = arith.constant 0 : index
    %518 = vector.load %arg15[%c0_184, %c1_185, %c0_186] : memref<8x2x32xf32, #tpu.memory_space<vmem>>, vector<8x1x32xf32>
    %519 = vector.shape_cast %518 : vector<8x1x32xf32> to vector<8x32xf32>
    %c1_187 = arith.constant 1 : index
    %c0_188 = arith.constant 0 : index
    %c0_189 = arith.constant 0 : index
    %520 = vector.load %arg9[%c1_187, %c0_188, %c0_189] : memref<2x8x32xf32, #tpu.memory_space<vmem>>, vector<1x8x32xf32>
    %521 = vector.shape_cast %520 : vector<1x8x32xf32> to vector<8x32xf32>
    %522 = vector.shape_cast %519 : vector<8x32xf32> to vector<1x8x32xf32>
    tpu.vector_store %arg9[%c1_187, %c0_188, %c0_189], %522 {strides = array<i32>} : memref<2x8x32xf32, #tpu.memory_space<vmem>>, vector<1x8x32xf32>,
    %c0_i32_190 = arith.constant 0 : i32
    %523 = arith.cmpi eq, %arg0, %c0_i32_190 : i32
    %524 = arith.extui %523 : i1 to i32
    %c0_i32_191 = arith.constant 0 : i32
    %525 = arith.cmpi ne, %524, %c0_i32_191 : i32
    scf.if %525 {
      %526 = vector.extract_strided_slice %499 {offsets = [0, 0], sizes = [2, 32], strides = [1, 1]} : vector<4x32xf32> to vector<2x32xf32>
      %c0_192 = arith.constant 0 : index
      %c0_193 = arith.constant 0 : index
      %c0_194 = arith.constant 0 : index
      %527 = vector.load %arg10[%c0_192, %c0_193, %c0_194] : memref<2x2x32xf32, #tpu.memory_space<vmem>>, vector<1x2x32xf32>
      %528 = vector.shape_cast %527 : vector<1x2x32xf32> to vector<2x32xf32>
      %529 = vector.shape_cast %526 : vector<2x32xf32> to vector<1x2x32xf32>
      tpu.vector_store %arg10[%c0_192, %c0_193, %c0_194], %529 {strides = array<i32>} : memref<2x2x32xf32, #tpu.memory_space<vmem>>, vector<1x2x32xf32>,
      %530 = vector.extract_strided_slice %499 {offsets = [2, 0], sizes = [2, 32], strides = [1, 1]} : vector<4x32xf32> to vector<2x32xf32>
      %c1_195 = arith.constant 1 : index
      %c0_196 = arith.constant 0 : index
      %c0_197 = arith.constant 0 : index
      %531 = vector.load %arg10[%c1_195, %c0_196, %c0_197] : memref<2x2x32xf32, #tpu.memory_space<vmem>>, vector<1x2x32xf32>
      %532 = vector.shape_cast %531 : vector<1x2x32xf32> to vector<2x32xf32>
      %533 = vector.shape_cast %530 : vector<2x32xf32> to vector<1x2x32xf32>
      tpu.vector_store %arg10[%c1_195, %c0_196, %c0_197], %533 {strides = array<i32>} : memref<2x2x32xf32, #tpu.memory_space<vmem>>, vector<1x2x32xf32>,
      %c0_198 = arith.constant 0 : index
      %c0_199 = arith.constant 0 : index
      %c0_200 = arith.constant 0 : index
      %534 = vector.load %arg11[%c0_198, %c0_199, %c0_200] : memref<2x2x32xf32, #tpu.memory_space<vmem>>, vector<1x2x32xf32>
      %535 = vector.shape_cast %534 : vector<1x2x32xf32> to vector<2x32xf32>
      %536 = vector.shape_cast %477 : vector<2x32xf32> to vector<1x2x32xf32>
      tpu.vector_store %arg11[%c0_198, %c0_199, %c0_200], %536 {strides = array<i32>} : memref<2x2x32xf32, #tpu.memory_space<vmem>>, vector<1x2x32xf32>,
      %c1_201 = arith.constant 1 : index
      %c0_202 = arith.constant 0 : index
      %c0_203 = arith.constant 0 : index
      %537 = vector.load %arg11[%c1_201, %c0_202, %c0_203] : memref<2x2x32xf32, #tpu.memory_space<vmem>>, vector<1x2x32xf32>
      %538 = vector.shape_cast %537 : vector<1x2x32xf32> to vector<2x32xf32>
      %539 = vector.shape_cast %484 : vector<2x32xf32> to vector<1x2x32xf32>
      tpu.vector_store %arg11[%c1_201, %c0_202, %c0_203], %539 {strides = array<i32>} : memref<2x2x32xf32, #tpu.memory_space<vmem>>, vector<1x2x32xf32>,
    } else {
    }
    return
  }
  func.func @transform_0(%arg0: i32) -> (i32, i32, i32) {
    %c0_i32 = arith.constant 0 : i32
    %c0_i32_0 = arith.constant 0 : i32
    %c0_i32_1 = arith.constant 0 : i32
    return %c0_i32, %arg0, %c0_i32_0 : i32, i32, i32
  }
  func.func @transform_1(%arg0: i32) -> (i32, i32, i32) {
    %c0_i32 = arith.constant 0 : i32
    %0 = arith.subi %c0_i32, %arg0 : i32
    %c0_i32_0 = arith.constant 0 : i32
    %c0_i32_1 = arith.constant 0 : i32
    %c0_i32_2 = arith.constant 0 : i32
    return %c0_i32_0, %0, %c0_i32_1 : i32, i32, i32
  }
  func.func @transform_2(%arg0: i32) -> (i32, i32) {
    %c0_i32 = arith.constant 0 : i32
    %c0_i32_0 = arith.constant 0 : i32
    %c0_i32_1 = arith.constant 0 : i32
    return %c0_i32, %c0_i32_0 : i32, i32
  }
  func.func @transform_3(%arg0: i32) -> (i32, i32) {
    %c0_i32 = arith.constant 0 : i32
    %c0_i32_0 = arith.constant 0 : i32
    %c0_i32_1 = arith.constant 0 : i32
    return %c0_i32, %c0_i32_0 : i32, i32
  }
  func.func @transform_4(%arg0: i32) -> (i32, i32) {
    %c0_i32 = arith.constant 0 : i32
    %c0_i32_0 = arith.constant 0 : i32
    %c0_i32_1 = arith.constant 0 : i32
    return %c0_i32, %c0_i32_0 : i32, i32
  }
  func.func @transform_5(%arg0: i32) -> (i32, i32) {
    %c0_i32 = arith.constant 0 : i32
    %c0_i32_0 = arith.constant 0 : i32
    %c0_i32_1 = arith.constant 0 : i32
    return %c0_i32, %c0_i32_0 : i32, i32
  }
  func.func @transform_6(%arg0: i32) -> (i32, i32) {
    %c0_i32 = arith.constant 0 : i32
    %c0_i32_0 = arith.constant 0 : i32
    %c0_i32_1 = arith.constant 0 : i32
    return %c0_i32, %c0_i32_0 : i32, i32
  }
  func.func @transform_7(%arg0: i32) -> (i32, i32, i32) {
    %c0_i32 = arith.constant 0 : i32
    %c0_i32_0 = arith.constant 0 : i32
    %c0_i32_1 = arith.constant 0 : i32
    return %c0_i32, %arg0, %c0_i32_0 : i32, i32, i32
  }
  func.func @transform_8(%arg0: i32) -> (i32, i32, i32) {
    %c0_i32 = arith.constant 0 : i32
    %0 = arith.subi %c0_i32, %arg0 : i32
    %c0_i32_0 = arith.constant 0 : i32
    %c0_i32_1 = arith.constant 0 : i32
    %c0_i32_2 = arith.constant 0 : i32
    return %c0_i32_0, %0, %c0_i32_1 : i32, i32, i32
  }
  func.func @transform_9(%arg0: i32) -> (i32, i32, i32) {
    %c0_i32 = arith.constant 0 : i32
    %c0_i32_0 = arith.constant 0 : i32
    %c0_i32_1 = arith.constant 0 : i32
    %c0_i32_2 = arith.constant 0 : i32
    return %c0_i32, %c0_i32_0, %c0_i32_1 : i32, i32, i32
  }
  func.func @transform_10(%arg0: i32) -> (i32, i32, i32) {
    %c0_i32 = arith.constant 0 : i32
    %c0_i32_0 = arith.constant 0 : i32
    %c0_i32_1 = arith.constant 0 : i32
    %c0_i32_2 = arith.constant 0 : i32
    return %c0_i32, %c0_i32_0, %c0_i32_1 : i32, i32, i32
  }
}

</mosaic_0001>

<llo_original>
// kernel: tpu_custom_call.1
$region0: #{tpu_custom_call.1}
  #allocation0 [shape = 'u32[]', space=smem, size = 0x4, offset = 0x4, fixed_abs, tag = 'smem constant byte address 0x4 - core index']
  #allocation1 [shape = 'u32[144,128]{1,0:T(1,128)}', space=vmem, size = 0x12000, scoped, tag = 'internal scratch']
  #allocation2 [shape = 'f32[8,2,128]{2,1,0:T(2,128)}', space=vmem, size = 0x2000, scoped, tag = 'scratch operand']
  #allocation3 [shape = 'f32[8,2,128]{2,1,0:T(2,128)}', space=vmem, size = 0x2000, scoped, tag = 'scratch operand']
  #allocation4 [shape = 'f32[8,2,32]{2,1,0:T(2,128)}', space=vmem, size = 0x2000, scoped, tag = 'scratch operand']
  #allocation5 [shape = 'f32[8,2,32]{2,1,0:T(2,128)}', space=vmem, size = 0x2000, scoped, tag = 'scratch operand']
  #allocation6 [shape = 'f32[4,32]{1,0:T(4,128)}', space=vmem, size = 0x800, scoped, tag = 'scratch operand']
  #allocation7 [shape = 'f32[4,32]{1,0:T(4,128)}', space=vmem, size = 0x800, scoped, tag = 'scratch operand']
  %s0 = inlined_call_operand.hbm [shape: f32[2,8,32], index: 0, kind: input, shape index: {}]
  %s1 = inlined_call_operand.hbm [shape: f32[2,8,32], index: 1, kind: input, shape index: {}]
  %s2 = inlined_call_operand.hbm [shape: f32[32,128], index: 2, kind: input, shape index: {}]
  %s3 = inlined_call_operand.hbm [shape: f32[32,128], index: 3, kind: input, shape index: {}]
  %s4 = inlined_call_operand.hbm [shape: f32[32,256], index: 4, kind: input, shape index: {}]
  %s5 = inlined_call_operand.vmem [shape: f32[1,128], index: 5, kind: input, shape index: {}]
  %s6 = inlined_call_operand.vmem [shape: f32[1,128], index: 6, kind: input, shape index: {}]
  %s7 = inlined_call_operand.hbm [shape: f32[2,8,32], index: 7, kind: output, shape index: {0}]
  %s8 = inlined_call_operand.hbm [shape: f32[2,8,32], index: 8, kind: output, shape index: {1}]
  %s9 = inlined_call_operand.hbm [shape: f32[2,2,32], index: 9, kind: output, shape index: {2}]
  %s10 = inlined_call_operand.hbm [shape: f32[2,2,32], index: 10, kind: output, shape index: {3}]
  %11 = xla_tuple %s7, %s8, %s9, %s10
  %s12 = sld [smem:[#allocation0]]
  $region90: #{tpu_custom_call.1} parent=0
    _
  %s14 = ssub.s32 1, %s12
  %s15 = scalar_select 0, %s14, %s12
  $region1: #{tpu_custom_call.1} parent=0
    #allocation8 [shape = 'u8[8192]{0}', space=vmem, size = 0x2000, scoped, tag = 'input window, operand 0, single buffered']
    #allocation9 [shape = 's32[1]{0}', space=sflag, size = 0x4, scoped, tag = 'scoped memory for tpu_custom_call.1']
    #allocation10 [shape = 's32[1]{0}', space=sflag, size = 0x4, scoped, tag = 'scoped memory for tpu_custom_call.1']
    #allocation11 [shape = 'u8[8192]{0}', space=vmem, size = 0x2000, scoped, tag = 'input window, operand 1, single buffered']
    #allocation12 [shape = 's32[1]{0}', space=sflag, size = 0x4, scoped, tag = 'scoped memory for tpu_custom_call.1']
    #allocation13 [shape = 'u8[16384]{0}', space=vmem, size = 0x4000, scoped, tag = 'input window, operand 2, single buffered']
    #allocation14 [shape = 'u8[16384]{0}', space=vmem, size = 0x4000, scoped, tag = 'input window, operand 3, single buffered']
    #allocation15 [shape = 's32[1]{0}', space=sflag, size = 0x4, scoped, tag = 'scoped memory for tpu_custom_call.1']
    #allocation16 [shape = 'u8[32768]{0}', space=vmem, size = 0x8000, scoped, tag = 'input window, operand 4, single buffered']
    #allocation17 [shape = 'u8[8192]{0}', space=vmem, size = 0x2000, scoped, tag = 'output window, operand 0, single buffered']
    #allocation18 [shape = 'u8[8192]{0}', space=vmem, size = 0x2000, scoped, tag = 'output window, operand 1, single buffered']
    #allocation19 [shape = 's32[1]{0}', space=sflag, size = 0x4, scoped, tag = 'scoped memory for tpu_custom_call.1']
    #allocation20 [shape = 'u8[2048]{0}', space=vmem, size = 0x800, scoped, tag = 'output window, operand 2, single buffered']
    #allocation21 [shape = 'u8[2048]{0}', space=vmem, size = 0x800, scoped, tag = 'output window, operand 3, single buffered']
    #allocation22 [shape = 's32[1]{0}', space=sflag, size = 0x4, scoped, tag = 'scoped memory for tpu_custom_call.1']
    %16 = vsyncpa [#allocation9], 0
    %17 = vsyncpa [#allocation12], 0
    %18 = vsyncpa [#allocation15], 0
    %19 = vsyncpa [#allocation10], 0
    %20 = vsyncpa [#allocation19], 0
    %21 = vsyncpa [#allocation22], 0
    // Predicated region
    $region2: #{tpu_custom_call.1} parent=1 // pred_check
      _
    $region3: #{tpu_custom_call.1} parent=1 // pred_check_branch
      %23 = sbr.rel (0) target = $region5
    $region4: #{tpu_custom_call.1} parent=1 // pred_region
      %s25 = ssub.s32 256, 256
      %26 = vsyncadd [#allocation9], %s25
      %s27 = sshll.u32 [#allocation8], 4
      %s28 = int_to_ptr.vmem [resolvable:$true] %s27
      %33 = dma.hbm_to_vmem [thread:$0]  %s0, 256, %s28, [#allocation9], 128, 128, 8
    $region5: #{tpu_custom_call.1} parent=1 // pred_fallthru
      _
    // Predicated region
    $region6: #{tpu_custom_call.1} parent=1 // pred_check
      _
    $region7: #{tpu_custom_call.1} parent=1 // pred_check_branch
      %35 = sbr.rel (0) target = $region9
    $region8: #{tpu_custom_call.1} parent=1 // pred_region
      %s36 = ssub.s32 0, 0
      %s38 = ssub.s32 256, 256
      %39 = vsyncadd [#allocation12], %s38
      %s40 = smul.addr %s36, 128
      %s41 = scalar_lea.hbm %s1, %s40
      %s42 = sshll.u32 [#allocation11], 4
      %s43 = int_to_ptr.vmem [resolvable:$true] %s42
      %48 = dma.hbm_to_vmem [thread:$0]  %s41, 256, %s43, [#allocation12], 128, 128, 8
    $region9: #{tpu_custom_call.1} parent=1 // pred_fallthru
      _
    // Predicated region
    $region10: #{tpu_custom_call.1} parent=1 // pred_check
      _
    $region11: #{tpu_custom_call.1} parent=1 // pred_check_branch
      %50 = sbr.rel (0) target = $region13
    $region12: #{tpu_custom_call.1} parent=1 // pred_region
      %s52 = ssub.s32 512, 512
      %53 = vsyncadd [#allocation12], %s52
      %s54 = sshll.u32 [#allocation13], 4
      %s55 = int_to_ptr.vmem [resolvable:$true] %s54
      %60 = dma.hbm_to_vmem [thread:$0]  %s2, 512, %s55, [#allocation12], 128, 128, 8
    $region13: #{tpu_custom_call.1} parent=1 // pred_fallthru
      _
    // Predicated region
    $region14: #{tpu_custom_call.1} parent=1 // pred_check
      _
    $region15: #{tpu_custom_call.1} parent=1 // pred_check_branch
      %62 = sbr.rel (0) target = $region17
    $region16: #{tpu_custom_call.1} parent=1 // pred_region
      %s64 = ssub.s32 512, 512
      %65 = vsyncadd [#allocation15], %s64
      %s66 = sshll.u32 [#allocation14], 4
      %s67 = int_to_ptr.vmem [resolvable:$true] %s66
      %72 = dma.hbm_to_vmem [thread:$0]  %s3, 512, %s67, [#allocation15], 128, 128, 8
    $region17: #{tpu_custom_call.1} parent=1 // pred_fallthru
      _
    // Predicated region
    $region18: #{tpu_custom_call.1} parent=1 // pred_check
      _
    $region19: #{tpu_custom_call.1} parent=1 // pred_check_branch
      %74 = sbr.rel (0) target = $region21
    $region20: #{tpu_custom_call.1} parent=1 // pred_region
      %s76 = ssub.s32 1024, 1024
      %77 = vsyncadd [#allocation15], %s76
      %s78 = sshll.u32 [#allocation16], 4
      %s79 = int_to_ptr.vmem [resolvable:$true] %s78
      %84 = dma.hbm_to_vmem [thread:$0]  %s4, 1024, %s79, [#allocation15], 256, 256, 16
    $region21: #{tpu_custom_call.1} parent=1 // pred_fallthru
      _
    // Predicated region
    $region22: #{tpu_custom_call.1} parent=1 // pred_check
      _
    $region23: #{tpu_custom_call.1} parent=1 // pred_check_branch
      %86 = sbr.rel (0) target = $region25
    $region24: #{tpu_custom_call.1} parent=1 // pred_region
      _
    $region25: #{tpu_custom_call.1} parent=1 // pred_fallthru
      _
    // Predicated region
    $region26: #{tpu_custom_call.1} parent=1 // pred_check
      _
    $region27: #{tpu_custom_call.1} parent=1 // pred_check_branch
      %88 = sbr.rel (0) target = $region29
    $region28: #{tpu_custom_call.1} parent=1 // pred_region
      _
    $region29: #{tpu_custom_call.1} parent=1 // pred_fallthru
      _
    // Predicated region
    $region30: #{tpu_custom_call.1} parent=1 // pred_check
      _
    $region31: #{tpu_custom_call.1} parent=1 // pred_check_branch
      %90 = sbr.rel (0) target = $region33
    $region32: #{tpu_custom_call.1} parent=1 // pred_region
      %91 = dma.done [#allocation9], 256
    $region33: #{tpu_custom_call.1} parent=1 // pred_fallthru
      _
    // Predicated region
    $region34: #{tpu_custom_call.1} parent=1 // pred_check
      _
    $region35: #{tpu_custom_call.1} parent=1 // pred_check_branch
      %93 = sbr.rel (0) target = $region37
    $region36: #{tpu_custom_call.1} parent=1 // pred_region
      %94 = dma.done [#allocation12], 256
    $region37: #{tpu_custom_call.1} parent=1 // pred_fallthru
      _
    // Predicated region
    $region38: #{tpu_custom_call.1} parent=1 // pred_check
      _
    $region39: #{tpu_custom_call.1} parent=1 // pred_check_branch
      %96 = sbr.rel (0) target = $region41
    $region40: #{tpu_custom_call.1} parent=1 // pred_region
      %97 = dma.done [#allocation12], 512
    $region41: #{tpu_custom_call.1} parent=1 // pred_fallthru
      _
    // Predicated region
    $region42: #{tpu_custom_call.1} parent=1 // pred_check
      _
    $region43: #{tpu_custom_call.1} parent=1 // pred_check_branch
      %99 = sbr.rel (0) target = $region45
    $region44: #{tpu_custom_call.1} parent=1 // pred_region
      %100 = dma.done [#allocation15], 512
    $region45: #{tpu_custom_call.1} parent=1 // pred_fallthru
      _
    // Predicated region
    $region46: #{tpu_custom_call.1} parent=1 // pred_check
      _
    $region47: #{tpu_custom_call.1} parent=1 // pred_check_branch
      %102 = sbr.rel (0) target = $region49
    $region48: #{tpu_custom_call.1} parent=1 // pred_region
      %103 = dma.done [#allocation15], 1024
    $region49: #{tpu_custom_call.1} parent=1 // pred_fallthru
      _
    %s104 = ssub.s32 0, 0
    %s105 = ssub.s32 0, 0
    %p106 = scmp.eq.s32.totalorder 0, 0
    // Predicated region
    $region50: #{tpu_custom_call.1} parent=1 // pred_check
      %p107 = pneg %p106
    $region51: #{tpu_custom_call.1} parent=1 // pred_check_branch
      %109 = sbr.rel (%p107) target = $region53
    $region52: #{tpu_custom_call.1} parent=1 // pred_region
      %vm110 = vcmask 257024
      %111 = vst.msk [vmem:[#allocation6] sm:$0xf] %vm110, 0.0
      %112 = vst.msk [vmem:[#allocation7] sm:$0xf] %vm110, 0.0
    $region53: #{tpu_custom_call.1} parent=1 // pred_fallthru
      _
    %v113 = vld [vmem:[#allocation8] sm:$0xff]
    %v114 = vld [vmem:[#allocation8 + $0x8] sm:$0xff]
    %v115 = vld [vmem:[#allocation11] sm:$0xff]
    %v116 = vld [vmem:[#allocation11 + $0x8] sm:$0xff]
    %v117 = vld [vmem:[#allocation13] sm:$0xff]
    %v118 = vld [vmem:[#allocation13 + $0x8] sm:$0xff]
    %v119 = vld [vmem:[#allocation13 + $0x10] sm:$0xff]
    %v120 = vld [vmem:[#allocation13 + $0x18] sm:$0xff]
    %v121 = vld [vmem:[%s5] sm:$0x1]
    %v123 = vlaneseq
    %v124 = vshrl.u32 %v123, 7
    %v125 = vsub.s32 0, %v124
    %v126 = vrot.slane %v121, %v125
    %vm128 = vcmask 261120
    %v130 = vsel %vm128, %v113, 0
    %v133 = vsel %vm128, %v114, 0
    %135 = vmatprep.subr.mxu0 0.0
    %136 = vmatpush1.msra.mxu0 %v117
    %137 = vmatprep.subr.mxu0 0.0
    %138 = vmatpush1.msra.mxu0 %v118
    %139 = vmatprep.subr.mxu0 0.0
    %140 = vmatpush1.msra.mxu0 %v119
    %141 = vmatprep.subr.mxu0 0.0
    %142 = vmatpush1.msra.mxu0 %v120
    %143 = vmatprep.subr.mxu0 0.0
    %144 = vmatpush1.msra.mxu0 0.0
    %145 = vmatprep.subr.mxu0 0.0
    %146 = vmatpush1.msra.mxu0 0.0
    %147 = vmatprep.subr.mxu0 0.0
    %148 = vmatpush1.msra.mxu0 0.0
    %149 = vmatprep.subr.mxu0 0.0
    %150 = vmatpush1.msra.mxu0 0.0
    %151 = vmatprep.subr.mxu0 0.0
    %152 = vmatpush1.msra.mxu0 0.0
    %153 = vmatprep.subr.mxu0 0.0
    %154 = vmatpush1.msra.mxu0 0.0
    %155 = vmatprep.subr.mxu0 0.0
    %156 = vmatpush1.msra.mxu0 0.0
    %157 = vmatprep.subr.mxu0 0.0
    %158 = vmatpush1.msra.mxu0 0.0
    %159 = vmatprep.subr.mxu0 0.0
    %160 = vmatpush1.msra.mxu0 0.0
    %161 = vmatprep.subr.mxu0 0.0
    %162 = vmatpush1.msra.mxu0 0.0
    %163 = vmatprep.subr.mxu0 0.0
    %164 = vmatpush1.msra.mxu0 0.0
    %165 = vmatprep.subr.mxu0 0.0
    %166 = vmatpush1.msra.mxu0 0.0
    %167 = vmatprep.subr.mxu0 0.0
    %168 = vmatpush1.msra.mxu0 0.0
    %169 = vmatprep.subr.mxu0 0.0
    %170 = vmatpush1.msra.mxu0 0.0
    %171 = vmatprep.subr.mxu0 0.0
    %172 = vmatpush1.msra.mxu0 0.0
    %173 = vmatprep.subr.mxu0 0.0
    %174 = vmatpush1.msra.mxu0 0.0
    %175 = vmatprep.subr.mxu0 0.0
    %176 = vmatpush1.msra.mxu0 0.0
    %177 = vmatprep.subr.mxu0 0.0
    %178 = vmatpush1.msra.mxu0 0.0
    %179 = vmatprep.subr.mxu0 0.0
    %180 = vmatpush1.msra.mxu0 0.0
    %181 = vmatprep.subr.mxu0 0.0
    %182 = vmatpush1.msra.mxu0 0.0
    %183 = vmatprep.subr.mxu0 0.0
    %184 = vmatpush1.msra.mxu0 0.0
    %185 = vmatprep.subr.mxu0 0.0
    %186 = vmatpush1.msra.mxu0 0.0
    %187 = vmatprep.subr.mxu0 0.0
    %188 = vmatpush1.msra.mxu0 0.0
    %189 = vmatprep.subr.mxu0 0.0
    %190 = vmatpush1.msra.mxu0 0.0
    %191 = vmatprep.subr.mxu0 0.0
    %192 = vmatpush1.msra.mxu0 0.0
    %193 = vmatprep.subr.mxu0 0.0
    %194 = vmatpush1.msra.mxu0 0.0
    %195 = vmatprep.subr.mxu0 0.0
    %196 = vmatpush1.msra.mxu0 0.0
    %197 = vmatprep.subr.mxu0 0.0
    %198 = vmatpush1.msra.mxu0 0.0
    %199 = vmatprep.mubr.f32.mxu0 0.0
    %200 = vmatmul.mubr.f32.gmra.mrb[0].mxu0 %v130
    %v201 = vpop.f32.mrb[0].mxu0
    %v202 = vadd.f32 %v126, %v201
    %v203 = vpop.f32.mrb[0].mxu0
    %204 = vmatprep.mubr.f32.mxu0 0.0
    %205 = vmatmul.mubr.f32.gmra.mrb[0].mxu0 %v133
    %v206 = vpop.f32.mrb[0].mxu0
    %v207 = vadd.f32 %v126, %v206
    %v208 = vpop.f32.mrb[0].mxu0
    %209 = vdwg.mxu0
    %v210 = vld [vmem:[#allocation14] sm:$0xff]
    %v211 = vld [vmem:[#allocation14 + $0x8] sm:$0xff]
    %v212 = vld [vmem:[#allocation14 + $0x10] sm:$0xff]
    %v213 = vld [vmem:[#allocation14 + $0x18] sm:$0xff]
    %v214 = vld [vmem:[%s6] sm:$0x1]
    %v216 = vlaneseq
    %v217 = vshrl.u32 %v216, 7
    %v218 = vsub.s32 0, %v217
    %v219 = vrot.slane %v214, %v218
    %v222 = vsel %vm128, %v115, 0
    %v225 = vsel %vm128, %v116, 0
    %227 = vmatprep.subr.mxu0 0.0
    %228 = vmatpush1.msra.mxu0 %v210
    %229 = vmatprep.subr.mxu0 0.0
    %230 = vmatpush1.msra.mxu0 %v211
    %231 = vmatprep.subr.mxu0 0.0
    %232 = vmatpush1.msra.mxu0 %v212
    %233 = vmatprep.subr.mxu0 0.0
    %234 = vmatpush1.msra.mxu0 %v213
    %235 = vmatprep.subr.mxu0 0.0
    %236 = vmatpush1.msra.mxu0 0.0
    %237 = vmatprep.subr.mxu0 0.0
    %238 = vmatpush1.msra.mxu0 0.0
    %239 = vmatprep.subr.mxu0 0.0
    %240 = vmatpush1.msra.mxu0 0.0
    %241 = vmatprep.subr.mxu0 0.0
    %242 = vmatpush1.msra.mxu0 0.0
    %243 = vmatprep.subr.mxu0 0.0
    %244 = vmatpush1.msra.mxu0 0.0
    %245 = vmatprep.subr.mxu0 0.0
    %246 = vmatpush1.msra.mxu0 0.0
    %247 = vmatprep.subr.mxu0 0.0
    %248 = vmatpush1.msra.mxu0 0.0
    %249 = vmatprep.subr.mxu0 0.0
    %250 = vmatpush1.msra.mxu0 0.0
    %251 = vmatprep.subr.mxu0 0.0
    %252 = vmatpush1.msra.mxu0 0.0
    %253 = vmatprep.subr.mxu0 0.0
    %254 = vmatpush1.msra.mxu0 0.0
    %255 = vmatprep.subr.mxu0 0.0
    %256 = vmatpush1.msra.mxu0 0.0
    %257 = vmatprep.subr.mxu0 0.0
    %258 = vmatpush1.msra.mxu0 0.0
    %259 = vmatprep.subr.mxu0 0.0
    %260 = vmatpush1.msra.mxu0 0.0
    %261 = vmatprep.subr.mxu0 0.0
    %262 = vmatpush1.msra.mxu0 0.0
    %263 = vmatprep.subr.mxu0 0.0
    %264 = vmatpush1.msra.mxu0 0.0
    %265 = vmatprep.subr.mxu0 0.0
    %266 = vmatpush1.msra.mxu0 0.0
    %267 = vmatprep.subr.mxu0 0.0
    %268 = vmatpush1.msra.mxu0 0.0
    %269 = vmatprep.subr.mxu0 0.0
    %270 = vmatpush1.msra.mxu0 0.0
    %271 = vmatprep.subr.mxu0 0.0
    %272 = vmatpush1.msra.mxu0 0.0
    %273 = vmatprep.subr.mxu0 0.0
    %274 = vmatpush1.msra.mxu0 0.0
    %275 = vmatprep.subr.mxu0 0.0
    %276 = vmatpush1.msra.mxu0 0.0
    %277 = vmatprep.subr.mxu0 0.0
    %278 = vmatpush1.msra.mxu0 0.0
    %279 = vmatprep.subr.mxu0 0.0
    %280 = vmatpush1.msra.mxu0 0.0
    %281 = vmatprep.subr.mxu0 0.0
    %282 = vmatpush1.msra.mxu0 0.0
    %283 = vmatprep.subr.mxu0 0.0
    %284 = vmatpush1.msra.mxu0 0.0
    %285 = vmatprep.subr.mxu0 0.0
    %286 = vmatpush1.msra.mxu0 0.0
    %287 = vmatprep.subr.mxu0 0.0
    %288 = vmatpush1.msra.mxu0 0.0
    %289 = vmatprep.subr.mxu0 0.0
    %290 = vmatpush1.msra.mxu0 0.0
    %291 = vmatprep.mubr.f32.mxu0 0.0
    %292 = vmatmul.mubr.f32.gmra.mrb[0].mxu0 %v222
    %v293 = vpop.f32.mrb[0].mxu0
    %v294 = vadd.f32 %v219, %v293
    %v295 = vpop.f32.mrb[0].mxu0
    %296 = vmatprep.mubr.f32.mxu0 0.0
    %297 = vmatmul.mubr.f32.gmra.mrb[0].mxu0 %v225
    %v298 = vpop.f32.mrb[0].mxu0
    %v299 = vadd.f32 %v219, %v298
    %v300 = vpop.f32.mrb[0].mxu0
    %301 = vdwg.mxu0
    %v303 = vcombine.high %v202, %v202
    %v305 = vunpack.c.l.s4 1966171168
    %v306 = vunpack.c.0.s8 %v305
    %v307 = vlaneseq
    %v308 = vshrl.u32 %v307, 7
    %v309 = vsub.s32 %v306, %v308
    %v310 = vrot.slane %v202, %v309
    %v312 = vunpack.c.l.s4 1966171168
    %v313 = vunpack.c.0.s8 %v312
    %v314 = vlaneseq
    %v315 = vshrl.u32 %v314, 7
    %v316 = vsub.s32 %v313, %v315
    %v317 = vrot.slane %v303, %v316
    %v318 = vcombine.high %v310, %v310
    %v319 = vcombine.high %v317, %v317
    %v321 = vunpack.c.l.s4 1966171168
    %v322 = vunpack.c.0.s8 %v321
    %v323 = vlaneseq
    %v324 = vshrl.u32 %v323, 7
    %v325 = vsub.s32 %v322, %v324
    %v326 = vrot.slane %v310, %v325
    %v328 = vunpack.c.l.s4 1966171168
    %v329 = vunpack.c.0.s8 %v328
    %v330 = vlaneseq
    %v331 = vshrl.u32 %v330, 7
    %v332 = vsub.s32 %v329, %v331
    %v333 = vrot.slane %v317, %v332
    %v335 = vunpack.c.l.s4 1966171168
    %v336 = vunpack.c.0.s8 %v335
    %v337 = vlaneseq
    %v338 = vshrl.u32 %v337, 7
    %v339 = vsub.s32 %v336, %v338
    %v340 = vrot.slane %v318, %v339
    %v342 = vunpack.c.l.s4 1966171168
    %v343 = vunpack.c.0.s8 %v342
    %v344 = vlaneseq
    %v345 = vshrl.u32 %v344, 7
    %v346 = vsub.s32 %v343, %v345
    %v347 = vrot.slane %v319, %v346
    %v348 = vcombine.high %v326, %v326
    %v349 = vcombine.high %v333, %v333
    %v350 = vcombine.high %v340, %v340
    %v351 = vcombine.high %v347, %v347
    %360 = vst [vmem:[#allocation2] sm:$0x1] %v326
    %361 = vst [vmem:[#allocation2 + $0x2] sm:$0x1] %v340
    %362 = vst [vmem:[#allocation2 + $0x4] sm:$0x1] %v348
    %363 = vst [vmem:[#allocation2 + $0x6] sm:$0x1] %v350
    %364 = vst [vmem:[#allocation2 + $0x8] sm:$0x1] %v333
    %365 = vst [vmem:[#allocation2 + $0xa] sm:$0x1] %v347
    %366 = vst [vmem:[#allocation2 + $0xc] sm:$0x1] %v349
    %367 = vst [vmem:[#allocation2 + $0xe] sm:$0x1] %v351
    %v369 = vcombine.high %v294, %v294
    %v371 = vunpack.c.l.s4 1966171168
    %v372 = vunpack.c.0.s8 %v371
    %v373 = vlaneseq
    %v374 = vshrl.u32 %v373, 7
    %v375 = vsub.s32 %v372, %v374
    %v376 = vrot.slane %v294, %v375
    %v378 = vunpack.c.l.s4 1966171168
    %v379 = vunpack.c.0.s8 %v378
    %v380 = vlaneseq
    %v381 = vshrl.u32 %v380, 7
    %v382 = vsub.s32 %v379, %v381
    %v383 = vrot.slane %v369, %v382
    %v384 = vcombine.high %v376, %v376
    %v385 = vcombine.high %v383, %v383
    %v387 = vunpack.c.l.s4 1966171168
    %v388 = vunpack.c.0.s8 %v387
    %v389 = vlaneseq
    %v390 = vshrl.u32 %v389, 7
    %v391 = vsub.s32 %v388, %v390
    %v392 = vrot.slane %v376, %v391
    %v394 = vunpack.c.l.s4 1966171168
    %v395 = vunpack.c.0.s8 %v394
    %v396 = vlaneseq
    %v397 = vshrl.u32 %v396, 7
    %v398 = vsub.s32 %v395, %v397
    %v399 = vrot.slane %v383, %v398
    %v401 = vunpack.c.l.s4 1966171168
    %v402 = vunpack.c.0.s8 %v401
    %v403 = vlaneseq
    %v404 = vshrl.u32 %v403, 7
    %v405 = vsub.s32 %v402, %v404
    %v406 = vrot.slane %v384, %v405
    %v408 = vunpack.c.l.s4 1966171168
    %v409 = vunpack.c.0.s8 %v408
    %v410 = vlaneseq
    %v411 = vshrl.u32 %v410, 7
    %v412 = vsub.s32 %v409, %v411
    %v413 = vrot.slane %v385, %v412
    %v414 = vcombine.high %v392, %v392
    %v415 = vcombine.high %v399, %v399
    %v416 = vcombine.high %v406, %v406
    %v417 = vcombine.high %v413, %v413
    %426 = vst [vmem:[#allocation3] sm:$0x1] %v392
    %427 = vst [vmem:[#allocation3 + $0x2] sm:$0x1] %v406
    %428 = vst [vmem:[#allocation3 + $0x4] sm:$0x1] %v414
    %429 = vst [vmem:[#allocation3 + $0x6] sm:$0x1] %v416
    %430 = vst [vmem:[#allocation3 + $0x8] sm:$0x1] %v399
    %431 = vst [vmem:[#allocation3 + $0xa] sm:$0x1] %v413
    %432 = vst [vmem:[#allocation3 + $0xc] sm:$0x1] %v415
    %433 = vst [vmem:[#allocation3 + $0xe] sm:$0x1] %v417
    %v435 = vcombine.high %v207, %v207
    %v437 = vunpack.c.l.s4 1966171168
    %v438 = vunpack.c.0.s8 %v437
    %v439 = vlaneseq
    %v440 = vshrl.u32 %v439, 7
    %v441 = vsub.s32 %v438, %v440
    %v442 = vrot.slane %v207, %v441
    %v444 = vunpack.c.l.s4 1966171168
    %v445 = vunpack.c.0.s8 %v444
    %v446 = vlaneseq
    %v447 = vshrl.u32 %v446, 7
    %v448 = vsub.s32 %v445, %v447
    %v449 = vrot.slane %v435, %v448
    %v450 = vcombine.high %v442, %v442
    %v451 = vcombine.high %v449, %v449
    %v453 = vunpack.c.l.s4 1966171168
    %v454 = vunpack.c.0.s8 %v453
    %v455 = vlaneseq
    %v456 = vshrl.u32 %v455, 7
    %v457 = vsub.s32 %v454, %v456
    %v458 = vrot.slane %v442, %v457
    %v460 = vunpack.c.l.s4 1966171168
    %v461 = vunpack.c.0.s8 %v460
    %v462 = vlaneseq
    %v463 = vshrl.u32 %v462, 7
    %v464 = vsub.s32 %v461, %v463
    %v465 = vrot.slane %v449, %v464
    %v467 = vunpack.c.l.s4 1966171168
    %v468 = vunpack.c.0.s8 %v467
    %v469 = vlaneseq
    %v470 = vshrl.u32 %v469, 7
    %v471 = vsub.s32 %v468, %v470
    %v472 = vrot.slane %v450, %v471
    %v474 = vunpack.c.l.s4 1966171168
    %v475 = vunpack.c.0.s8 %v474
    %v476 = vlaneseq
    %v477 = vshrl.u32 %v476, 7
    %v478 = vsub.s32 %v475, %v477
    %v479 = vrot.slane %v451, %v478
    %v480 = vcombine.high %v458, %v458
    %v481 = vcombine.high %v465, %v465
    %v482 = vcombine.high %v472, %v472
    %v483 = vcombine.high %v479, %v479
    %492 = vst [vmem:[#allocation2 + $0x1] sm:$0x1] %v458
    %493 = vst [vmem:[#allocation2 + $0x3] sm:$0x1] %v472
    %494 = vst [vmem:[#allocation2 + $0x5] sm:$0x1] %v480
    %495 = vst [vmem:[#allocation2 + $0x7] sm:$0x1] %v482
    %496 = vst [vmem:[#allocation2 + $0x9] sm:$0x1] %v465
    %497 = vst [vmem:[#allocation2 + $0xb] sm:$0x1] %v479
    %498 = vst [vmem:[#allocation2 + $0xd] sm:$0x1] %v481
    %499 = vst [vmem:[#allocation2 + $0xf] sm:$0x1] %v483
    %v501 = vcombine.high %v299, %v299
    %v503 = vunpack.c.l.s4 1966171168
    %v504 = vunpack.c.0.s8 %v503
    %v505 = vlaneseq
    %v506 = vshrl.u32 %v505, 7
    %v507 = vsub.s32 %v504, %v506
    %v508 = vrot.slane %v299, %v507
    %v510 = vunpack.c.l.s4 1966171168
    %v511 = vunpack.c.0.s8 %v510
    %v512 = vlaneseq
    %v513 = vshrl.u32 %v512, 7
    %v514 = vsub.s32 %v511, %v513
    %v515 = vrot.slane %v501, %v514
    %v516 = vcombine.high %v508, %v508
    %v517 = vcombine.high %v515, %v515
    %v519 = vunpack.c.l.s4 1966171168
    %v520 = vunpack.c.0.s8 %v519
    %v521 = vlaneseq
    %v522 = vshrl.u32 %v521, 7
    %v523 = vsub.s32 %v520, %v522
    %v524 = vrot.slane %v508, %v523
    %v526 = vunpack.c.l.s4 1966171168
    %v527 = vunpack.c.0.s8 %v526
    %v528 = vlaneseq
    %v529 = vshrl.u32 %v528, 7
    %v530 = vsub.s32 %v527, %v529
    %v531 = vrot.slane %v515, %v530
    %v533 = vunpack.c.l.s4 1966171168
    %v534 = vunpack.c.0.s8 %v533
    %v535 = vlaneseq
    %v536 = vshrl.u32 %v535, 7
    %v537 = vsub.s32 %v534, %v536
    %v538 = vrot.slane %v516, %v537
    %v540 = vunpack.c.l.s4 1966171168
    %v541 = vunpack.c.0.s8 %v540
    %v542 = vlaneseq
    %v543 = vshrl.u32 %v542, 7
    %v544 = vsub.s32 %v541, %v543
    %v545 = vrot.slane %v517, %v544
    %v546 = vcombine.high %v524, %v524
    %v547 = vcombine.high %v531, %v531
    %v548 = vcombine.high %v538, %v538
    %v549 = vcombine.high %v545, %v545
    %558 = vst [vmem:[#allocation3 + $0x1] sm:$0x1] %v524
    %559 = vst [vmem:[#allocation3 + $0x3] sm:$0x1] %v538
    %560 = vst [vmem:[#allocation3 + $0x5] sm:$0x1] %v546
    %561 = vst [vmem:[#allocation3 + $0x7] sm:$0x1] %v548
    %562 = vst [vmem:[#allocation3 + $0x9] sm:$0x1] %v531
    %563 = vst [vmem:[#allocation3 + $0xb] sm:$0x1] %v545
    %564 = vst [vmem:[#allocation3 + $0xd] sm:$0x1] %v547
    %565 = vst [vmem:[#allocation3 + $0xf] sm:$0x1] %v549
    %v566 = vld [vmem:[#allocation16] sm:$0xff]
    %v567 = vld [vmem:[#allocation16 + $0x8] sm:$0xff]
    %v568 = vld [vmem:[#allocation16 + $0x10] sm:$0xff]
    %v569 = vld [vmem:[#allocation16 + $0x18] sm:$0xff]
    %v570 = vld [vmem:[#allocation16 + $0x20] sm:$0xff]
    %v571 = vld [vmem:[#allocation16 + $0x28] sm:$0xff]
    %v572 = vld [vmem:[#allocation16 + $0x30] sm:$0xff]
    %v573 = vld [vmem:[#allocation16 + $0x38] sm:$0xff]
    %v574 = vld [vmem:[#allocation6] sm:$0xf]
    %v575 = vld [vmem:[#allocation7] sm:$0xf]
    %v577 = vsel %vm128, %v574, 0
    %579 = vmatprep.subr.mxu0 %v567
    %580 = vmatpush1.msra.mxu0 %v566
    %581 = vmatprep.subr.mxu0 %v569
    %582 = vmatpush1.msra.mxu0 %v568
    %583 = vmatprep.subr.mxu0 %v571
    %584 = vmatpush1.msra.mxu0 %v570
    %585 = vmatprep.subr.mxu0 %v573
    %586 = vmatpush1.msra.mxu0 %v572
    %587 = vmatprep.subr.mxu0 0.0
    %588 = vmatpush1.msra.mxu0 0.0
    %589 = vmatprep.subr.mxu0 0.0
    %590 = vmatpush1.msra.mxu0 0.0
    %591 = vmatprep.subr.mxu0 0.0
    %592 = vmatpush1.msra.mxu0 0.0
    %593 = vmatprep.subr.mxu0 0.0
    %594 = vmatpush1.msra.mxu0 0.0
    %595 = vmatprep.subr.mxu0 0.0
    %596 = vmatpush1.msra.mxu0 0.0
    %597 = vmatprep.subr.mxu0 0.0
    %598 = vmatpush1.msra.mxu0 0.0
    %599 = vmatprep.subr.mxu0 0.0
    %600 = vmatpush1.msra.mxu0 0.0
    %601 = vmatprep.subr.mxu0 0.0
    %602 = vmatpush1.msra.mxu0 0.0
    %603 = vmatprep.subr.mxu0 0.0
    %604 = vmatpush1.msra.mxu0 0.0
    %605 = vmatprep.subr.mxu0 0.0
    %606 = vmatpush1.msra.mxu0 0.0
    %607 = vmatprep.subr.mxu0 0.0
    %608 = vmatpush1.msra.mxu0 0.0
    %609 = vmatprep.subr.mxu0 0.0
    %610 = vmatpush1.msra.mxu0 0.0
    %611 = vmatprep.subr.mxu0 0.0
    %612 = vmatpush1.msra.mxu0 0.0
    %613 = vmatprep.subr.mxu0 0.0
    %614 = vmatpush1.msra.mxu0 0.0
    %615 = vmatprep.subr.mxu0 0.0
    %616 = vmatpush1.msra.mxu0 0.0
    %617 = vmatprep.subr.mxu0 0.0
    %618 = vmatpush1.msra.mxu0 0.0
    %619 = vmatprep.subr.mxu0 0.0
    %620 = vmatpush1.msra.mxu0 0.0
    %621 = vmatprep.subr.mxu0 0.0
    %622 = vmatpush1.msra.mxu0 0.0
    %623 = vmatprep.subr.mxu0 0.0
    %624 = vmatpush1.msra.mxu0 0.0
    %625 = vmatprep.subr.mxu0 0.0
    %626 = vmatpush1.msra.mxu0 0.0
    %627 = vmatprep.subr.mxu0 0.0
    %628 = vmatpush1.msra.mxu0 0.0
    %629 = vmatprep.subr.mxu0 0.0
    %630 = vmatpush1.msra.mxu0 0.0
    %631 = vmatprep.subr.mxu0 0.0
    %632 = vmatpush1.msra.mxu0 0.0
    %633 = vmatprep.subr.mxu0 0.0
    %634 = vmatpush1.msra.mxu0 0.0
    %635 = vmatprep.subr.mxu0 0.0
    %636 = vmatpush1.msra.mxu0 0.0
    %637 = vmatprep.subr.mxu0 0.0
    %638 = vmatpush1.msra.mxu0 0.0
    %639 = vmatprep.subr.mxu0 0.0
    %640 = vmatpush1.msra.mxu0 0.0
    %641 = vmatprep.subr.mxu0 0.0
    %642 = vmatpush1.msra.mxu0 0.0
    %643 = vmatprep.mubr.f32.mxu0 0.0
    %644 = vmatmul.mubr.f32.gmra.mrb[0].mxu0 %v577
    %v645 = vpop.f32.mrb[0].mxu0
    %v646 = vadd.f32 0.0, %v645
    %v647 = vpop.f32.mrb[0].mxu0
    %v648 = vadd.f32 0.0, %v647
    %649 = vdwg.mxu0
    %v650 = vld [vmem:[#allocation2] sm:$0x3]
    %v651 = vadd.f32 %v650, %v646
    %s652 = scalar_lea.vmem [#allocation3], 14
    %v653 = vld [vmem:[%s652] sm:$0x3]
    %v655 = vrot.slane %v648, 2
    %v657 = vadd.f32 %v653, %v655
    %v658 = vmul.f32 %v651, 0.5
    %v659 = vtanh.pop %v658
    %v660 = vmul.f32 %v659, 0.5
    %v661 = vadd.f32 %v660, 0.5
    %v662 = vmul.f32 %v657, 0.5
    %v663 = vtanh.pop %v662
    %v664 = vmul.f32 %v663, 0.5
    %v665 = vadd.f32 %v664, 0.5
    %667 = vrot.lane.b32.xlu0 %v575, 32
    %v668 = vpop.permute.xlu0 %667
    %v670 = vmul.f32 %v661, %v668
    %v671 = vtanh.pop %v651
    %673 = vrot.lane.b32.xlu0 %v671, 32
    %v674 = vpop.permute.xlu0 %673
    %v676 = vmul.f32 %v661, %v674
    %678 = vrot.lane.b32.xlu0 %v676, 32
    %v679 = vpop.permute.xlu0 %678
    %v681 = vadd.f32 %v670, %v679
    %v682 = vrot.slane %v575, 2
    %683 = vrot.lane.b32.xlu0 %v682, 32
    %v684 = vpop.permute.xlu0 %683
    %v686 = vmul.f32 %v665, %v684
    %v687 = vtanh.pop %v657
    %689 = vrot.lane.b32.xlu0 %v687, 32
    %v690 = vpop.permute.xlu0 %689
    %v692 = vmul.f32 %v665, %v690
    %694 = vrot.lane.b32.xlu0 %v692, 32
    %v695 = vpop.permute.xlu0 %694
    %v697 = vadd.f32 %v686, %v695
    %v698 = vtanh.pop %v681
    %700 = vrot.lane.b32.xlu0 %v698, 32
    %v701 = vpop.permute.xlu0 %700
    %v703 = vmul.f32 %v661, %v701
    %v704 = vtanh.pop %v697
    %706 = vrot.lane.b32.xlu0 %v704, 32
    %v707 = vpop.permute.xlu0 %706
    %v709 = vmul.f32 %v665, %v707
    %711 = vrot.lane.b32.xlu0 %v703, 64
    %v712 = vpop.permute.xlu0 %711
    %vm714 = vcmask 254976
    %715 = vst.msk [vmem:[#allocation4] sm:$0x3] %vm714, %v712
    %717 = vrot.lane.b32.xlu0 %v709, 64
    %v718 = vpop.permute.xlu0 %717
    %s720 = scalar_lea.vmem [#allocation5], 14
    %721 = vst.msk [vmem:[%s720] sm:$0x3] %vm714, %v718
    %v722 = vrot.slane %v709, 6
    %vm724 = vcmask 1041408
    %v725 = vsel %vm724, %v703, %v722
    %727 = vrot.lane.b32.xlu0 %v725, 64
    %v728 = vpop.permute.xlu0 %727
    %v729 = vsel %vm128, %v728, 0
    %731 = vmatprep.subr.mxu0 %v567
    %732 = vmatpush1.msra.mxu0 %v566
    %733 = vmatprep.subr.mxu0 %v569
    %734 = vmatpush1.msra.mxu0 %v568
    %735 = vmatprep.subr.mxu0 %v571
    %736 = vmatpush1.msra.mxu0 %v570
    %737 = vmatprep.subr.mxu0 %v573
    %738 = vmatpush1.msra.mxu0 %v572
    %739 = vmatprep.subr.mxu0 0.0
    %740 = vmatpush1.msra.mxu0 0.0
    %741 = vmatprep.subr.mxu0 0.0
    %742 = vmatpush1.msra.mxu0 0.0
    %743 = vmatprep.subr.mxu0 0.0
    %744 = vmatpush1.msra.mxu0 0.0
    %745 = vmatprep.subr.mxu0 0.0
    %746 = vmatpush1.msra.mxu0 0.0
    %747 = vmatprep.subr.mxu0 0.0
    %748 = vmatpush1.msra.mxu0 0.0
    %749 = vmatprep.subr.mxu0 0.0
    %750 = vmatpush1.msra.mxu0 0.0
    %751 = vmatprep.subr.mxu0 0.0
    %752 = vmatpush1.msra.mxu0 0.0
    %753 = vmatprep.subr.mxu0 0.0
    %754 = vmatpush1.msra.mxu0 0.0
    %755 = vmatprep.subr.mxu0 0.0
    %756 = vmatpush1.msra.mxu0 0.0
    %757 = vmatprep.subr.mxu0 0.0
    %758 = vmatpush1.msra.mxu0 0.0
    %759 = vmatprep.subr.mxu0 0.0
    %760 = vmatpush1.msra.mxu0 0.0
    %761 = vmatprep.subr.mxu0 0.0
    %762 = vmatpush1.msra.mxu0 0.0
    %763 = vmatprep.subr.mxu0 0.0
    %764 = vmatpush1.msra.mxu0 0.0
    %765 = vmatprep.subr.mxu0 0.0
    %766 = vmatpush1.msra.mxu0 0.0
    %767 = vmatprep.subr.mxu0 0.0
    %768 = vmatpush1.msra.mxu0 0.0
    %769 = vmatprep.subr.mxu0 0.0
    %770 = vmatpush1.msra.mxu0 0.0
    %771 = vmatprep.subr.mxu0 0.0
    %772 = vmatpush1.msra.mxu0 0.0
    %773 = vmatprep.subr.mxu0 0.0
    %774 = vmatpush1.msra.mxu0 0.0
    %775 = vmatprep.subr.mxu0 0.0
    %776 = vmatpush1.msra.mxu0 0.0
    %777 = vmatprep.subr.mxu0 0.0
    %778 = vmatpush1.msra.mxu0 0.0
    %779 = vmatprep.subr.mxu0 0.0
    %780 = vmatpush1.msra.mxu0 0.0
    %781 = vmatprep.subr.mxu0 0.0
    %782 = vmatpush1.msra.mxu0 0.0
    %783 = vmatprep.subr.mxu0 0.0
    %784 = vmatpush1.msra.mxu0 0.0
    %785 = vmatprep.subr.mxu0 0.0
    %786 = vmatpush1.msra.mxu0 0.0
    %787 = vmatprep.subr.mxu0 0.0
    %788 = vmatpush1.msra.mxu0 0.0
    %789 = vmatprep.subr.mxu0 0.0
    %790 = vmatpush1.msra.mxu0 0.0
    %791 = vmatprep.subr.mxu0 0.0
    %792 = vmatpush1.msra.mxu0 0.0
    %793 = vmatprep.subr.mxu0 0.0
    %794 = vmatpush1.msra.mxu0 0.0
    %795 = vmatprep.mubr.f32.mxu0 0.0
    %796 = vmatmul.mubr.f32.gmra.mrb[0].mxu0 %v729
    %v797 = vpop.f32.mrb[0].mxu0
    %v798 = vadd.f32 0.0, %v797
    %v799 = vpop.f32.mrb[0].mxu0
    %v800 = vadd.f32 0.0, %v799
    %801 = vdwg.mxu0
    %s802 = scalar_lea.vmem [#allocation2], 2
    %v803 = vld [vmem:[%s802] sm:$0x3]
    %v804 = vadd.f32 %v803, %v798
    %s805 = scalar_lea.vmem [#allocation3], 12
    %v806 = vld [vmem:[%s805] sm:$0x3]
    %v808 = vrot.slane %v800, 2
    %v810 = vadd.f32 %v806, %v808
    %v811 = vmul.f32 %v804, 0.5
    %v812 = vtanh.pop %v811
    %v813 = vmul.f32 %v812, 0.5
    %v814 = vadd.f32 %v813, 0.5
    %v815 = vmul.f32 %v810, 0.5
    %v816 = vtanh.pop %v815
    %v817 = vmul.f32 %v816, 0.5
    %v818 = vadd.f32 %v817, 0.5
    %v819 = vmul.f32 %v814, %v681
    %v820 = vtanh.pop %v804
    %822 = vrot.lane.b32.xlu0 %v820, 32
    %v823 = vpop.permute.xlu0 %822
    %v825 = vmul.f32 %v814, %v823
    %827 = vrot.lane.b32.xlu0 %v825, 32
    %v828 = vpop.permute.xlu0 %827
    %v830 = vadd.f32 %v819, %v828
    %v831 = vmul.f32 %v818, %v697
    %v832 = vtanh.pop %v810
    %834 = vrot.lane.b32.xlu0 %v832, 32
    %v835 = vpop.permute.xlu0 %834
    %v837 = vmul.f32 %v818, %v835
    %839 = vrot.lane.b32.xlu0 %v837, 32
    %v840 = vpop.permute.xlu0 %839
    %v842 = vadd.f32 %v831, %v840
    %v843 = vtanh.pop %v830
    %845 = vrot.lane.b32.xlu0 %v843, 32
    %v846 = vpop.permute.xlu0 %845
    %v848 = vmul.f32 %v814, %v846
    %v849 = vtanh.pop %v842
    %851 = vrot.lane.b32.xlu0 %v849, 32
    %v852 = vpop.permute.xlu0 %851
    %v854 = vmul.f32 %v818, %v852
    %856 = vrot.lane.b32.xlu0 %v848, 64
    %v857 = vpop.permute.xlu0 %856
    %s859 = scalar_lea.vmem [#allocation4], 2
    %860 = vst.msk [vmem:[%s859] sm:$0x3] %vm714, %v857
    %862 = vrot.lane.b32.xlu0 %v854, 64
    %v863 = vpop.permute.xlu0 %862
    %s865 = scalar_lea.vmem [#allocation5], 12
    %866 = vst.msk [vmem:[%s865] sm:$0x3] %vm714, %v863
    %v867 = vrot.slane %v854, 6
    %v869 = vsel %vm724, %v848, %v867
    %871 = vrot.lane.b32.xlu0 %v869, 64
    %v872 = vpop.permute.xlu0 %871
    %v873 = vsel %vm128, %v872, 0
    %875 = vmatprep.subr.mxu0 %v567
    %876 = vmatpush1.msra.mxu0 %v566
    %877 = vmatprep.subr.mxu0 %v569
    %878 = vmatpush1.msra.mxu0 %v568
    %879 = vmatprep.subr.mxu0 %v571
    %880 = vmatpush1.msra.mxu0 %v570
    %881 = vmatprep.subr.mxu0 %v573
    %882 = vmatpush1.msra.mxu0 %v572
    %883 = vmatprep.subr.mxu0 0.0
    %884 = vmatpush1.msra.mxu0 0.0
    %885 = vmatprep.subr.mxu0 0.0
    %886 = vmatpush1.msra.mxu0 0.0
    %887 = vmatprep.subr.mxu0 0.0
    %888 = vmatpush1.msra.mxu0 0.0
    %889 = vmatprep.subr.mxu0 0.0
    %890 = vmatpush1.msra.mxu0 0.0
    %891 = vmatprep.subr.mxu0 0.0
    %892 = vmatpush1.msra.mxu0 0.0
    %893 = vmatprep.subr.mxu0 0.0
    %894 = vmatpush1.msra.mxu0 0.0
    %895 = vmatprep.subr.mxu0 0.0
    %896 = vmatpush1.msra.mxu0 0.0
    %897 = vmatprep.subr.mxu0 0.0
    %898 = vmatpush1.msra.mxu0 0.0
    %899 = vmatprep.subr.mxu0 0.0
    %900 = vmatpush1.msra.mxu0 0.0
    %901 = vmatprep.subr.mxu0 0.0
    %902 = vmatpush1.msra.mxu0 0.0
    %903 = vmatprep.subr.mxu0 0.0
    %904 = vmatpush1.msra.mxu0 0.0
    %905 = vmatprep.subr.mxu0 0.0
    %906 = vmatpush1.msra.mxu0 0.0
    %907 = vmatprep.subr.mxu0 0.0
    %908 = vmatpush1.msra.mxu0 0.0
    %909 = vmatprep.subr.mxu0 0.0
    %910 = vmatpush1.msra.mxu0 0.0
    %911 = vmatprep.subr.mxu0 0.0
    %912 = vmatpush1.msra.mxu0 0.0
    %913 = vmatprep.subr.mxu0 0.0
    %914 = vmatpush1.msra.mxu0 0.0
    %915 = vmatprep.subr.mxu0 0.0
    %916 = vmatpush1.msra.mxu0 0.0
    %917 = vmatprep.subr.mxu0 0.0
    %918 = vmatpush1.msra.mxu0 0.0
    %919 = vmatprep.subr.mxu0 0.0
    %920 = vmatpush1.msra.mxu0 0.0
    %921 = vmatprep.subr.mxu0 0.0
    %922 = vmatpush1.msra.mxu0 0.0
    %923 = vmatprep.subr.mxu0 0.0
    %924 = vmatpush1.msra.mxu0 0.0
    %925 = vmatprep.subr.mxu0 0.0
    %926 = vmatpush1.msra.mxu0 0.0
    %927 = vmatprep.subr.mxu0 0.0
    %928 = vmatpush1.msra.mxu0 0.0
    %929 = vmatprep.subr.mxu0 0.0
    %930 = vmatpush1.msra.mxu0 0.0
    %931 = vmatprep.subr.mxu0 0.0
    %932 = vmatpush1.msra.mxu0 0.0
    %933 = vmatprep.subr.mxu0 0.0
    %934 = vmatpush1.msra.mxu0 0.0
    %935 = vmatprep.subr.mxu0 0.0
    %936 = vmatpush1.msra.mxu0 0.0
    %937 = vmatprep.subr.mxu0 0.0
    %938 = vmatpush1.msra.mxu0 0.0
    %939 = vmatprep.mubr.f32.mxu0 0.0
    %940 = vmatmul.mubr.f32.gmra.mrb[0].mxu0 %v873
    %v941 = vpop.f32.mrb[0].mxu0
    %v942 = vadd.f32 0.0, %v941
    %v943 = vpop.f32.mrb[0].mxu0
    %v944 = vadd.f32 0.0, %v943
    %945 = vdwg.mxu0
    %s946 = scalar_lea.vmem [#allocation2], 4
    %v947 = vld [vmem:[%s946] sm:$0x3]
    %v948 = vadd.f32 %v947, %v942
    %s949 = scalar_lea.vmem [#allocation3], 10
    %v950 = vld [vmem:[%s949] sm:$0x3]
    %v952 = vrot.slane %v944, 2
    %v954 = vadd.f32 %v950, %v952
    %v955 = vmul.f32 %v948, 0.5
    %v956 = vtanh.pop %v955
    %v957 = vmul.f32 %v956, 0.5
    %v958 = vadd.f32 %v957, 0.5
    %v959 = vmul.f32 %v954, 0.5
    %v960 = vtanh.pop %v959
    %v961 = vmul.f32 %v960, 0.5
    %v962 = vadd.f32 %v961, 0.5
    %v963 = vmul.f32 %v958, %v830
    %v964 = vtanh.pop %v948
    %966 = vrot.lane.b32.xlu0 %v964, 32
    %v967 = vpop.permute.xlu0 %966
    %v969 = vmul.f32 %v958, %v967
    %971 = vrot.lane.b32.xlu0 %v969, 32
    %v972 = vpop.permute.xlu0 %971
    %v974 = vadd.f32 %v963, %v972
    %v975 = vmul.f32 %v962, %v842
    %v976 = vtanh.pop %v954
    %978 = vrot.lane.b32.xlu0 %v976, 32
    %v979 = vpop.permute.xlu0 %978
    %v981 = vmul.f32 %v962, %v979
    %983 = vrot.lane.b32.xlu0 %v981, 32
    %v984 = vpop.permute.xlu0 %983
    %v986 = vadd.f32 %v975, %v984
    %v987 = vtanh.pop %v974
    %989 = vrot.lane.b32.xlu0 %v987, 32
    %v990 = vpop.permute.xlu0 %989
    %v992 = vmul.f32 %v958, %v990
    %v993 = vtanh.pop %v986
    %995 = vrot.lane.b32.xlu0 %v993, 32
    %v996 = vpop.permute.xlu0 %995
    %v998 = vmul.f32 %v962, %v996
    %1000 = vrot.lane.b32.xlu0 %v992, 64
    %v1001 = vpop.permute.xlu0 %1000
    %s1003 = scalar_lea.vmem [#allocation4], 4
    %1004 = vst.msk [vmem:[%s1003] sm:$0x3] %vm714, %v1001
    %1006 = vrot.lane.b32.xlu0 %v998, 64
    %v1007 = vpop.permute.xlu0 %1006
    %s1009 = scalar_lea.vmem [#allocation5], 10
    %1010 = vst.msk [vmem:[%s1009] sm:$0x3] %vm714, %v1007
    %v1011 = vrot.slane %v998, 6
    %v1013 = vsel %vm724, %v992, %v1011
    %1015 = vrot.lane.b32.xlu0 %v1013, 64
    %v1016 = vpop.permute.xlu0 %1015
    %v1017 = vsel %vm128, %v1016, 0
    %1019 = vmatprep.subr.mxu0 %v567
    %1020 = vmatpush1.msra.mxu0 %v566
    %1021 = vmatprep.subr.mxu0 %v569
    %1022 = vmatpush1.msra.mxu0 %v568
    %1023 = vmatprep.subr.mxu0 %v571
    %1024 = vmatpush1.msra.mxu0 %v570
    %1025 = vmatprep.subr.mxu0 %v573
    %1026 = vmatpush1.msra.mxu0 %v572
    %1027 = vmatprep.subr.mxu0 0.0
    %1028 = vmatpush1.msra.mxu0 0.0
    %1029 = vmatprep.subr.mxu0 0.0
    %1030 = vmatpush1.msra.mxu0 0.0
    %1031 = vmatprep.subr.mxu0 0.0
    %1032 = vmatpush1.msra.mxu0 0.0
    %1033 = vmatprep.subr.mxu0 0.0
    %1034 = vmatpush1.msra.mxu0 0.0
    %1035 = vmatprep.subr.mxu0 0.0
    %1036 = vmatpush1.msra.mxu0 0.0
    %1037 = vmatprep.subr.mxu0 0.0
    %1038 = vmatpush1.msra.mxu0 0.0
    %1039 = vmatprep.subr.mxu0 0.0
    %1040 = vmatpush1.msra.mxu0 0.0
    %1041 = vmatprep.subr.mxu0 0.0
    %1042 = vmatpush1.msra.mxu0 0.0
    %1043 = vmatprep.subr.mxu0 0.0
    %1044 = vmatpush1.msra.mxu0 0.0
    %1045 = vmatprep.subr.mxu0 0.0
    %1046 = vmatpush1.msra.mxu0 0.0
    %1047 = vmatprep.subr.mxu0 0.0
    %1048 = vmatpush1.msra.mxu0 0.0
    %1049 = vmatprep.subr.mxu0 0.0
    %1050 = vmatpush1.msra.mxu0 0.0
    %1051 = vmatprep.subr.mxu0 0.0
    %1052 = vmatpush1.msra.mxu0 0.0
    %1053 = vmatprep.subr.mxu0 0.0
    %1054 = vmatpush1.msra.mxu0 0.0
    %1055 = vmatprep.subr.mxu0 0.0
    %1056 = vmatpush1.msra.mxu0 0.0
    %1057 = vmatprep.subr.mxu0 0.0
    %1058 = vmatpush1.msra.mxu0 0.0
    %1059 = vmatprep.subr.mxu0 0.0
    %1060 = vmatpush1.msra.mxu0 0.0
    %1061 = vmatprep.subr.mxu0 0.0
    %1062 = vmatpush1.msra.mxu0 0.0
    %1063 = vmatprep.subr.mxu0 0.0
    %1064 = vmatpush1.msra.mxu0 0.0
    %1065 = vmatprep.subr.mxu0 0.0
    %1066 = vmatpush1.msra.mxu0 0.0
    %1067 = vmatprep.subr.mxu0 0.0
    %1068 = vmatpush1.msra.mxu0 0.0
    %1069 = vmatprep.subr.mxu0 0.0
    %1070 = vmatpush1.msra.mxu0 0.0
    %1071 = vmatprep.subr.mxu0 0.0
    %1072 = vmatpush1.msra.mxu0 0.0
    %1073 = vmatprep.subr.mxu0 0.0
    %1074 = vmatpush1.msra.mxu0 0.0
    %1075 = vmatprep.subr.mxu0 0.0
    %1076 = vmatpush1.msra.mxu0 0.0
    %1077 = vmatprep.subr.mxu0 0.0
    %1078 = vmatpush1.msra.mxu0 0.0
    %1079 = vmatprep.subr.mxu0 0.0
    %1080 = vmatpush1.msra.mxu0 0.0
    %1081 = vmatprep.subr.mxu0 0.0
    %1082 = vmatpush1.msra.mxu0 0.0
    %1083 = vmatprep.mubr.f32.mxu0 0.0
    %1084 = vmatmul.mubr.f32.gmra.mrb[0].mxu0 %v1017
    %v1085 = vpop.f32.mrb[0].mxu0
    %v1086 = vadd.f32 0.0, %v1085
    %v1087 = vpop.f32.mrb[0].mxu0
    %v1088 = vadd.f32 0.0, %v1087
    %1089 = vdwg.mxu0
    %s1090 = scalar_lea.vmem [#allocation2], 6
    %v1091 = vld [vmem:[%s1090] sm:$0x3]
    %v1092 = vadd.f32 %v1091, %v1086
    %s1093 = scalar_lea.vmem [#allocation3], 8
    %v1094 = vld [vmem:[%s1093] sm:$0x3]
    %v1096 = vrot.slane %v1088, 2
    %v1098 = vadd.f32 %v1094, %v1096
    %v1099 = vmul.f32 %v1092, 0.5
    %v1100 = vtanh.pop %v1099
    %v1101 = vmul.f32 %v1100, 0.5
    %v1102 = vadd.f32 %v1101, 0.5
    %v1103 = vmul.f32 %v1098, 0.5
    %v1104 = vtanh.pop %v1103
    %v1105 = vmul.f32 %v1104, 0.5
    %v1106 = vadd.f32 %v1105, 0.5
    %v1107 = vmul.f32 %v1102, %v974
    %v1108 = vtanh.pop %v1092
    %1110 = vrot.lane.b32.xlu0 %v1108, 32
    %v1111 = vpop.permute.xlu0 %1110
    %v1113 = vmul.f32 %v1102, %v1111
    %1115 = vrot.lane.b32.xlu0 %v1113, 32
    %v1116 = vpop.permute.xlu0 %1115
    %v1118 = vadd.f32 %v1107, %v1116
    %v1119 = vmul.f32 %v1106, %v986
    %v1120 = vtanh.pop %v1098
    %1122 = vrot.lane.b32.xlu0 %v1120, 32
    %v1123 = vpop.permute.xlu0 %1122
    %v1125 = vmul.f32 %v1106, %v1123
    %1127 = vrot.lane.b32.xlu0 %v1125, 32
    %v1128 = vpop.permute.xlu0 %1127
    %v1130 = vadd.f32 %v1119, %v1128
    %v1131 = vtanh.pop %v1118
    %1133 = vrot.lane.b32.xlu0 %v1131, 32
    %v1134 = vpop.permute.xlu0 %1133
    %v1136 = vmul.f32 %v1102, %v1134
    %v1137 = vtanh.pop %v1130
    %1139 = vrot.lane.b32.xlu0 %v1137, 32
    %v1140 = vpop.permute.xlu0 %1139
    %v1142 = vmul.f32 %v1106, %v1140
    %1144 = vrot.lane.b32.xlu0 %v1136, 64
    %v1145 = vpop.permute.xlu0 %1144
    %s1147 = scalar_lea.vmem [#allocation4], 6
    %1148 = vst.msk [vmem:[%s1147] sm:$0x3] %vm714, %v1145
    %1150 = vrot.lane.b32.xlu0 %v1142, 64
    %v1151 = vpop.permute.xlu0 %1150
    %s1153 = scalar_lea.vmem [#allocation5], 8
    %1154 = vst.msk [vmem:[%s1153] sm:$0x3] %vm714, %v1151
    %v1155 = vrot.slane %v1142, 6
    %v1157 = vsel %vm724, %v1136, %v1155
    %1159 = vrot.lane.b32.xlu0 %v1157, 64
    %v1160 = vpop.permute.xlu0 %1159
    %v1161 = vsel %vm128, %v1160, 0
    %1163 = vmatprep.subr.mxu0 %v567
    %1164 = vmatpush1.msra.mxu0 %v566
    %1165 = vmatprep.subr.mxu0 %v569
    %1166 = vmatpush1.msra.mxu0 %v568
    %1167 = vmatprep.subr.mxu0 %v571
    %1168 = vmatpush1.msra.mxu0 %v570
    %1169 = vmatprep.subr.mxu0 %v573
    %1170 = vmatpush1.msra.mxu0 %v572
    %1171 = vmatprep.subr.mxu0 0.0
    %1172 = vmatpush1.msra.mxu0 0.0
    %1173 = vmatprep.subr.mxu0 0.0
    %1174 = vmatpush1.msra.mxu0 0.0
    %1175 = vmatprep.subr.mxu0 0.0
    %1176 = vmatpush1.msra.mxu0 0.0
    %1177 = vmatprep.subr.mxu0 0.0
    %1178 = vmatpush1.msra.mxu0 0.0
    %1179 = vmatprep.subr.mxu0 0.0
    %1180 = vmatpush1.msra.mxu0 0.0
    %1181 = vmatprep.subr.mxu0 0.0
    %1182 = vmatpush1.msra.mxu0 0.0
    %1183 = vmatprep.subr.mxu0 0.0
    %1184 = vmatpush1.msra.mxu0 0.0
    %1185 = vmatprep.subr.mxu0 0.0
    %1186 = vmatpush1.msra.mxu0 0.0
    %1187 = vmatprep.subr.mxu0 0.0
    %1188 = vmatpush1.msra.mxu0 0.0
    %1189 = vmatprep.subr.mxu0 0.0
    %1190 = vmatpush1.msra.mxu0 0.0
    %1191 = vmatprep.subr.mxu0 0.0
    %1192 = vmatpush1.msra.mxu0 0.0
    %1193 = vmatprep.subr.mxu0 0.0
    %1194 = vmatpush1.msra.mxu0 0.0
    %1195 = vmatprep.subr.mxu0 0.0
    %1196 = vmatpush1.msra.mxu0 0.0
    %1197 = vmatprep.subr.mxu0 0.0
    %1198 = vmatpush1.msra.mxu0 0.0
    %1199 = vmatprep.subr.mxu0 0.0
    %1200 = vmatpush1.msra.mxu0 0.0
    %1201 = vmatprep.subr.mxu0 0.0
    %1202 = vmatpush1.msra.mxu0 0.0
    %1203 = vmatprep.subr.mxu0 0.0
    %1204 = vmatpush1.msra.mxu0 0.0
    %1205 = vmatprep.subr.mxu0 0.0
    %1206 = vmatpush1.msra.mxu0 0.0
    %1207 = vmatprep.subr.mxu0 0.0
    %1208 = vmatpush1.msra.mxu0 0.0
    %1209 = vmatprep.subr.mxu0 0.0
    %1210 = vmatpush1.msra.mxu0 0.0
    %1211 = vmatprep.subr.mxu0 0.0
    %1212 = vmatpush1.msra.mxu0 0.0
    %1213 = vmatprep.subr.mxu0 0.0
    %1214 = vmatpush1.msra.mxu0 0.0
    %1215 = vmatprep.subr.mxu0 0.0
    %1216 = vmatpush1.msra.mxu0 0.0
    %1217 = vmatprep.subr.mxu0 0.0
    %1218 = vmatpush1.msra.mxu0 0.0
    %1219 = vmatprep.subr.mxu0 0.0
    %1220 = vmatpush1.msra.mxu0 0.0
    %1221 = vmatprep.subr.mxu0 0.0
    %1222 = vmatpush1.msra.mxu0 0.0
    %1223 = vmatprep.subr.mxu0 0.0
    %1224 = vmatpush1.msra.mxu0 0.0
    %1225 = vmatprep.subr.mxu0 0.0
    %1226 = vmatpush1.msra.mxu0 0.0
    %1227 = vmatprep.mubr.f32.mxu0 0.0
    %1228 = vmatmul.mubr.f32.gmra.mrb[0].mxu0 %v1161
    %v1229 = vpop.f32.mrb[0].mxu0
    %v1230 = vadd.f32 0.0, %v1229
    %v1231 = vpop.f32.mrb[0].mxu0
    %v1232 = vadd.f32 0.0, %v1231
    %1233 = vdwg.mxu0
    %s1234 = scalar_lea.vmem [#allocation2], 8
    %v1235 = vld [vmem:[%s1234] sm:$0x3]
    %v1236 = vadd.f32 %v1235, %v1230
    %s1237 = scalar_lea.vmem [#allocation3], 6
    %v1238 = vld [vmem:[%s1237] sm:$0x3]
    %v1240 = vrot.slane %v1232, 2
    %v1242 = vadd.f32 %v1238, %v1240
    %v1243 = vmul.f32 %v1236, 0.5
    %v1244 = vtanh.pop %v1243
    %v1245 = vmul.f32 %v1244, 0.5
    %v1246 = vadd.f32 %v1245, 0.5
    %v1247 = vmul.f32 %v1242, 0.5
    %v1248 = vtanh.pop %v1247
    %v1249 = vmul.f32 %v1248, 0.5
    %v1250 = vadd.f32 %v1249, 0.5
    %v1251 = vmul.f32 %v1246, %v1118
    %v1252 = vtanh.pop %v1236
    %1254 = vrot.lane.b32.xlu0 %v1252, 32
    %v1255 = vpop.permute.xlu0 %1254
    %v1257 = vmul.f32 %v1246, %v1255
    %1259 = vrot.lane.b32.xlu0 %v1257, 32
    %v1260 = vpop.permute.xlu0 %1259
    %v1262 = vadd.f32 %v1251, %v1260
    %v1263 = vmul.f32 %v1250, %v1130
    %v1264 = vtanh.pop %v1242
    %1266 = vrot.lane.b32.xlu0 %v1264, 32
    %v1267 = vpop.permute.xlu0 %1266
    %v1269 = vmul.f32 %v1250, %v1267
    %1271 = vrot.lane.b32.xlu0 %v1269, 32
    %v1272 = vpop.permute.xlu0 %1271
    %v1274 = vadd.f32 %v1263, %v1272
    %v1275 = vtanh.pop %v1262
    %1277 = vrot.lane.b32.xlu0 %v1275, 32
    %v1278 = vpop.permute.xlu0 %1277
    %v1280 = vmul.f32 %v1246, %v1278
    %v1281 = vtanh.pop %v1274
    %1283 = vrot.lane.b32.xlu0 %v1281, 32
    %v1284 = vpop.permute.xlu0 %1283
    %v1286 = vmul.f32 %v1250, %v1284
    %1288 = vrot.lane.b32.xlu0 %v1280, 64
    %v1289 = vpop.permute.xlu0 %1288
    %s1291 = scalar_lea.vmem [#allocation4], 8
    %1292 = vst.msk [vmem:[%s1291] sm:$0x3] %vm714, %v1289
    %1294 = vrot.lane.b32.xlu0 %v1286, 64
    %v1295 = vpop.permute.xlu0 %1294
    %s1297 = scalar_lea.vmem [#allocation5], 6
    %1298 = vst.msk [vmem:[%s1297] sm:$0x3] %vm714, %v1295
    %v1299 = vrot.slane %v1286, 6
    %v1301 = vsel %vm724, %v1280, %v1299
    %1303 = vrot.lane.b32.xlu0 %v1301, 64
    %v1304 = vpop.permute.xlu0 %1303
    %v1305 = vsel %vm128, %v1304, 0
    %1307 = vmatprep.subr.mxu0 %v567
    %1308 = vmatpush1.msra.mxu0 %v566
    %1309 = vmatprep.subr.mxu0 %v569
    %1310 = vmatpush1.msra.mxu0 %v568
    %1311 = vmatprep.subr.mxu0 %v571
    %1312 = vmatpush1.msra.mxu0 %v570
    %1313 = vmatprep.subr.mxu0 %v573
    %1314 = vmatpush1.msra.mxu0 %v572
    %1315 = vmatprep.subr.mxu0 0.0
    %1316 = vmatpush1.msra.mxu0 0.0
    %1317 = vmatprep.subr.mxu0 0.0
    %1318 = vmatpush1.msra.mxu0 0.0
    %1319 = vmatprep.subr.mxu0 0.0
    %1320 = vmatpush1.msra.mxu0 0.0
    %1321 = vmatprep.subr.mxu0 0.0
    %1322 = vmatpush1.msra.mxu0 0.0
    %1323 = vmatprep.subr.mxu0 0.0
    %1324 = vmatpush1.msra.mxu0 0.0
    %1325 = vmatprep.subr.mxu0 0.0
    %1326 = vmatpush1.msra.mxu0 0.0
    %1327 = vmatprep.subr.mxu0 0.0
    %1328 = vmatpush1.msra.mxu0 0.0
    %1329 = vmatprep.subr.mxu0 0.0
    %1330 = vmatpush1.msra.mxu0 0.0
    %1331 = vmatprep.subr.mxu0 0.0
    %1332 = vmatpush1.msra.mxu0 0.0
    %1333 = vmatprep.subr.mxu0 0.0
    %1334 = vmatpush1.msra.mxu0 0.0
    %1335 = vmatprep.subr.mxu0 0.0
    %1336 = vmatpush1.msra.mxu0 0.0
    %1337 = vmatprep.subr.mxu0 0.0
    %1338 = vmatpush1.msra.mxu0 0.0
    %1339 = vmatprep.subr.mxu0 0.0
    %1340 = vmatpush1.msra.mxu0 0.0
    %1341 = vmatprep.subr.mxu0 0.0
    %1342 = vmatpush1.msra.mxu0 0.0
    %1343 = vmatprep.subr.mxu0 0.0
    %1344 = vmatpush1.msra.mxu0 0.0
    %1345 = vmatprep.subr.mxu0 0.0
    %1346 = vmatpush1.msra.mxu0 0.0
    %1347 = vmatprep.subr.mxu0 0.0
    %1348 = vmatpush1.msra.mxu0 0.0
    %1349 = vmatprep.subr.mxu0 0.0
    %1350 = vmatpush1.msra.mxu0 0.0
    %1351 = vmatprep.subr.mxu0 0.0
    %1352 = vmatpush1.msra.mxu0 0.0
    %1353 = vmatprep.subr.mxu0 0.0
    %1354 = vmatpush1.msra.mxu0 0.0
    %1355 = vmatprep.subr.mxu0 0.0
    %1356 = vmatpush1.msra.mxu0 0.0
    %1357 = vmatprep.subr.mxu0 0.0
    %1358 = vmatpush1.msra.mxu0 0.0
    %1359 = vmatprep.subr.mxu0 0.0
    %1360 = vmatpush1.msra.mxu0 0.0
    %1361 = vmatprep.subr.mxu0 0.0
    %1362 = vmatpush1.msra.mxu0 0.0
    %1363 = vmatprep.subr.mxu0 0.0
    %1364 = vmatpush1.msra.mxu0 0.0
    %1365 = vmatprep.subr.mxu0 0.0
    %1366 = vmatpush1.msra.mxu0 0.0
    %1367 = vmatprep.subr.mxu0 0.0
    %1368 = vmatpush1.msra.mxu0 0.0
    %1369 = vmatprep.subr.mxu0 0.0
    %1370 = vmatpush1.msra.mxu0 0.0
    %1371 = vmatprep.mubr.f32.mxu0 0.0
    %1372 = vmatmul.mubr.f32.gmra.mrb[0].mxu0 %v1305
    %v1373 = vpop.f32.mrb[0].mxu0
    %v1374 = vadd.f32 0.0, %v1373
    %v1375 = vpop.f32.mrb[0].mxu0
    %v1376 = vadd.f32 0.0, %v1375
    %1377 = vdwg.mxu0
    %s1378 = scalar_lea.vmem [#allocation2], 10
    %v1379 = vld [vmem:[%s1378] sm:$0x3]
    %v1380 = vadd.f32 %v1379, %v1374
    %s1381 = scalar_lea.vmem [#allocation3], 4
    %v1382 = vld [vmem:[%s1381] sm:$0x3]
    %v1384 = vrot.slane %v1376, 2
    %v1386 = vadd.f32 %v1382, %v1384
    %v1387 = vmul.f32 %v1380, 0.5
    %v1388 = vtanh.pop %v1387
    %v1389 = vmul.f32 %v1388, 0.5
    %v1390 = vadd.f32 %v1389, 0.5
    %v1391 = vmul.f32 %v1386, 0.5
    %v1392 = vtanh.pop %v1391
    %v1393 = vmul.f32 %v1392, 0.5
    %v1394 = vadd.f32 %v1393, 0.5
    %v1395 = vmul.f32 %v1390, %v1262
    %v1396 = vtanh.pop %v1380
    %1398 = vrot.lane.b32.xlu0 %v1396, 32
    %v1399 = vpop.permute.xlu0 %1398
    %v1401 = vmul.f32 %v1390, %v1399
    %1403 = vrot.lane.b32.xlu0 %v1401, 32
    %v1404 = vpop.permute.xlu0 %1403
    %v1406 = vadd.f32 %v1395, %v1404
    %v1407 = vmul.f32 %v1394, %v1274
    %v1408 = vtanh.pop %v1386
    %1410 = vrot.lane.b32.xlu0 %v1408, 32
    %v1411 = vpop.permute.xlu0 %1410
    %v1413 = vmul.f32 %v1394, %v1411
    %1415 = vrot.lane.b32.xlu0 %v1413, 32
    %v1416 = vpop.permute.xlu0 %1415
    %v1418 = vadd.f32 %v1407, %v1416
    %v1419 = vtanh.pop %v1406
    %1421 = vrot.lane.b32.xlu0 %v1419, 32
    %v1422 = vpop.permute.xlu0 %1421
    %v1424 = vmul.f32 %v1390, %v1422
    %v1425 = vtanh.pop %v1418
    %1427 = vrot.lane.b32.xlu0 %v1425, 32
    %v1428 = vpop.permute.xlu0 %1427
    %v1430 = vmul.f32 %v1394, %v1428
    %1432 = vrot.lane.b32.xlu0 %v1424, 64
    %v1433 = vpop.permute.xlu0 %1432
    %s1435 = scalar_lea.vmem [#allocation4], 10
    %1436 = vst.msk [vmem:[%s1435] sm:$0x3] %vm714, %v1433
    %1438 = vrot.lane.b32.xlu0 %v1430, 64
    %v1439 = vpop.permute.xlu0 %1438
    %s1441 = scalar_lea.vmem [#allocation5], 4
    %1442 = vst.msk [vmem:[%s1441] sm:$0x3] %vm714, %v1439
    %v1443 = vrot.slane %v1430, 6
    %v1445 = vsel %vm724, %v1424, %v1443
    %1447 = vrot.lane.b32.xlu0 %v1445, 64
    %v1448 = vpop.permute.xlu0 %1447
    %v1449 = vsel %vm128, %v1448, 0
    %1451 = vmatprep.subr.mxu0 %v567
    %1452 = vmatpush1.msra.mxu0 %v566
    %1453 = vmatprep.subr.mxu0 %v569
    %1454 = vmatpush1.msra.mxu0 %v568
    %1455 = vmatprep.subr.mxu0 %v571
    %1456 = vmatpush1.msra.mxu0 %v570
    %1457 = vmatprep.subr.mxu0 %v573
    %1458 = vmatpush1.msra.mxu0 %v572
    %1459 = vmatprep.subr.mxu0 0.0
    %1460 = vmatpush1.msra.mxu0 0.0
    %1461 = vmatprep.subr.mxu0 0.0
    %1462 = vmatpush1.msra.mxu0 0.0
    %1463 = vmatprep.subr.mxu0 0.0
    %1464 = vmatpush1.msra.mxu0 0.0
    %1465 = vmatprep.subr.mxu0 0.0
    %1466 = vmatpush1.msra.mxu0 0.0
    %1467 = vmatprep.subr.mxu0 0.0
    %1468 = vmatpush1.msra.mxu0 0.0
    %1469 = vmatprep.subr.mxu0 0.0
    %1470 = vmatpush1.msra.mxu0 0.0
    %1471 = vmatprep.subr.mxu0 0.0
    %1472 = vmatpush1.msra.mxu0 0.0
    %1473 = vmatprep.subr.mxu0 0.0
    %1474 = vmatpush1.msra.mxu0 0.0
    %1475 = vmatprep.subr.mxu0 0.0
    %1476 = vmatpush1.msra.mxu0 0.0
    %1477 = vmatprep.subr.mxu0 0.0
    %1478 = vmatpush1.msra.mxu0 0.0
    %1479 = vmatprep.subr.mxu0 0.0
    %1480 = vmatpush1.msra.mxu0 0.0
    %1481 = vmatprep.subr.mxu0 0.0
    %1482 = vmatpush1.msra.mxu0 0.0
    %1483 = vmatprep.subr.mxu0 0.0
    %1484 = vmatpush1.msra.mxu0 0.0
    %1485 = vmatprep.subr.mxu0 0.0
    %1486 = vmatpush1.msra.mxu0 0.0
    %1487 = vmatprep.subr.mxu0 0.0
    %1488 = vmatpush1.msra.mxu0 0.0
    %1489 = vmatprep.subr.mxu0 0.0
    %1490 = vmatpush1.msra.mxu0 0.0
    %1491 = vmatprep.subr.mxu0 0.0
    %1492 = vmatpush1.msra.mxu0 0.0
    %1493 = vmatprep.subr.mxu0 0.0
    %1494 = vmatpush1.msra.mxu0 0.0
    %1495 = vmatprep.subr.mxu0 0.0
    %1496 = vmatpush1.msra.mxu0 0.0
    %1497 = vmatprep.subr.mxu0 0.0
    %1498 = vmatpush1.msra.mxu0 0.0
    %1499 = vmatprep.subr.mxu0 0.0
    %1500 = vmatpush1.msra.mxu0 0.0
    %1501 = vmatprep.subr.mxu0 0.0
    %1502 = vmatpush1.msra.mxu0 0.0
    %1503 = vmatprep.subr.mxu0 0.0
    %1504 = vmatpush1.msra.mxu0 0.0
    %1505 = vmatprep.subr.mxu0 0.0
    %1506 = vmatpush1.msra.mxu0 0.0
    %1507 = vmatprep.subr.mxu0 0.0
    %1508 = vmatpush1.msra.mxu0 0.0
    %1509 = vmatprep.subr.mxu0 0.0
    %1510 = vmatpush1.msra.mxu0 0.0
    %1511 = vmatprep.subr.mxu0 0.0
    %1512 = vmatpush1.msra.mxu0 0.0
    %1513 = vmatprep.subr.mxu0 0.0
    %1514 = vmatpush1.msra.mxu0 0.0
    %1515 = vmatprep.mubr.f32.mxu0 0.0
    %1516 = vmatmul.mubr.f32.gmra.mrb[0].mxu0 %v1449
    %v1517 = vpop.f32.mrb[0].mxu0
    %v1518 = vadd.f32 0.0, %v1517
    %v1519 = vpop.f32.mrb[0].mxu0
    %v1520 = vadd.f32 0.0, %v1519
    %1521 = vdwg.mxu0
    %s1522 = scalar_lea.vmem [#allocation2], 12
    %v1523 = vld [vmem:[%s1522] sm:$0x3]
    %v1524 = vadd.f32 %v1523, %v1518
    %s1525 = scalar_lea.vmem [#allocation3], 2
    %v1526 = vld [vmem:[%s1525] sm:$0x3]
    %v1528 = vrot.slane %v1520, 2
    %v1530 = vadd.f32 %v1526, %v1528
    %v1531 = vmul.f32 %v1524, 0.5
    %v1532 = vtanh.pop %v1531
    %v1533 = vmul.f32 %v1532, 0.5
    %v1534 = vadd.f32 %v1533, 0.5
    %v1535 = vmul.f32 %v1530, 0.5
    %v1536 = vtanh.pop %v1535
    %v1537 = vmul.f32 %v1536, 0.5
    %v1538 = vadd.f32 %v1537, 0.5
    %v1539 = vmul.f32 %v1534, %v1406
    %v1540 = vtanh.pop %v1524
    %1542 = vrot.lane.b32.xlu0 %v1540, 32
    %v1543 = vpop.permute.xlu0 %1542
    %v1545 = vmul.f32 %v1534, %v1543
    %1547 = vrot.lane.b32.xlu0 %v1545, 32
    %v1548 = vpop.permute.xlu0 %1547
    %v1550 = vadd.f32 %v1539, %v1548
    %v1551 = vmul.f32 %v1538, %v1418
    %v1552 = vtanh.pop %v1530
    %1554 = vrot.lane.b32.xlu0 %v1552, 32
    %v1555 = vpop.permute.xlu0 %1554
    %v1557 = vmul.f32 %v1538, %v1555
    %1559 = vrot.lane.b32.xlu0 %v1557, 32
    %v1560 = vpop.permute.xlu0 %1559
    %v1562 = vadd.f32 %v1551, %v1560
    %v1563 = vtanh.pop %v1550
    %1565 = vrot.lane.b32.xlu0 %v1563, 32
    %v1566 = vpop.permute.xlu0 %1565
    %v1568 = vmul.f32 %v1534, %v1566
    %v1569 = vtanh.pop %v1562
    %1571 = vrot.lane.b32.xlu0 %v1569, 32
    %v1572 = vpop.permute.xlu0 %1571
    %v1574 = vmul.f32 %v1538, %v1572
    %1576 = vrot.lane.b32.xlu0 %v1568, 64
    %v1577 = vpop.permute.xlu0 %1576
    %s1579 = scalar_lea.vmem [#allocation4], 12
    %1580 = vst.msk [vmem:[%s1579] sm:$0x3] %vm714, %v1577
    %1582 = vrot.lane.b32.xlu0 %v1574, 64
    %v1583 = vpop.permute.xlu0 %1582
    %s1585 = scalar_lea.vmem [#allocation5], 2
    %1586 = vst.msk [vmem:[%s1585] sm:$0x3] %vm714, %v1583
    %v1587 = vrot.slane %v1574, 6
    %v1589 = vsel %vm724, %v1568, %v1587
    %1591 = vrot.lane.b32.xlu0 %v1589, 64
    %v1592 = vpop.permute.xlu0 %1591
    %v1593 = vsel %vm128, %v1592, 0
    %1595 = vmatprep.subr.mxu0 %v567
    %1596 = vmatpush1.msra.mxu0 %v566
    %1597 = vmatprep.subr.mxu0 %v569
    %1598 = vmatpush1.msra.mxu0 %v568
    %1599 = vmatprep.subr.mxu0 %v571
    %1600 = vmatpush1.msra.mxu0 %v570
    %1601 = vmatprep.subr.mxu0 %v573
    %1602 = vmatpush1.msra.mxu0 %v572
    %1603 = vmatprep.subr.mxu0 0.0
    %1604 = vmatpush1.msra.mxu0 0.0
    %1605 = vmatprep.subr.mxu0 0.0
    %1606 = vmatpush1.msra.mxu0 0.0
    %1607 = vmatprep.subr.mxu0 0.0
    %1608 = vmatpush1.msra.mxu0 0.0
    %1609 = vmatprep.subr.mxu0 0.0
    %1610 = vmatpush1.msra.mxu0 0.0
    %1611 = vmatprep.subr.mxu0 0.0
    %1612 = vmatpush1.msra.mxu0 0.0
    %1613 = vmatprep.subr.mxu0 0.0
    %1614 = vmatpush1.msra.mxu0 0.0
    %1615 = vmatprep.subr.mxu0 0.0
    %1616 = vmatpush1.msra.mxu0 0.0
    %1617 = vmatprep.subr.mxu0 0.0
    %1618 = vmatpush1.msra.mxu0 0.0
    %1619 = vmatprep.subr.mxu0 0.0
    %1620 = vmatpush1.msra.mxu0 0.0
    %1621 = vmatprep.subr.mxu0 0.0
    %1622 = vmatpush1.msra.mxu0 0.0
    %1623 = vmatprep.subr.mxu0 0.0
    %1624 = vmatpush1.msra.mxu0 0.0
    %1625 = vmatprep.subr.mxu0 0.0
    %1626 = vmatpush1.msra.mxu0 0.0
    %1627 = vmatprep.subr.mxu0 0.0
    %1628 = vmatpush1.msra.mxu0 0.0
    %1629 = vmatprep.subr.mxu0 0.0
    %1630 = vmatpush1.msra.mxu0 0.0
    %1631 = vmatprep.subr.mxu0 0.0
    %1632 = vmatpush1.msra.mxu0 0.0
    %1633 = vmatprep.subr.mxu0 0.0
    %1634 = vmatpush1.msra.mxu0 0.0
    %1635 = vmatprep.subr.mxu0 0.0
    %1636 = vmatpush1.msra.mxu0 0.0
    %1637 = vmatprep.subr.mxu0 0.0
    %1638 = vmatpush1.msra.mxu0 0.0
    %1639 = vmatprep.subr.mxu0 0.0
    %1640 = vmatpush1.msra.mxu0 0.0
    %1641 = vmatprep.subr.mxu0 0.0
    %1642 = vmatpush1.msra.mxu0 0.0
    %1643 = vmatprep.subr.mxu0 0.0
    %1644 = vmatpush1.msra.mxu0 0.0
    %1645 = vmatprep.subr.mxu0 0.0
    %1646 = vmatpush1.msra.mxu0 0.0
    %1647 = vmatprep.subr.mxu0 0.0
    %1648 = vmatpush1.msra.mxu0 0.0
    %1649 = vmatprep.subr.mxu0 0.0
    %1650 = vmatpush1.msra.mxu0 0.0
    %1651 = vmatprep.subr.mxu0 0.0
    %1652 = vmatpush1.msra.mxu0 0.0
    %1653 = vmatprep.subr.mxu0 0.0
    %1654 = vmatpush1.msra.mxu0 0.0
    %1655 = vmatprep.subr.mxu0 0.0
    %1656 = vmatpush1.msra.mxu0 0.0
    %1657 = vmatprep.subr.mxu0 0.0
    %1658 = vmatpush1.msra.mxu0 0.0
    %1659 = vmatprep.mubr.f32.mxu0 0.0
    %1660 = vmatmul.mubr.f32.gmra.mrb[0].mxu0 %v1593
    %v1661 = vpop.f32.mrb[0].mxu0
    %v1662 = vadd.f32 0.0, %v1661
    %v1663 = vpop.f32.mrb[0].mxu0
    %v1664 = vadd.f32 0.0, %v1663
    %1665 = vdwg.mxu0
    %s1666 = scalar_lea.vmem [#allocation2], 14
    %v1667 = vld [vmem:[%s1666] sm:$0x3]
    %v1668 = vadd.f32 %v1667, %v1662
    %v1669 = vld [vmem:[#allocation3] sm:$0x3]
    %v1671 = vrot.slane %v1664, 2
    %v1673 = vadd.f32 %v1669, %v1671
    %v1674 = vmul.f32 %v1668, 0.5
    %v1675 = vtanh.pop %v1674
    %v1676 = vmul.f32 %v1675, 0.5
    %v1677 = vadd.f32 %v1676, 0.5
    %v1678 = vmul.f32 %v1673, 0.5
    %v1679 = vtanh.pop %v1678
    %v1680 = vmul.f32 %v1679, 0.5
    %v1681 = vadd.f32 %v1680, 0.5
    %v1682 = vmul.f32 %v1677, %v1550
    %v1683 = vtanh.pop %v1668
    %1685 = vrot.lane.b32.xlu0 %v1683, 32
    %v1686 = vpop.permute.xlu0 %1685
    %v1688 = vmul.f32 %v1677, %v1686
    %1690 = vrot.lane.b32.xlu0 %v1688, 32
    %v1691 = vpop.permute.xlu0 %1690
    %v1693 = vadd.f32 %v1682, %v1691
    %v1694 = vmul.f32 %v1681, %v1562
    %v1695 = vtanh.pop %v1673
    %1697 = vrot.lane.b32.xlu0 %v1695, 32
    %v1698 = vpop.permute.xlu0 %1697
    %v1700 = vmul.f32 %v1681, %v1698
    %1702 = vrot.lane.b32.xlu0 %v1700, 32
    %v1703 = vpop.permute.xlu0 %1702
    %v1705 = vadd.f32 %v1694, %v1703
    %v1706 = vtanh.pop %v1693
    %1708 = vrot.lane.b32.xlu0 %v1706, 32
    %v1709 = vpop.permute.xlu0 %1708
    %v1711 = vmul.f32 %v1677, %v1709
    %v1712 = vtanh.pop %v1705
    %1714 = vrot.lane.b32.xlu0 %v1712, 32
    %v1715 = vpop.permute.xlu0 %1714
    %v1717 = vmul.f32 %v1681, %v1715
    %1719 = vrot.lane.b32.xlu0 %v1711, 64
    %v1720 = vpop.permute.xlu0 %1719
    %s1722 = scalar_lea.vmem [#allocation4], 14
    %1723 = vst.msk [vmem:[%s1722] sm:$0x3] %vm714, %v1720
    %1725 = vrot.lane.b32.xlu0 %v1717, 64
    %v1726 = vpop.permute.xlu0 %1725
    %1728 = vst.msk [vmem:[#allocation5] sm:$0x3] %vm714, %v1726
    %v1729 = vrot.slane %v1717, 6
    %v1731 = vsel %vm724, %v1711, %v1729
    %1733 = vrot.lane.b32.xlu0 %v1731, 64
    %v1734 = vpop.permute.xlu0 %1733
    %vm1736 = vcmask 257024
    %1737 = vst.msk [vmem:[#allocation6] sm:$0xf] %vm1736, %v1734
    %1739 = vrot.lane.b32.xlu0 %v1693, 96
    %v1740 = vpop.permute.xlu0 %1739
    %1742 = vst.msk [vmem:[#allocation7] sm:$0x3] %vm714, %v1740
    %1744 = vrot.lane.b32.xlu0 %v1705, 96
    %v1745 = vpop.permute.xlu0 %1744
    %1747 = vst.msk [vmem:[#allocation7 + $0x2] sm:$0x3] %vm714, %v1745
    %v1748 = vld [vmem:[#allocation4] sm:$0x1]
    %v1749 = vld [vmem:[#allocation4 + $0x2] sm:$0x1]
    %v1750 = vld [vmem:[#allocation4 + $0x4] sm:$0x1]
    %v1751 = vld [vmem:[#allocation4 + $0x6] sm:$0x1]
    %v1752 = vld [vmem:[#allocation4 + $0x8] sm:$0x1]
    %v1753 = vld [vmem:[#allocation4 + $0xa] sm:$0x1]
    %v1754 = vld [vmem:[#allocation4 + $0xc] sm:$0x1]
    %v1755 = vld [vmem:[#allocation4 + $0xe] sm:$0x1]
    %v1764 = vrot.slane %v1749, 7
    %vm1765 = vcmask 1041409
    %v1766 = vsel %vm1765, %v1764, %v1748
    %v1767 = vrot.slane %v1750, 6
    %vm1768 = vcmask 1042434
    %v1769 = vsel %vm1768, %v1767, %v1766
    %v1770 = vrot.slane %v1751, 5
    %vm1771 = vcmask 1043459
    %v1772 = vsel %vm1771, %v1770, %v1769
    %v1773 = vrot.slane %v1752, 4
    %vm1774 = vcmask 1044484
    %v1775 = vsel %vm1774, %v1773, %v1772
    %v1776 = vrot.slane %v1753, 3
    %vm1777 = vcmask 1045509
    %v1778 = vsel %vm1777, %v1776, %v1775
    %v1779 = vrot.slane %v1754, 2
    %vm1780 = vcmask 1046534
    %v1781 = vsel %vm1780, %v1779, %v1778
    %v1782 = vrot.slane %v1755, 1
    %vm1783 = vcmask 1047559
    %v1784 = vsel %vm1783, %v1782, %v1781
    %1786 = vst.msk [vmem:[#allocation17] sm:$0xff] %vm128, %v1784
    %v1787 = vld [vmem:[#allocation5] sm:$0x1]
    %v1788 = vld [vmem:[#allocation5 + $0x2] sm:$0x1]
    %v1789 = vld [vmem:[#allocation5 + $0x4] sm:$0x1]
    %v1790 = vld [vmem:[#allocation5 + $0x6] sm:$0x1]
    %v1791 = vld [vmem:[#allocation5 + $0x8] sm:$0x1]
    %v1792 = vld [vmem:[#allocation5 + $0xa] sm:$0x1]
    %v1793 = vld [vmem:[#allocation5 + $0xc] sm:$0x1]
    %v1794 = vld [vmem:[#allocation5 + $0xe] sm:$0x1]
    %v1803 = vrot.slane %v1788, 7
    %v1804 = vsel %vm1765, %v1803, %v1787
    %v1805 = vrot.slane %v1789, 6
    %v1806 = vsel %vm1768, %v1805, %v1804
    %v1807 = vrot.slane %v1790, 5
    %v1808 = vsel %vm1771, %v1807, %v1806
    %v1809 = vrot.slane %v1791, 4
    %v1810 = vsel %vm1774, %v1809, %v1808
    %v1811 = vrot.slane %v1792, 3
    %v1812 = vsel %vm1777, %v1811, %v1810
    %v1813 = vrot.slane %v1793, 2
    %v1814 = vsel %vm1780, %v1813, %v1812
    %v1815 = vrot.slane %v1794, 1
    %v1816 = vsel %vm1783, %v1815, %v1814
    %1818 = vst.msk [vmem:[#allocation18] sm:$0xff] %vm128, %v1816
    %v1819 = vld [vmem:[#allocation4 + $0x1] sm:$0x1]
    %v1820 = vld [vmem:[#allocation4 + $0x3] sm:$0x1]
    %v1821 = vld [vmem:[#allocation4 + $0x5] sm:$0x1]
    %v1822 = vld [vmem:[#allocation4 + $0x7] sm:$0x1]
    %v1823 = vld [vmem:[#allocation4 + $0x9] sm:$0x1]
    %v1824 = vld [vmem:[#allocation4 + $0xb] sm:$0x1]
    %v1825 = vld [vmem:[#allocation4 + $0xd] sm:$0x1]
    %v1826 = vld [vmem:[#allocation4 + $0xf] sm:$0x1]
    %v1835 = vrot.slane %v1820, 7
    %v1836 = vsel %vm1765, %v1835, %v1819
    %v1837 = vrot.slane %v1821, 6
    %v1838 = vsel %vm1768, %v1837, %v1836
    %v1839 = vrot.slane %v1822, 5
    %v1840 = vsel %vm1771, %v1839, %v1838
    %v1841 = vrot.slane %v1823, 4
    %v1842 = vsel %vm1774, %v1841, %v1840
    %v1843 = vrot.slane %v1824, 3
    %v1844 = vsel %vm1777, %v1843, %v1842
    %v1845 = vrot.slane %v1825, 2
    %v1846 = vsel %vm1780, %v1845, %v1844
    %v1847 = vrot.slane %v1826, 1
    %v1848 = vsel %vm1783, %v1847, %v1846
    %s1850 = scalar_lea.vmem [#allocation17], 8
    %1851 = vst.msk [vmem:[%s1850] sm:$0xff] %vm128, %v1848
    %v1852 = vld [vmem:[#allocation5 + $0x1] sm:$0x1]
    %v1853 = vld [vmem:[#allocation5 + $0x3] sm:$0x1]
    %v1854 = vld [vmem:[#allocation5 + $0x5] sm:$0x1]
    %v1855 = vld [vmem:[#allocation5 + $0x7] sm:$0x1]
    %v1856 = vld [vmem:[#allocation5 + $0x9] sm:$0x1]
    %v1857 = vld [vmem:[#allocation5 + $0xb] sm:$0x1]
    %v1858 = vld [vmem:[#allocation5 + $0xd] sm:$0x1]
    %v1859 = vld [vmem:[#allocation5 + $0xf] sm:$0x1]
    %v1868 = vrot.slane %v1853, 7
    %v1869 = vsel %vm1765, %v1868, %v1852
    %v1870 = vrot.slane %v1854, 6
    %v1871 = vsel %vm1768, %v1870, %v1869
    %v1872 = vrot.slane %v1855, 5
    %v1873 = vsel %vm1771, %v1872, %v1871
    %v1874 = vrot.slane %v1856, 4
    %v1875 = vsel %vm1774, %v1874, %v1873
    %v1876 = vrot.slane %v1857, 3
    %v1877 = vsel %vm1777, %v1876, %v1875
    %v1878 = vrot.slane %v1858, 2
    %v1879 = vsel %vm1780, %v1878, %v1877
    %v1880 = vrot.slane %v1859, 1
    %v1881 = vsel %vm1783, %v1880, %v1879
    %s1883 = scalar_lea.vmem [#allocation18], 8
    %1884 = vst.msk [vmem:[%s1883] sm:$0xff] %vm128, %v1881
    // Predicated region
    $region54: #{tpu_custom_call.1} parent=1 // pred_check
      %p1885 = pneg %p106
    $region55: #{tpu_custom_call.1} parent=1 // pred_check_branch
      %1887 = sbr.rel (%p1885) target = $region57
    $region56: #{tpu_custom_call.1} parent=1 // pred_region
      %1888 = vst.msk [vmem:[#allocation20] sm:$0x3] %vm714, %v1734
      %s1889 = scalar_lea.vmem [#allocation20], 2
      %vm1890 = vcmask 257026
      %1891 = vst.msk [vmem:[%s1889 - $0x2] sm:$0xc] %vm1890, %v1734
      %1892 = vst.msk [vmem:[#allocation21] sm:$0x3] %vm714, %v1740
      %s1893 = scalar_lea.vmem [#allocation21], 2
      %1894 = vst.msk [vmem:[%s1893] sm:$0x3] %vm714, %v1745
    $region57: #{tpu_custom_call.1} parent=1 // pred_fallthru
      _
    // Predicated region
    $region58: #{tpu_custom_call.1} parent=1 // pred_check
      _
    $region59: #{tpu_custom_call.1} parent=1 // pred_check_branch
      %1896 = sbr.rel (0) target = $region61
    $region60: #{tpu_custom_call.1} parent=1 // pred_region
      %s1898 = ssub.s32 256, 256
      %1899 = vsyncadd [#allocation10], %s1898
      %s1900 = sshll.u32 [#allocation17], 4
      %s1901 = int_to_ptr.vmem [resolvable:$true] %s1900
      %1906 = dma.vmem_to_hbm [thread:$0]  %s1901, 256, %s7, [#allocation10], 128, 128, 8
    $region61: #{tpu_custom_call.1} parent=1 // pred_fallthru
      _
    // Predicated region
    $region62: #{tpu_custom_call.1} parent=1 // pred_check
      _
    $region63: #{tpu_custom_call.1} parent=1 // pred_check_branch
      %1908 = sbr.rel (0) target = $region65
    $region64: #{tpu_custom_call.1} parent=1 // pred_region
      %s1909 = ssub.s32 0, 0
      %s1911 = ssub.s32 256, 256
      %1912 = vsyncadd [#allocation19], %s1911
      %s1913 = smul.addr %s1909, 128
      %s1914 = scalar_lea.hbm %s8, %s1913
      %s1915 = sshll.u32 [#allocation18], 4
      %s1916 = int_to_ptr.vmem [resolvable:$true] %s1915
      %1921 = dma.vmem_to_hbm [thread:$0]  %s1916, 256, %s1914, [#allocation19], 128, 128, 8
    $region65: #{tpu_custom_call.1} parent=1 // pred_fallthru
      _
    // Predicated region
    $region66: #{tpu_custom_call.1} parent=1 // pred_check
      _
    $region67: #{tpu_custom_call.1} parent=1 // pred_check_branch
      %1923 = sbr.rel (0) target = $region69
    $region68: #{tpu_custom_call.1} parent=1 // pred_region
      %s1925 = ssub.s32 64, 64
      %1926 = vsyncadd [#allocation19], %s1925
      %s1927 = sshll.u32 [#allocation20], 4
      %s1928 = int_to_ptr.vmem [resolvable:$true] %s1927
      %1933 = dma.vmem_to_hbm [thread:$0]  %s1928, 64, %s9, [#allocation19], 32, 32, 2
    $region69: #{tpu_custom_call.1} parent=1 // pred_fallthru
      _
    // Predicated region
    $region70: #{tpu_custom_call.1} parent=1 // pred_check
      _
    $region71: #{tpu_custom_call.1} parent=1 // pred_check_branch
      %1935 = sbr.rel (0) target = $region73
    $region72: #{tpu_custom_call.1} parent=1 // pred_region
      %s1937 = ssub.s32 64, 64
      %1938 = vsyncadd [#allocation22], %s1937
      %s1939 = sshll.u32 [#allocation21], 4
      %s1940 = int_to_ptr.vmem [resolvable:$true] %s1939
      %1945 = dma.vmem_to_hbm [thread:$0]  %s1940, 64, %s10, [#allocation22], 32, 32, 2
    $region73: #{tpu_custom_call.1} parent=1 // pred_fallthru
      _
    // Predicated region
    $region74: #{tpu_custom_call.1} parent=1 // pred_check
      _
    $region75: #{tpu_custom_call.1} parent=1 // pred_check_branch
      %1947 = sbr.rel (0) target = $region77
    $region76: #{tpu_custom_call.1} parent=1 // pred_region
      %1948 = dma.done [#allocation10], 256
    $region77: #{tpu_custom_call.1} parent=1 // pred_fallthru
      _
    // Predicated region
    $region78: #{tpu_custom_call.1} parent=1 // pred_check
      _
    $region79: #{tpu_custom_call.1} parent=1 // pred_check_branch
      %1950 = sbr.rel (0) target = $region81
    $region80: #{tpu_custom_call.1} parent=1 // pred_region
      %1951 = dma.done [#allocation19], 256
    $region81: #{tpu_custom_call.1} parent=1 // pred_fallthru
      _
    // Predicated region
    $region82: #{tpu_custom_call.1} parent=1 // pred_check
      _
    $region83: #{tpu_custom_call.1} parent=1 // pred_check_branch
      %1953 = sbr.rel (0) target = $region85
    $region84: #{tpu_custom_call.1} parent=1 // pred_region
      %1954 = dma.done [#allocation19], 64
    $region85: #{tpu_custom_call.1} parent=1 // pred_fallthru
      _
    // Predicated region
    $region86: #{tpu_custom_call.1} parent=1 // pred_check
      _
    $region87: #{tpu_custom_call.1} parent=1 // pred_check_branch
      %1956 = sbr.rel (0) target = $region89
    $region88: #{tpu_custom_call.1} parent=1 // pred_region
      %1957 = dma.done [#allocation22], 64
    $region89: #{tpu_custom_call.1} parent=1 // pred_fallthru
      _
    %1958 = vsyncpa [#allocation9], 1
    %1959 = vsyncpa [#allocation12], 1
    %1960 = vsyncpa [#allocation15], 1
    %1961 = vsyncpa [#allocation10], 1
    %1962 = vsyncpa [#allocation19], 1
    %1963 = vsyncpa [#allocation22], 1

</llo_original>
